<compile_context>
chip_gen: v7x
topology: tpu7x:2x2x1
jax: 0.10.0
libtpu: 0.0.40
codegen_flags: <defaults>
</compile_context>

<pallas_src>
import math
from functools import partial

import jax
import jax.numpy as jnp
from jax import lax
from jax.experimental import pallas as pl
from jax.experimental.pallas import tpu as pltpu


# -----------------------------------------------------------------------------
# Fused encoder-layer kernel (one batch tile of Bb sequences per grid step)
# -----------------------------------------------------------------------------
def _encoder_layer_kernel(x_ref, wqkv_ref, bqkv_ref, wo_ref, bo_ref,
                          ln1_g_ref, ln1_b_ref, wlin_ref, blin_ref,
                          phi_ref, ews_ref, ebs_ref, ln2_g_ref, ln2_b_ref,
                          o_ref, *, nhead, eps):
    Bb, M, D = x_ref.shape
    F = wlin_ref.shape[1]
    S = phi_ref.shape[1]          # num_experts * slots_per_expert
    dh = D // nhead
    R = Bb * M

    x = x_ref[...]
    x2 = x.reshape(R, D)

    # ---------------- self-attention: fused QKV projection (single MXU matmul) ----
    qkv = jnp.dot(x2, wqkv_ref[...], preferred_element_type=jnp.float32)
    qkv = qkv + bqkv_ref[...].astype(jnp.float32)                  # (R, 3D)
    qkv3 = qkv.reshape(Bb, M, 3 * D)

    def split_heads(off):
        # lane slices (dh stays lane-contiguous) + stack -> (Bb*nhead, M, dh)
        hs = [qkv3[:, :, off + h * dh: off + (h + 1) * dh] for h in range(nhead)]
        return jnp.stack(hs, axis=1).reshape(Bb * nhead, M, dh)

    scale = 1.0 / math.sqrt(dh)
    q = split_heads(0) * scale            # fold scale into Q: (Bb*H, M, dh) elems < (M, M)
    k = split_heads(D)
    v = split_heads(2 * D)

    s = jnp.einsum('bqd,bkd->bqk', q, k,
                   preferred_element_type=jnp.float32)             # (Bb*H, M, M)
    s = s - jnp.max(s, axis=-1, keepdims=True)
    p = jnp.exp(s)
    p = p / jnp.sum(p, axis=-1, keepdims=True)
    ctx = jnp.einsum('bqk,bkd->bqd', p, v,
                     preferred_element_type=jnp.float32)           # (Bb*H, M, dh)
    ctx4 = ctx.reshape(Bb, nhead, M, dh)
    ctx_cat = jnp.concatenate([ctx4[:, h] for h in range(nhead)], axis=-1)  # (Bb, M, D)
    sa = jnp.dot(ctx_cat.reshape(R, D).astype(wo_ref.dtype), wo_ref[...],
                 preferred_element_type=jnp.float32)
    sa = sa + bo_ref[...].astype(jnp.float32)                      # (R, D)

    # ---------------- fused residual add + LayerNorm --------------------------
    def add_ln(a, b, g_ref, bias_ref):
        srow = a.astype(jnp.float32) + b.astype(jnp.float32)       # (R, D)
        mean = jnp.mean(srow, axis=-1, keepdims=True)
        var = jnp.mean((srow - mean) ** 2, axis=-1, keepdims=True)
        n = (srow - mean) * lax.rsqrt(var + eps)
        return n * g_ref[...].astype(jnp.float32) + bias_ref[...].astype(jnp.float32)

    x1 = add_ln(x2, sa, ln1_g_ref, ln1_b_ref)                      # (R, D) f32

    # ---------------- feed-forward expansion (fused with MoE, h stays in VMEM) -
    h = jnp.dot(x1.astype(wlin_ref.dtype), wlin_ref[...],
                preferred_element_type=jnp.float32)
    h = jnp.maximum(h + blin_ref[...].astype(jnp.float32), 0.0)    # (R, F)

    # ---------------- SoftMoE ---------------------------------------------------
    logits = jnp.dot(h.astype(phi_ref.dtype), phi_ref[...],
                     preferred_element_type=jnp.float32)           # (R, S)
    logits3 = logits.reshape(Bb, M, S)
    logits_t = jnp.swapaxes(logits3, 1, 2)                         # (Bb, S, M): M on lanes

    # dispatch weights: softmax over the sequence dim (lane axis of logits_t)
    dmax = jnp.max(logits_t, axis=-1, keepdims=True)
    dexp = jnp.exp(logits_t - dmax)
    dispatch_t = dexp / jnp.sum(dexp, axis=-1, keepdims=True)      # (Bb, S, M)

    # combine weights: softmax over the flattened (n*p) slot dim
    cmax = jnp.max(logits3, axis=-1, keepdims=True)
    cexp = jnp.exp(logits3 - cmax)
    combine = cexp / jnp.sum(cexp, axis=-1, keepdims=True)         # (Bb, M, S)

    # slot mixing: slots = dispatch^T @ h, batched over Bb (MXU-native orientation)
    h3 = h.reshape(Bb, M, F)
    slots = jnp.einsum('bsm,bmf->bsf', dispatch_t, h3,
                       preferred_element_type=jnp.float32)         # (Bb, S, F)

    # per-slot expert matmul: one batched contraction over slots (no python loop)
    slots_t = jnp.swapaxes(slots, 0, 1)                            # (S, Bb, F)
    y_t = jnp.einsum('sbf,sfd->sbd', slots_t.astype(ews_ref.dtype), ews_ref[...],
                     preferred_element_type=jnp.float32)           # (S, Bb, D)
    y_t = y_t + ebs_ref[...].astype(jnp.float32)                   # + (S, 1, D)
    y = jnp.swapaxes(y_t, 0, 1)                                    # (Bb, S, D)

    # combine back to tokens
    ff = jnp.einsum('bms,bsd->bmd', combine, y,
                    preferred_element_type=jnp.float32)            # (Bb, M, D)

    # ---------------- residual add + LayerNorm 2 --------------------------------
    out = add_ln(x1, ff.reshape(R, D), ln2_g_ref, ln2_b_ref)       # (R, D)
    o_ref[...] = out.reshape(Bb, M, D).astype(o_ref.dtype)


# -----------------------------------------------------------------------------
# Wrapper
# -----------------------------------------------------------------------------
def _pick_batch_block(B, M, target_rows=512):
    """Pick Bb (divisor of B) so Bb*M rows keep the MXU reasonably full."""
    bb = max(1, min(B, max(1, target_rows // max(M, 1))))
    while B % bb != 0:
        bb -= 1
    return bb


def soft_moe_encoder_layer(x, params, *, nhead, num_experts, slots_per_expert,
                           layer_norm_eps=1e-5, target_rows=512):
    """norm_first=False path of SoftMoEEncoderLayer (dropout = identity)."""
    B, M, D = x.shape
    assert D % nhead == 0
    F = params["w_lin"].shape[1]
    S = num_experts * slots_per_expert

    # fused QKV weights / bias
    wqkv = jnp.concatenate([params["wq"], params["wk"], params["wv"]], axis=1)   # (D, 3D)
    bqkv = jnp.concatenate([params["bq"], params["bk"], params["bv"]]).reshape(1, 3 * D)
    phi_flat = params["phi"].reshape(F, S)
    # expand expert weights to per-slot weights so the kernel can do one batched
    # contraction over slots (slot s = n*P + p uses expert n's weight).
    ews = jnp.repeat(params["expert_w"], slots_per_expert, axis=0)               # (S, F, D)
    ebs = jnp.repeat(params["expert_b"], slots_per_expert, axis=0).reshape(S, 1, D)

    Bb = _pick_batch_block(B, M, target_rows)
    grid = (B // Bb,)
    const2 = lambda i: (0, 0)
    const3 = lambda i: (0, 0, 0)

    kernel = partial(_encoder_layer_kernel, nhead=nhead, eps=layer_norm_eps)
    return pl.pallas_call(
        kernel,
        out_shape=jax.ShapeDtypeStruct((B, M, D), x.dtype),
        grid=grid,
        in_specs=[
            pl.BlockSpec((Bb, M, D), lambda i: (i, 0, 0)),     # x
            pl.BlockSpec((D, 3 * D), const2),                  # wqkv
            pl.BlockSpec((1, 3 * D), const2),                  # bqkv
            pl.BlockSpec((D, D), const2),                      # wo
            pl.BlockSpec((1, D), const2),                      # bo
            pl.BlockSpec((1, D), const2),                      # ln1 gamma
            pl.BlockSpec((1, D), const2),                      # ln1 beta
            pl.BlockSpec((D, F), const2),                      # w_lin
            pl.BlockSpec((1, F), const2),                      # b_lin
            pl.BlockSpec((F, S), const2),                      # phi (flattened slots)
            pl.BlockSpec((S, F, D), const3),                   # per-slot expert weights
            pl.BlockSpec((S, 1, D), const3),                   # per-slot expert biases
            pl.BlockSpec((1, D), const2),                      # ln2 gamma
            pl.BlockSpec((1, D), const2),                      # ln2 beta
        ],
        out_specs=pl.BlockSpec((Bb, M, D), lambda i: (i, 0, 0)),
        compiler_params=pltpu.CompilerParams(
            dimension_semantics=("parallel",)),
    )(x, wqkv, bqkv, params["wo"], params["bo"].reshape(1, D),
      params["ln1_g"].reshape(1, D), params["ln1_b"].reshape(1, D),
      params["w_lin"], params["b_lin"].reshape(1, F),
      phi_flat, ews, ebs,
      params["ln2_g"].reshape(1, D), params["ln2_b"].reshape(1, D))


# -----------------------------------------------------------------------------
# Pure-JAX reference (same math) for a sanity check
# -----------------------------------------------------------------------------
def reference(x, params, *, nhead, num_experts, slots_per_expert, eps=1e-5):
    def ln(s, g, b):
        m = jnp.mean(s, -1, keepdims=True)
        v = jnp.mean((s - m) ** 2, -1, keepdims=True)
        return (s - m) / jnp.sqrt(v + eps) * g + b

    B, M, D = x.shape
    dh = D // nhead
    q = x @ params["wq"] + params["bq"]
    k = x @ params["wk"] + params["bk"]
    v = x @ params["wv"] + params["bv"]
    qh = q.reshape(B, M, nhead, dh).transpose(0, 2, 1, 3)
    kh = k.reshape(B, M, nhead, dh).transpose(0, 2, 1, 3)
    vh = v.reshape(B, M, nhead, dh).transpose(0, 2, 1, 3)
    s = jnp.einsum("bhqd,bhkd->bhqk", qh, kh) / math.sqrt(dh)
    p = jax.nn.softmax(s, -1)
    ctx = jnp.einsum("bhqk,bhkd->bhqd", p, vh).transpose(0, 2, 1, 3).reshape(B, M, D)
    sa = ctx @ params["wo"] + params["bo"]
    x1 = ln(x + sa, params["ln1_g"], params["ln1_b"])
    h = jax.nn.relu(x1 @ params["w_lin"] + params["b_lin"])           # (B, M, F)
    logits = jnp.einsum("bmf,fnp->bmnp", h, params["phi"])
    dispatch = jax.nn.softmax(logits, axis=1)
    combine = jax.nn.softmax(logits.reshape(B, M, -1), axis=-1).reshape(logits.shape)
    slots = jnp.einsum("bmf,bmnp->bnpf", h, dispatch)
    y = jnp.einsum("bnpf,nfd->bnpd", slots, params["expert_w"]) + params["expert_b"][None, :, None, :]
    ff = jnp.einsum("bnpd,bmnp->bmd", y, combine)
    return ln(x1 + ff, params["ln2_g"], params["ln2_b"])


# -----------------------------------------------------------------------------
# Main
# -----------------------------------------------------------------------------
if __name__ == "__main__":
    B, M = 2, 8
    d_model, nhead = 32, 4
    dim_feedforward = 64
    num_experts, slots_per_expert = 4, 1

    key = jax.random.PRNGKey(0)
    ks = jax.random.split(key, 16)

    def u(k, shape, scale):
        return jax.random.uniform(k, shape, jnp.float32, -scale, scale)

    params = {
        "wq": u(ks[0], (d_model, d_model), 1.0 / math.sqrt(d_model)),
        "bq": u(ks[1], (d_model,), 1.0 / math.sqrt(d_model)),
        "wk": u(ks[2], (d_model, d_model), 1.0 / math.sqrt(d_model)),
        "bk": u(ks[3], (d_model,), 1.0 / math.sqrt(d_model)),
        "wv": u(ks[4], (d_model, d_model), 1.0 / math.sqrt(d_model)),
        "bv": u(ks[5], (d_model,), 1.0 / math.sqrt(d_model)),
        "wo": u(ks[6], (d_model, d_model), 1.0 / math.sqrt(d_model)),
        "bo": u(ks[7], (d_model,), 1.0 / math.sqrt(d_model)),
        "ln1_g": jnp.ones((d_model,), jnp.float32),
        "ln1_b": jnp.zeros((d_model,), jnp.float32),
        "ln2_g": jnp.ones((d_model,), jnp.float32),
        "ln2_b": jnp.zeros((d_model,), jnp.float32),
        "w_lin": u(ks[8], (d_model, dim_feedforward), 1.0 / math.sqrt(d_model)),
        "b_lin": u(ks[9], (dim_feedforward,), 1.0 / math.sqrt(d_model)),
        # SoftMoE params: phi (F, n, p); experts (n, F, d_model) weight, (n, d_model) bias
        "phi": u(ks[10], (dim_feedforward, num_experts, slots_per_expert),
                 1.0 / math.sqrt(dim_feedforward)),
        "expert_w": u(ks[11], (num_experts, dim_feedforward, d_model),
                      1.0 / math.sqrt(dim_feedforward)),
        "expert_b": u(ks[12], (num_experts, d_model), 1.0 / math.sqrt(dim_feedforward)),
    }

    x = jax.random.normal(ks[13], (B, M, d_model), jnp.float32)

    out = soft_moe_encoder_layer(
        x, params, nhead=nhead, num_experts=num_experts,
        slots_per_expert=slots_per_expert)
    out = jax.block_until_ready(out)

    ref = reference(x, params, nhead=nhead, num_experts=num_experts,
                    slots_per_expert=slots_per_expert)
    assert out.shape == (B, M, d_model)
    assert jnp.allclose(out, ref, atol=2e-4, rtol=2e-4), "mismatch vs reference"

    print("KERNEL_OK")
</pallas_src>

<mosaic_0001>
module attributes {stable_mosaic.version = 11 : i64} {
  func.func @_encoder_layer_kernel(%arg0: i32, %arg1: memref<2x8x32xf32, #tpu.memory_space<vmem>>, %arg2: memref<32x96xf32, #tpu.memory_space<vmem>>, %arg3: memref<1x96xf32, #tpu.memory_space<vmem>>, %arg4: memref<32x32xf32, #tpu.memory_space<vmem>>, %arg5: memref<1x32xf32, #tpu.memory_space<vmem>>, %arg6: memref<1x32xf32, #tpu.memory_space<vmem>>, %arg7: memref<1x32xf32, #tpu.memory_space<vmem>>, %arg8: memref<32x64xf32, #tpu.memory_space<vmem>>, %arg9: memref<1x64xf32, #tpu.memory_space<vmem>>, %arg10: memref<64x4xf32, #tpu.memory_space<vmem>>, %arg11: memref<4x64x32xf32, #tpu.memory_space<vmem>>, %arg12: memref<4x1x32xf32, #tpu.memory_space<vmem>>, %arg13: memref<1x32xf32, #tpu.memory_space<vmem>>, %arg14: memref<1x32xf32, #tpu.memory_space<vmem>>, %arg15: memref<2x8x32xf32, #tpu.memory_space<vmem>>) attributes {dimension_semantics = [#tpu.dimension_semantics<parallel>], iteration_bounds = array<i64: 1>, scalar_prefetch = 0 : i64, scratch_operands = 0 : i64, tpu.core_type = #tpu.core_type<tc>, window_params = [{transform_indices = @transform_0, window_bounds = array<i64: 2, 8, 32>}, {pipeline_mode = #tpu.pipeline_mode<synchronous>, transform_indices = @transform_1, window_bounds = array<i64: 32, 96>}, {pipeline_mode = #tpu.pipeline_mode<synchronous>, transform_indices = @transform_2, window_bounds = array<i64: 1, 96>}, {pipeline_mode = #tpu.pipeline_mode<synchronous>, transform_indices = @transform_3, window_bounds = array<i64: 32, 32>}, {pipeline_mode = #tpu.pipeline_mode<synchronous>, transform_indices = @transform_4, window_bounds = array<i64: 1, 32>}, {pipeline_mode = #tpu.pipeline_mode<synchronous>, transform_indices = @transform_5, window_bounds = array<i64: 1, 32>}, {pipeline_mode = #tpu.pipeline_mode<synchronous>, transform_indices = @transform_6, window_bounds = array<i64: 1, 32>}, {pipeline_mode = #tpu.pipeline_mode<synchronous>, transform_indices = @transform_7, window_bounds = array<i64: 32, 64>}, {pipeline_mode = #tpu.pipeline_mode<synchronous>, transform_indices = @transform_8, window_bounds = array<i64: 1, 64>}, {pipeline_mode = #tpu.pipeline_mode<synchronous>, transform_indices = @transform_9, window_bounds = array<i64: 64, 4>}, {pipeline_mode = #tpu.pipeline_mode<synchronous>, transform_indices = @transform_10, window_bounds = array<i64: 4, 64, 32>}, {pipeline_mode = #tpu.pipeline_mode<synchronous>, transform_indices = @transform_11, window_bounds = array<i64: 4, 1, 32>}, {pipeline_mode = #tpu.pipeline_mode<synchronous>, transform_indices = @transform_12, window_bounds = array<i64: 1, 32>}, {pipeline_mode = #tpu.pipeline_mode<synchronous>, transform_indices = @transform_13, window_bounds = array<i64: 1, 32>}, {transform_indices = @transform_14, window_bounds = array<i64: 2, 8, 32>}]} {
    %c0 = arith.constant 0 : index
    %c0_0 = arith.constant 0 : index
    %c0_1 = arith.constant 0 : index
    %0 = vector.load %arg1[%c0, %c0_0, %c0_1] : memref<2x8x32xf32, #tpu.memory_space<vmem>>, vector<2x8x32xf32>
    %1 = vector.shape_cast %0 : vector<2x8x32xf32> to vector<16x32xf32>
    %c0_2 = arith.constant 0 : index
    %c0_3 = arith.constant 0 : index
    %2 = vector.load %arg2[%c0_2, %c0_3] : memref<32x96xf32, #tpu.memory_space<vmem>>, vector<32x96xf32>
    %cst = arith.constant dense<0.000000e+00> : vector<16x96xf32>
    %3 = tpu.matmul %1, %2, %cst {dimension_numbers = #tpu.dot_dimension_numbers<[1], [0], [0], [1], [0, 0, 1, 1], [], []>} : vector<16x32xf32>, vector<32x96xf32>, vector<16x96xf32> -> vector<16x96xf32>
    %c0_4 = arith.constant 0 : index
    %c0_5 = arith.constant 0 : index
    %4 = vector.load %arg3[%c0_4, %c0_5] : memref<1x96xf32, #tpu.memory_space<vmem>>, vector<1x96xf32>
    %5 = vector.broadcast %4 : vector<1x96xf32> to vector<16x96xf32>
    %6 = arith.addf %3, %5 : vector<16x96xf32>
    %7 = vector.shape_cast %6 : vector<16x96xf32> to vector<2x8x96xf32>
    %8 = vector.extract_strided_slice %7 {offsets = [0, 0, 0], sizes = [2, 8, 8], strides = [1, 1, 1]} : vector<2x8x96xf32> to vector<2x8x8xf32>
    %9 = vector.extract_strided_slice %7 {offsets = [0, 0, 8], sizes = [2, 8, 8], strides = [1, 1, 1]} : vector<2x8x96xf32> to vector<2x8x8xf32>
    %10 = vector.extract_strided_slice %7 {offsets = [0, 0, 16], sizes = [2, 8, 8], strides = [1, 1, 1]} : vector<2x8x96xf32> to vector<2x8x8xf32>
    %11 = vector.extract_strided_slice %7 {offsets = [0, 0, 24], sizes = [2, 8, 8], strides = [1, 1, 1]} : vector<2x8x96xf32> to vector<2x8x8xf32>
    %12 = vector.shape_cast %8 : vector<2x8x8xf32> to vector<2x1x8x8xf32>
    %13 = vector.shape_cast %9 : vector<2x8x8xf32> to vector<2x1x8x8xf32>
    %14 = vector.shape_cast %10 : vector<2x8x8xf32> to vector<2x1x8x8xf32>
    %15 = vector.shape_cast %11 : vector<2x8x8xf32> to vector<2x1x8x8xf32>
    %16 = tpu.concatenate %12, %13, %14, %15 in 1 : vector<2x1x8x8xf32>, vector<2x1x8x8xf32>, vector<2x1x8x8xf32>, vector<2x1x8x8xf32> -> vector<2x4x8x8xf32>
    %17 = vector.shape_cast %16 : vector<2x4x8x8xf32> to vector<8x8x8xf32>
    %cst_6 = arith.constant 0.353553385 : f32
    %18 = vector.broadcast %cst_6 : f32 to vector<8x8x8xf32>
    %19 = arith.mulf %17, %18 : vector<8x8x8xf32>
    %20 = vector.extract_strided_slice %7 {offsets = [0, 0, 32], sizes = [2, 8, 8], strides = [1, 1, 1]} : vector<2x8x96xf32> to vector<2x8x8xf32>
    %21 = vector.extract_strided_slice %7 {offsets = [0, 0, 40], sizes = [2, 8, 8], strides = [1, 1, 1]} : vector<2x8x96xf32> to vector<2x8x8xf32>
    %22 = vector.extract_strided_slice %7 {offsets = [0, 0, 48], sizes = [2, 8, 8], strides = [1, 1, 1]} : vector<2x8x96xf32> to vector<2x8x8xf32>
    %23 = vector.extract_strided_slice %7 {offsets = [0, 0, 56], sizes = [2, 8, 8], strides = [1, 1, 1]} : vector<2x8x96xf32> to vector<2x8x8xf32>
    %24 = vector.shape_cast %20 : vector<2x8x8xf32> to vector<2x1x8x8xf32>
    %25 = vector.shape_cast %21 : vector<2x8x8xf32> to vector<2x1x8x8xf32>
    %26 = vector.shape_cast %22 : vector<2x8x8xf32> to vector<2x1x8x8xf32>
    %27 = vector.shape_cast %23 : vector<2x8x8xf32> to vector<2x1x8x8xf32>
    %28 = tpu.concatenate %24, %25, %26, %27 in 1 : vector<2x1x8x8xf32>, vector<2x1x8x8xf32>, vector<2x1x8x8xf32>, vector<2x1x8x8xf32> -> vector<2x4x8x8xf32>
    %29 = vector.shape_cast %28 : vector<2x4x8x8xf32> to vector<8x8x8xf32>
    %30 = vector.extract_strided_slice %7 {offsets = [0, 0, 64], sizes = [2, 8, 8], strides = [1, 1, 1]} : vector<2x8x96xf32> to vector<2x8x8xf32>
    %31 = vector.extract_strided_slice %7 {offsets = [0, 0, 72], sizes = [2, 8, 8], strides = [1, 1, 1]} : vector<2x8x96xf32> to vector<2x8x8xf32>
    %32 = vector.extract_strided_slice %7 {offsets = [0, 0, 80], sizes = [2, 8, 8], strides = [1, 1, 1]} : vector<2x8x96xf32> to vector<2x8x8xf32>
    %33 = vector.extract_strided_slice %7 {offsets = [0, 0, 88], sizes = [2, 8, 8], strides = [1, 1, 1]} : vector<2x8x96xf32> to vector<2x8x8xf32>
    %34 = vector.shape_cast %30 : vector<2x8x8xf32> to vector<2x1x8x8xf32>
    %35 = vector.shape_cast %31 : vector<2x8x8xf32> to vector<2x1x8x8xf32>
    %36 = vector.shape_cast %32 : vector<2x8x8xf32> to vector<2x1x8x8xf32>
    %37 = vector.shape_cast %33 : vector<2x8x8xf32> to vector<2x1x8x8xf32>
    %38 = tpu.concatenate %34, %35, %36, %37 in 1 : vector<2x1x8x8xf32>, vector<2x1x8x8xf32>, vector<2x1x8x8xf32>, vector<2x1x8x8xf32> -> vector<2x4x8x8xf32>
    %39 = vector.shape_cast %38 : vector<2x4x8x8xf32> to vector<8x8x8xf32>
    "tpu.trace_start"() <{level = 10 : i32, message = "bqd,bkd->bqk"}> : () -> ()
    %cst_7 = arith.constant dense<0.000000e+00> : vector<8x8x8xf32>
    %40 = tpu.matmul %19, %29, %cst_7 {dimension_numbers = #tpu.dot_dimension_numbers<[2], [2], [1], [1], [0, 0, 0, 1, 1, 1], [0], [0]>} : vector<8x8x8xf32>, vector<8x8x8xf32>, vector<8x8x8xf32> -> vector<8x8x8xf32>
    "tpu.trace_stop"() : () -> ()
    %cst_8 = arith.constant dense<0xFF800000> : vector<8x8xf32>
    %41 = vector.multi_reduction <maximumf>, %40, %cst_8 [2] : vector<8x8x8xf32> to vector<8x8xf32>
    %42 = vector.shape_cast %41 : vector<8x8xf32> to vector<8x8x1xf32>
    %43 = vector.broadcast %42 : vector<8x8x1xf32> to vector<8x8x8xf32>
    %44 = arith.subf %40, %43 : vector<8x8x8xf32>
    %45 = math.exp %44 : vector<8x8x8xf32>
    %cst_9 = arith.constant dense<0.000000e+00> : vector<8x8xf32>
    %46 = vector.multi_reduction <add>, %45, %cst_9 [2] : vector<8x8x8xf32> to vector<8x8xf32>
    %47 = vector.shape_cast %46 : vector<8x8xf32> to vector<8x8x1xf32>
    %48 = vector.broadcast %47 : vector<8x8x1xf32> to vector<8x8x8xf32>
    %49 = arith.divf %45, %48 : vector<8x8x8xf32>
    "tpu.trace_start"() <{level = 10 : i32, message = "bqk,bkd->bqd"}> : () -> ()
    %cst_10 = arith.constant dense<0.000000e+00> : vector<8x8x8xf32>
    %50 = tpu.matmul %49, %39, %cst_10 {dimension_numbers = #tpu.dot_dimension_numbers<[2], [1], [1], [2], [0, 0, 0, 1, 1, 2], [0], [0]>} : vector<8x8x8xf32>, vector<8x8x8xf32>, vector<8x8x8xf32> -> vector<8x8x8xf32>
    "tpu.trace_stop"() : () -> ()
    %51 = vector.shape_cast %50 : vector<8x8x8xf32> to vector<2x4x8x8xf32>
    %52 = vector.extract_strided_slice %51 {offsets = [0, 0, 0, 0], sizes = [2, 1, 8, 8], strides = [1, 1, 1, 1]} : vector<2x4x8x8xf32> to vector<2x1x8x8xf32>
    %53 = vector.shape_cast %52 : vector<2x1x8x8xf32> to vector<2x8x8xf32>
    %54 = vector.extract_strided_slice %51 {offsets = [0, 1, 0, 0], sizes = [2, 1, 8, 8], strides = [1, 1, 1, 1]} : vector<2x4x8x8xf32> to vector<2x1x8x8xf32>
    %55 = vector.shape_cast %54 : vector<2x1x8x8xf32> to vector<2x8x8xf32>
    %56 = vector.extract_strided_slice %51 {offsets = [0, 2, 0, 0], sizes = [2, 1, 8, 8], strides = [1, 1, 1, 1]} : vector<2x4x8x8xf32> to vector<2x1x8x8xf32>
    %57 = vector.shape_cast %56 : vector<2x1x8x8xf32> to vector<2x8x8xf32>
    %58 = vector.extract_strided_slice %51 {offsets = [0, 3, 0, 0], sizes = [2, 1, 8, 8], strides = [1, 1, 1, 1]} : vector<2x4x8x8xf32> to vector<2x1x8x8xf32>
    %59 = vector.shape_cast %58 : vector<2x1x8x8xf32> to vector<2x8x8xf32>
    %60 = tpu.concatenate %53, %55, %57, %59 in 2 : vector<2x8x8xf32>, vector<2x8x8xf32>, vector<2x8x8xf32>, vector<2x8x8xf32> -> vector<2x8x32xf32>
    %61 = vector.shape_cast %60 : vector<2x8x32xf32> to vector<16x32xf32>
    %c0_11 = arith.constant 0 : index
    %c0_12 = arith.constant 0 : index
    %62 = vector.load %arg4[%c0_11, %c0_12] : memref<32x32xf32, #tpu.memory_space<vmem>>, vector<32x32xf32>
    %cst_13 = arith.constant dense<0.000000e+00> : vector<16x32xf32>
    %63 = tpu.matmul %61, %62, %cst_13 {dimension_numbers = #tpu.dot_dimension_numbers<[1], [0], [0], [1], [0, 0, 1, 1], [], []>} : vector<16x32xf32>, vector<32x32xf32>, vector<16x32xf32> -> vector<16x32xf32>
    %c0_14 = arith.constant 0 : index
    %c0_15 = arith.constant 0 : index
    %64 = vector.load %arg5[%c0_14, %c0_15] : memref<1x32xf32, #tpu.memory_space<vmem>>, vector<1x32xf32>
    %65 = vector.broadcast %64 : vector<1x32xf32> to vector<16x32xf32>
    %66 = arith.addf %63, %65 : vector<16x32xf32>
    %67 = arith.addf %1, %66 : vector<16x32xf32>
    %cst_16 = arith.constant dense<0.000000e+00> : vector<16xf32>
    %68 = vector.multi_reduction <add>, %67, %cst_16 [1] : vector<16x32xf32> to vector<16xf32>
    %69 = vector.shape_cast %68 : vector<16xf32> to vector<16x1xf32>
    %cst_17 = arith.constant 3.200000e+01 : f32
    %70 = vector.broadcast %cst_17 : f32 to vector<16x1xf32>
    %71 = arith.divf %69, %70 : vector<16x1xf32>
    %72 = vector.broadcast %71 : vector<16x1xf32> to vector<16x32xf32>
    %73 = arith.subf %67, %72 : vector<16x32xf32>
    %74 = arith.mulf %73, %73 : vector<16x32xf32>
    %cst_18 = arith.constant dense<0.000000e+00> : vector<16xf32>
    %75 = vector.multi_reduction <add>, %74, %cst_18 [1] : vector<16x32xf32> to vector<16xf32>
    %76 = vector.shape_cast %75 : vector<16xf32> to vector<16x1xf32>
    %cst_19 = arith.constant 3.200000e+01 : f32
    %77 = vector.broadcast %cst_19 : f32 to vector<16x1xf32>
    %78 = arith.divf %76, %77 : vector<16x1xf32>
    %79 = vector.broadcast %71 : vector<16x1xf32> to vector<16x32xf32>
    %80 = arith.subf %67, %79 : vector<16x32xf32>
    %cst_20 = arith.constant 9.99999974E-6 : f32
    %81 = vector.broadcast %cst_20 : f32 to vector<16x1xf32>
    %82 = arith.addf %78, %81 : vector<16x1xf32>
    %83 = math.rsqrt %82 : vector<16x1xf32>
    %84 = vector.broadcast %83 : vector<16x1xf32> to vector<16x32xf32>
    %85 = arith.mulf %80, %84 : vector<16x32xf32>
    %c0_21 = arith.constant 0 : index
    %c0_22 = arith.constant 0 : index
    %86 = vector.load %arg6[%c0_21, %c0_22] : memref<1x32xf32, #tpu.memory_space<vmem>>, vector<1x32xf32>
    %87 = vector.broadcast %86 : vector<1x32xf32> to vector<16x32xf32>
    %88 = arith.mulf %85, %87 : vector<16x32xf32>
    %c0_23 = arith.constant 0 : index
    %c0_24 = arith.constant 0 : index
    %89 = vector.load %arg7[%c0_23, %c0_24] : memref<1x32xf32, #tpu.memory_space<vmem>>, vector<1x32xf32>
    %90 = vector.broadcast %89 : vector<1x32xf32> to vector<16x32xf32>
    %91 = arith.addf %88, %90 : vector<16x32xf32>
    %c0_25 = arith.constant 0 : index
    %c0_26 = arith.constant 0 : index
    %92 = vector.load %arg8[%c0_25, %c0_26] : memref<32x64xf32, #tpu.memory_space<vmem>>, vector<32x64xf32>
    %cst_27 = arith.constant dense<0.000000e+00> : vector<16x64xf32>
    %93 = tpu.matmul %91, %92, %cst_27 {dimension_numbers = #tpu.dot_dimension_numbers<[1], [0], [0], [1], [0, 0, 1, 1], [], []>} : vector<16x32xf32>, vector<32x64xf32>, vector<16x64xf32> -> vector<16x64xf32>
    %c0_28 = arith.constant 0 : index
    %c0_29 = arith.constant 0 : index
    %94 = vector.load %arg9[%c0_28, %c0_29] : memref<1x64xf32, #tpu.memory_space<vmem>>, vector<1x64xf32>
    %95 = vector.broadcast %94 : vector<1x64xf32> to vector<16x64xf32>
    %96 = arith.addf %93, %95 : vector<16x64xf32>
    %cst_30 = arith.constant 0.000000e+00 : f32
    %97 = vector.broadcast %cst_30 : f32 to vector<16x64xf32>
    %98 = arith.maximumf %96, %97 : vector<16x64xf32>
    %c0_31 = arith.constant 0 : index
    %c0_32 = arith.constant 0 : index
    %99 = vector.load %arg10[%c0_31, %c0_32] : memref<64x4xf32, #tpu.memory_space<vmem>>, vector<64x4xf32>
    %cst_33 = arith.constant dense<0.000000e+00> : vector<16x4xf32>
    %100 = tpu.matmul %98, %99, %cst_33 {dimension_numbers = #tpu.dot_dimension_numbers<[1], [0], [0], [1], [0, 0, 1, 1], [], []>} : vector<16x64xf32>, vector<64x4xf32>, vector<16x4xf32> -> vector<16x4xf32>
    %101 = vector.shape_cast %100 : vector<16x4xf32> to vector<2x8x4xf32>
    %102 = tpu.transpose %101, [0, 2, 1] : vector<2x8x4xf32> -> vector<2x4x8xf32>
    %cst_34 = arith.constant dense<0xFF800000> : vector<2x4xf32>
    %103 = vector.multi_reduction <maximumf>, %102, %cst_34 [2] : vector<2x4x8xf32> to vector<2x4xf32>
    %104 = vector.shape_cast %103 : vector<2x4xf32> to vector<2x4x1xf32>
    %105 = vector.broadcast %104 : vector<2x4x1xf32> to vector<2x4x8xf32>
    %106 = arith.subf %102, %105 : vector<2x4x8xf32>
    %107 = math.exp %106 : vector<2x4x8xf32>
    %cst_35 = arith.constant dense<0.000000e+00> : vector<2x4xf32>
    %108 = vector.multi_reduction <add>, %107, %cst_35 [2] : vector<2x4x8xf32> to vector<2x4xf32>
    %109 = vector.shape_cast %108 : vector<2x4xf32> to vector<2x4x1xf32>
    %110 = vector.broadcast %109 : vector<2x4x1xf32> to vector<2x4x8xf32>
    %111 = arith.divf %107, %110 : vector<2x4x8xf32>
    %cst_36 = arith.constant dense<0xFF800000> : vector<2x8xf32>
    %112 = vector.multi_reduction <maximumf>, %101, %cst_36 [2] : vector<2x8x4xf32> to vector<2x8xf32>
    %113 = vector.shape_cast %112 : vector<2x8xf32> to vector<2x8x1xf32>
    %114 = vector.broadcast %113 : vector<2x8x1xf32> to vector<2x8x4xf32>
    %115 = arith.subf %101, %114 : vector<2x8x4xf32>
    %116 = math.exp %115 : vector<2x8x4xf32>
    %cst_37 = arith.constant dense<0.000000e+00> : vector<2x8xf32>
    %117 = vector.multi_reduction <add>, %116, %cst_37 [2] : vector<2x8x4xf32> to vector<2x8xf32>
    %118 = vector.shape_cast %117 : vector<2x8xf32> to vector<2x8x1xf32>
    %119 = vector.broadcast %118 : vector<2x8x1xf32> to vector<2x8x4xf32>
    %120 = arith.divf %116, %119 : vector<2x8x4xf32>
    %121 = vector.shape_cast %98 : vector<16x64xf32> to vector<2x8x64xf32>
    "tpu.trace_start"() <{level = 10 : i32, message = "bsm,bmf->bsf"}> : () -> ()
    %cst_38 = arith.constant dense<0.000000e+00> : vector<2x4x64xf32>
    %122 = tpu.matmul %111, %121, %cst_38 {dimension_numbers = #tpu.dot_dimension_numbers<[2], [1], [1], [2], [0, 0, 0, 1, 1, 2], [0], [0]>} : vector<2x4x8xf32>, vector<2x8x64xf32>, vector<2x4x64xf32> -> vector<2x4x64xf32>
    "tpu.trace_stop"() : () -> ()
    %123 = tpu.transpose %122, [1, 0, 2] : vector<2x4x64xf32> -> vector<4x2x64xf32>
    %c0_39 = arith.constant 0 : index
    %c0_40 = arith.constant 0 : index
    %c0_41 = arith.constant 0 : index
    %124 = vector.load %arg11[%c0_39, %c0_40, %c0_41] : memref<4x64x32xf32, #tpu.memory_space<vmem>>, vector<4x64x32xf32>
    "tpu.trace_start"() <{level = 10 : i32, message = "sbf,sfd->sbd"}> : () -> ()
    %cst_42 = arith.constant dense<0.000000e+00> : vector<4x2x32xf32>
    %125 = tpu.matmul %123, %124, %cst_42 {dimension_numbers = #tpu.dot_dimension_numbers<[2], [1], [1], [2], [0, 0, 0, 1, 1, 2], [0], [0]>} : vector<4x2x64xf32>, vector<4x64x32xf32>, vector<4x2x32xf32> -> vector<4x2x32xf32>
    "tpu.trace_stop"() : () -> ()
    %c0_43 = arith.constant 0 : index
    %c0_44 = arith.constant 0 : index
    %c0_45 = arith.constant 0 : index
    %126 = vector.load %arg12[%c0_43, %c0_44, %c0_45] : memref<4x1x32xf32, #tpu.memory_space<vmem>>, vector<4x1x32xf32>
    %127 = vector.broadcast %126 : vector<4x1x32xf32> to vector<4x2x32xf32>
    %128 = arith.addf %125, %127 : vector<4x2x32xf32>
    %129 = tpu.transpose %128, [1, 0, 2] : vector<4x2x32xf32> -> vector<2x4x32xf32>
    "tpu.trace_start"() <{level = 10 : i32, message = "bms,bsd->bmd"}> : () -> ()
    %cst_46 = arith.constant dense<0.000000e+00> : vector<2x8x32xf32>
    %130 = tpu.matmul %120, %129, %cst_46 {dimension_numbers = #tpu.dot_dimension_numbers<[2], [1], [1], [2], [0, 0, 0, 1, 1, 2], [0], [0]>} : vector<2x8x4xf32>, vector<2x4x32xf32>, vector<2x8x32xf32> -> vector<2x8x32xf32>
    "tpu.trace_stop"() : () -> ()
    %131 = vector.shape_cast %130 : vector<2x8x32xf32> to vector<16x32xf32>
    %132 = arith.addf %91, %131 : vector<16x32xf32>
    %cst_47 = arith.constant dense<0.000000e+00> : vector<16xf32>
    %133 = vector.multi_reduction <add>, %132, %cst_47 [1] : vector<16x32xf32> to vector<16xf32>
    %134 = vector.shape_cast %133 : vector<16xf32> to vector<16x1xf32>
    %cst_48 = arith.constant 3.200000e+01 : f32
    %135 = vector.broadcast %cst_48 : f32 to vector<16x1xf32>
    %136 = arith.divf %134, %135 : vector<16x1xf32>
    %137 = vector.broadcast %136 : vector<16x1xf32> to vector<16x32xf32>
    %138 = arith.subf %132, %137 : vector<16x32xf32>
    %139 = arith.mulf %138, %138 : vector<16x32xf32>
    %cst_49 = arith.constant dense<0.000000e+00> : vector<16xf32>
    %140 = vector.multi_reduction <add>, %139, %cst_49 [1] : vector<16x32xf32> to vector<16xf32>
    %141 = vector.shape_cast %140 : vector<16xf32> to vector<16x1xf32>
    %cst_50 = arith.constant 3.200000e+01 : f32
    %142 = vector.broadcast %cst_50 : f32 to vector<16x1xf32>
    %143 = arith.divf %141, %142 : vector<16x1xf32>
    %144 = vector.broadcast %136 : vector<16x1xf32> to vector<16x32xf32>
    %145 = arith.subf %132, %144 : vector<16x32xf32>
    %cst_51 = arith.constant 9.99999974E-6 : f32
    %146 = vector.broadcast %cst_51 : f32 to vector<16x1xf32>
    %147 = arith.addf %143, %146 : vector<16x1xf32>
    %148 = math.rsqrt %147 : vector<16x1xf32>
    %149 = vector.broadcast %148 : vector<16x1xf32> to vector<16x32xf32>
    %150 = arith.mulf %145, %149 : vector<16x32xf32>
    %c0_52 = arith.constant 0 : index
    %c0_53 = arith.constant 0 : index
    %151 = vector.load %arg13[%c0_52, %c0_53] : memref<1x32xf32, #tpu.memory_space<vmem>>, vector<1x32xf32>
    %152 = vector.broadcast %151 : vector<1x32xf32> to vector<16x32xf32>
    %153 = arith.mulf %150, %152 : vector<16x32xf32>
    %c0_54 = arith.constant 0 : index
    %c0_55 = arith.constant 0 : index
    %154 = vector.load %arg14[%c0_54, %c0_55] : memref<1x32xf32, #tpu.memory_space<vmem>>, vector<1x32xf32>
    %155 = vector.broadcast %154 : vector<1x32xf32> to vector<16x32xf32>
    %156 = arith.addf %153, %155 : vector<16x32xf32>
    %157 = vector.shape_cast %156 : vector<16x32xf32> to vector<2x8x32xf32>
    %c0_56 = arith.constant 0 : index
    %c0_57 = arith.constant 0 : index
    %c0_58 = arith.constant 0 : index
    %158 = vector.load %arg15[%c0_56, %c0_57, %c0_58] : memref<2x8x32xf32, #tpu.memory_space<vmem>>, vector<2x8x32xf32>
    tpu.vector_store %arg15[%c0_56, %c0_57, %c0_58], %157 {strides = array<i32>} : memref<2x8x32xf32, #tpu.memory_space<vmem>>, vector<2x8x32xf32>,
    return
  }
  func.func @transform_0(%arg0: i32) -> (i32, i32, i32) {
    %c0_i32 = arith.constant 0 : i32
    %c0_i32_0 = arith.constant 0 : i32
    %c0_i32_1 = arith.constant 0 : i32
    return %arg0, %c0_i32, %c0_i32_0 : i32, i32, i32
  }
  func.func @transform_1(%arg0: i32) -> (i32, i32) {
    %c0_i32 = arith.constant 0 : i32
    %c0_i32_0 = arith.constant 0 : i32
    %c0_i32_1 = arith.constant 0 : i32
    return %c0_i32, %c0_i32_0 : i32, i32
  }
  func.func @transform_2(%arg0: i32) -> (i32, i32) {
    %c0_i32 = arith.constant 0 : i32
    %c0_i32_0 = arith.constant 0 : i32
    %c0_i32_1 = arith.constant 0 : i32
    return %c0_i32, %c0_i32_0 : i32, i32
  }
  func.func @transform_3(%arg0: i32) -> (i32, i32) {
    %c0_i32 = arith.constant 0 : i32
    %c0_i32_0 = arith.constant 0 : i32
    %c0_i32_1 = arith.constant 0 : i32
    return %c0_i32, %c0_i32_0 : i32, i32
  }
  func.func @transform_4(%arg0: i32) -> (i32, i32) {
    %c0_i32 = arith.constant 0 : i32
    %c0_i32_0 = arith.constant 0 : i32
    %c0_i32_1 = arith.constant 0 : i32
    return %c0_i32, %c0_i32_0 : i32, i32
  }
  func.func @transform_5(%arg0: i32) -> (i32, i32) {
    %c0_i32 = arith.constant 0 : i32
    %c0_i32_0 = arith.constant 0 : i32
    %c0_i32_1 = arith.constant 0 : i32
    return %c0_i32, %c0_i32_0 : i32, i32
  }
  func.func @transform_6(%arg0: i32) -> (i32, i32) {
    %c0_i32 = arith.constant 0 : i32
    %c0_i32_0 = arith.constant 0 : i32
    %c0_i32_1 = arith.constant 0 : i32
    return %c0_i32, %c0_i32_0 : i32, i32
  }
  func.func @transform_7(%arg0: i32) -> (i32, i32) {
    %c0_i32 = arith.constant 0 : i32
    %c0_i32_0 = arith.constant 0 : i32
    %c0_i32_1 = arith.constant 0 : i32
    return %c0_i32, %c0_i32_0 : i32, i32
  }
  func.func @transform_8(%arg0: i32) -> (i32, i32) {
    %c0_i32 = arith.constant 0 : i32
    %c0_i32_0 = arith.constant 0 : i32
    %c0_i32_1 = arith.constant 0 : i32
    return %c0_i32, %c0_i32_0 : i32, i32
  }
  func.func @transform_9(%arg0: i32) -> (i32, i32) {
    %c0_i32 = arith.constant 0 : i32
    %c0_i32_0 = arith.constant 0 : i32
    %c0_i32_1 = arith.constant 0 : i32
    return %c0_i32, %c0_i32_0 : i32, i32
  }
  func.func @transform_10(%arg0: i32) -> (i32, i32, i32) {
    %c0_i32 = arith.constant 0 : i32
    %c0_i32_0 = arith.constant 0 : i32
    %c0_i32_1 = arith.constant 0 : i32
    %c0_i32_2 = arith.constant 0 : i32
    return %c0_i32, %c0_i32_0, %c0_i32_1 : i32, i32, i32
  }
  func.func @transform_11(%arg0: i32) -> (i32, i32, i32) {
    %c0_i32 = arith.constant 0 : i32
    %c0_i32_0 = arith.constant 0 : i32
    %c0_i32_1 = arith.constant 0 : i32
    %c0_i32_2 = arith.constant 0 : i32
    return %c0_i32, %c0_i32_0, %c0_i32_1 : i32, i32, i32
  }
  func.func @transform_12(%arg0: i32) -> (i32, i32) {
    %c0_i32 = arith.constant 0 : i32
    %c0_i32_0 = arith.constant 0 : i32
    %c0_i32_1 = arith.constant 0 : i32
    return %c0_i32, %c0_i32_0 : i32, i32
  }
  func.func @transform_13(%arg0: i32) -> (i32, i32) {
    %c0_i32 = arith.constant 0 : i32
    %c0_i32_0 = arith.constant 0 : i32
    %c0_i32_1 = arith.constant 0 : i32
    return %c0_i32, %c0_i32_0 : i32, i32
  }
  func.func @transform_14(%arg0: i32) -> (i32, i32, i32) {
    %c0_i32 = arith.constant 0 : i32
    %c0_i32_0 = arith.constant 0 : i32
    %c0_i32_1 = arith.constant 0 : i32
    return %arg0, %c0_i32, %c0_i32_0 : i32, i32, i32
  }
}

</mosaic_0001>

<llo_original>
// kernel: tpu_custom_call.1
$region0: #{tpu_custom_call.1}
  #allocation0 [shape = 'u32[]', space=smem, size = 0x4, offset = 0x4, fixed_abs, tag = 'smem constant byte address 0x4 - core index']
  #allocation1 [shape = 'u32[144,128]{1,0:T(1,128)}', space=vmem, size = 0x12000, scoped, tag = 'internal scratch']
  %s0 = inlined_call_operand.vmem [shape: f32[2,8,32], index: 0, kind: input, shape index: {}]
  %s1 = inlined_call_operand.vmem [shape: f32[32,96], index: 1, kind: input, shape index: {}]
  %s2 = inlined_call_operand.vmem [shape: f32[1,96], index: 2, kind: input, shape index: {}]
  %s3 = inlined_call_operand.vmem [shape: f32[32,32], index: 3, kind: input, shape index: {}]
  %s4 = inlined_call_operand.vmem [shape: f32[1,32], index: 4, kind: input, shape index: {}]
  %s5 = inlined_call_operand.vmem [shape: f32[1,32], index: 5, kind: input, shape index: {}]
  %s6 = inlined_call_operand.vmem [shape: f32[1,32], index: 6, kind: input, shape index: {}]
  %s7 = inlined_call_operand.vmem [shape: f32[32,64], index: 7, kind: input, shape index: {}]
  %s8 = inlined_call_operand.vmem [shape: f32[1,64], index: 8, kind: input, shape index: {}]
  %s9 = inlined_call_operand.vmem [shape: f32[64,4], index: 9, kind: input, shape index: {}]
  %s10 = inlined_call_operand.vmem [shape: f32[4,64,32], index: 10, kind: input, shape index: {}]
  %s11 = inlined_call_operand.vmem [shape: f32[4,1,32], index: 11, kind: input, shape index: {}]
  %s12 = inlined_call_operand.vmem [shape: f32[1,32], index: 12, kind: input, shape index: {}]
  %s13 = inlined_call_operand.vmem [shape: f32[1,32], index: 13, kind: input, shape index: {}]
  %s14 = inlined_call_operand.hbm [shape: f32[2,8,32], index: 14, kind: output, shape index: {}]
  %s15 = sld [smem:[#allocation0]]
  $region66: #{tpu_custom_call.1} parent=0
    _
  %s17 = ssub.s32 1, %s15
  %s18 = scalar_select 0, %s17, %s15
  $region1: #{tpu_custom_call.1} parent=0
    #allocation2 [shape = 'u8[8192]{0}', space=vmem, size = 0x2000, scoped, tag = 'output window, operand 0, single buffered']
    #allocation3 [shape = 's32[1]{0}', space=sflag, size = 0x4, scoped, tag = 'scoped memory for tpu_custom_call.1']
    %19 = vsyncpa [#allocation3], 0
    // Predicated region
    $region2: #{tpu_custom_call.1} parent=1 // pred_check
      _
    $region3: #{tpu_custom_call.1} parent=1 // pred_check_branch
      %21 = sbr.rel (0) target = $region5
    $region4: #{tpu_custom_call.1} parent=1 // pred_region
      _
    $region5: #{tpu_custom_call.1} parent=1 // pred_fallthru
      _
    // Predicated region
    $region6: #{tpu_custom_call.1} parent=1 // pred_check
      _
    $region7: #{tpu_custom_call.1} parent=1 // pred_check_branch
      %23 = sbr.rel (0) target = $region9
    $region8: #{tpu_custom_call.1} parent=1 // pred_region
      _
    $region9: #{tpu_custom_call.1} parent=1 // pred_fallthru
      _
    // Predicated region
    $region10: #{tpu_custom_call.1} parent=1 // pred_check
      _
    $region11: #{tpu_custom_call.1} parent=1 // pred_check_branch
      %25 = sbr.rel (0) target = $region13
    $region12: #{tpu_custom_call.1} parent=1 // pred_region
      _
    $region13: #{tpu_custom_call.1} parent=1 // pred_fallthru
      _
    // Predicated region
    $region14: #{tpu_custom_call.1} parent=1 // pred_check
      _
    $region15: #{tpu_custom_call.1} parent=1 // pred_check_branch
      %27 = sbr.rel (0) target = $region17
    $region16: #{tpu_custom_call.1} parent=1 // pred_region
      _
    $region17: #{tpu_custom_call.1} parent=1 // pred_fallthru
      _
    // Predicated region
    $region18: #{tpu_custom_call.1} parent=1 // pred_check
      _
    $region19: #{tpu_custom_call.1} parent=1 // pred_check_branch
      %29 = sbr.rel (0) target = $region21
    $region20: #{tpu_custom_call.1} parent=1 // pred_region
      _
    $region21: #{tpu_custom_call.1} parent=1 // pred_fallthru
      _
    // Predicated region
    $region22: #{tpu_custom_call.1} parent=1 // pred_check
      _
    $region23: #{tpu_custom_call.1} parent=1 // pred_check_branch
      %31 = sbr.rel (0) target = $region25
    $region24: #{tpu_custom_call.1} parent=1 // pred_region
      _
    $region25: #{tpu_custom_call.1} parent=1 // pred_fallthru
      _
    // Predicated region
    $region26: #{tpu_custom_call.1} parent=1 // pred_check
      _
    $region27: #{tpu_custom_call.1} parent=1 // pred_check_branch
      %33 = sbr.rel (0) target = $region29
    $region28: #{tpu_custom_call.1} parent=1 // pred_region
      _
    $region29: #{tpu_custom_call.1} parent=1 // pred_fallthru
      _
    // Predicated region
    $region30: #{tpu_custom_call.1} parent=1 // pred_check
      _
    $region31: #{tpu_custom_call.1} parent=1 // pred_check_branch
      %35 = sbr.rel (0) target = $region33
    $region32: #{tpu_custom_call.1} parent=1 // pred_region
      _
    $region33: #{tpu_custom_call.1} parent=1 // pred_fallthru
      _
    // Predicated region
    $region34: #{tpu_custom_call.1} parent=1 // pred_check
      _
    $region35: #{tpu_custom_call.1} parent=1 // pred_check_branch
      %37 = sbr.rel (0) target = $region37
    $region36: #{tpu_custom_call.1} parent=1 // pred_region
      _
    $region37: #{tpu_custom_call.1} parent=1 // pred_fallthru
      _
    // Predicated region
    $region38: #{tpu_custom_call.1} parent=1 // pred_check
      _
    $region39: #{tpu_custom_call.1} parent=1 // pred_check_branch
      %39 = sbr.rel (0) target = $region41
    $region40: #{tpu_custom_call.1} parent=1 // pred_region
      _
    $region41: #{tpu_custom_call.1} parent=1 // pred_fallthru
      _
    // Predicated region
    $region42: #{tpu_custom_call.1} parent=1 // pred_check
      _
    $region43: #{tpu_custom_call.1} parent=1 // pred_check_branch
      %41 = sbr.rel (0) target = $region45
    $region44: #{tpu_custom_call.1} parent=1 // pred_region
      _
    $region45: #{tpu_custom_call.1} parent=1 // pred_fallthru
      _
    // Predicated region
    $region46: #{tpu_custom_call.1} parent=1 // pred_check
      _
    $region47: #{tpu_custom_call.1} parent=1 // pred_check_branch
      %43 = sbr.rel (0) target = $region49
    $region48: #{tpu_custom_call.1} parent=1 // pred_region
      _
    $region49: #{tpu_custom_call.1} parent=1 // pred_fallthru
      _
    // Predicated region
    $region50: #{tpu_custom_call.1} parent=1 // pred_check
      _
    $region51: #{tpu_custom_call.1} parent=1 // pred_check_branch
      %45 = sbr.rel (0) target = $region53
    $region52: #{tpu_custom_call.1} parent=1 // pred_region
      _
    $region53: #{tpu_custom_call.1} parent=1 // pred_fallthru
      _
    // Predicated region
    $region54: #{tpu_custom_call.1} parent=1 // pred_check
      _
    $region55: #{tpu_custom_call.1} parent=1 // pred_check_branch
      %47 = sbr.rel (0) target = $region57
    $region56: #{tpu_custom_call.1} parent=1 // pred_region
      _
    $region57: #{tpu_custom_call.1} parent=1 // pred_fallthru
      _
    %v48 = vld [vmem:[%s0] sm:$0xff]
    %v49 = vld [vmem:[%s0 + $0x8] sm:$0xff]
    %v50 = vld [vmem:[%s1] sm:$0xff]
    %v51 = vld [vmem:[%s1 + $0x8] sm:$0xff]
    %v52 = vld [vmem:[%s1 + $0x10] sm:$0xff]
    %v53 = vld [vmem:[%s1 + $0x18] sm:$0xff]
    %v54 = vld [vmem:[%s2] sm:$0x1]
    %v56 = vlaneseq
    %v57 = vshrl.u32 %v56, 7
    %v58 = vsub.s32 0, %v57
    %v59 = vrot.slane %v54, %v58
    %vm61 = vcmask 261120
    %v63 = vsel %vm61, %v48, 0
    %v66 = vsel %vm61, %v49, 0
    %68 = vmatprep.subr.mxu0 0.0
    %69 = vmatpush1.msra.mxu0 %v50
    %70 = vmatprep.subr.mxu0 0.0
    %71 = vmatpush1.msra.mxu0 %v51
    %72 = vmatprep.subr.mxu0 0.0
    %73 = vmatpush1.msra.mxu0 %v52
    %74 = vmatprep.subr.mxu0 0.0
    %75 = vmatpush1.msra.mxu0 %v53
    %76 = vmatprep.subr.mxu0 0.0
    %77 = vmatpush1.msra.mxu0 0.0
    %78 = vmatprep.subr.mxu0 0.0
    %79 = vmatpush1.msra.mxu0 0.0
    %80 = vmatprep.subr.mxu0 0.0
    %81 = vmatpush1.msra.mxu0 0.0
    %82 = vmatprep.subr.mxu0 0.0
    %83 = vmatpush1.msra.mxu0 0.0
    %84 = vmatprep.subr.mxu0 0.0
    %85 = vmatpush1.msra.mxu0 0.0
    %86 = vmatprep.subr.mxu0 0.0
    %87 = vmatpush1.msra.mxu0 0.0
    %88 = vmatprep.subr.mxu0 0.0
    %89 = vmatpush1.msra.mxu0 0.0
    %90 = vmatprep.subr.mxu0 0.0
    %91 = vmatpush1.msra.mxu0 0.0
    %92 = vmatprep.subr.mxu0 0.0
    %93 = vmatpush1.msra.mxu0 0.0
    %94 = vmatprep.subr.mxu0 0.0
    %95 = vmatpush1.msra.mxu0 0.0
    %96 = vmatprep.subr.mxu0 0.0
    %97 = vmatpush1.msra.mxu0 0.0
    %98 = vmatprep.subr.mxu0 0.0
    %99 = vmatpush1.msra.mxu0 0.0
    %100 = vmatprep.subr.mxu0 0.0
    %101 = vmatpush1.msra.mxu0 0.0
    %102 = vmatprep.subr.mxu0 0.0
    %103 = vmatpush1.msra.mxu0 0.0
    %104 = vmatprep.subr.mxu0 0.0
    %105 = vmatpush1.msra.mxu0 0.0
    %106 = vmatprep.subr.mxu0 0.0
    %107 = vmatpush1.msra.mxu0 0.0
    %108 = vmatprep.subr.mxu0 0.0
    %109 = vmatpush1.msra.mxu0 0.0
    %110 = vmatprep.subr.mxu0 0.0
    %111 = vmatpush1.msra.mxu0 0.0
    %112 = vmatprep.subr.mxu0 0.0
    %113 = vmatpush1.msra.mxu0 0.0
    %114 = vmatprep.subr.mxu0 0.0
    %115 = vmatpush1.msra.mxu0 0.0
    %116 = vmatprep.subr.mxu0 0.0
    %117 = vmatpush1.msra.mxu0 0.0
    %118 = vmatprep.subr.mxu0 0.0
    %119 = vmatpush1.msra.mxu0 0.0
    %120 = vmatprep.subr.mxu0 0.0
    %121 = vmatpush1.msra.mxu0 0.0
    %122 = vmatprep.subr.mxu0 0.0
    %123 = vmatpush1.msra.mxu0 0.0
    %124 = vmatprep.subr.mxu0 0.0
    %125 = vmatpush1.msra.mxu0 0.0
    %126 = vmatprep.subr.mxu0 0.0
    %127 = vmatpush1.msra.mxu0 0.0
    %128 = vmatprep.subr.mxu0 0.0
    %129 = vmatpush1.msra.mxu0 0.0
    %130 = vmatprep.subr.mxu0 0.0
    %131 = vmatpush1.msra.mxu0 0.0
    %132 = vmatprep.mubr.f32.mxu0 0.0
    %133 = vmatmul.mubr.f32.gmra.mrb[0].mxu0 %v63
    %v134 = vpop.f32.mrb[0].mxu0
    %v135 = vadd.f32 %v59, %v134
    %v136 = vpop.f32.mrb[0].mxu0
    %137 = vmatprep.mubr.f32.mxu0 0.0
    %138 = vmatmul.mubr.f32.gmra.mrb[0].mxu0 %v66
    %v139 = vpop.f32.mrb[0].mxu0
    %v140 = vadd.f32 %v59, %v139
    %v141 = vpop.f32.mrb[0].mxu0
    %142 = vdwg.mxu0
    %145 = vrot.lane.b32.xlu0 %v135, 120
    %v146 = vpop.permute.xlu0 %145
    %147 = vrot.lane.b32.xlu0 %v140, 120
    %v148 = vpop.permute.xlu0 %147
    %151 = vrot.lane.b32.xlu0 %v135, 112
    %v152 = vpop.permute.xlu0 %151
    %153 = vrot.lane.b32.xlu0 %v140, 112
    %v154 = vpop.permute.xlu0 %153
    %157 = vrot.lane.b32.xlu0 %v135, 104
    %v158 = vpop.permute.xlu0 %157
    %159 = vrot.lane.b32.xlu0 %v140, 104
    %v160 = vpop.permute.xlu0 %159
    %v163 = vmul.f32 %v135, 0.35355338
    %v164 = vmul.f32 %v146, 0.35355338
    %v165 = vmul.f32 %v152, 0.35355338
    %v166 = vmul.f32 %v158, 0.35355338
    %v167 = vmul.f32 %v140, 0.35355338
    %v168 = vmul.f32 %v148, 0.35355338
    %v169 = vmul.f32 %v154, 0.35355338
    %v170 = vmul.f32 %v160, 0.35355338
    %171 = vrot.lane.b32.xlu0 %v135, 96
    %v172 = vpop.permute.xlu0 %171
    %vm173 = vcmask 64512
    %v175 = vsel %vm173, %v163, 0
    %v177 = vsel %vm173, %v172, 0
    %179 = vmatprep.subr.mxu0 0.0
    %180 = vmatpush1.xpose.msra.mxu0 %v177
    %181 = vmatprep.subr.mxu0 0.0
    %182 = vmatpush1.xpose.msra.mxu0 0.0
    %183 = vmatprep.subr.mxu0 0.0
    %184 = vmatpush1.xpose.msra.mxu0 0.0
    %185 = vmatprep.subr.mxu0 0.0
    %186 = vmatpush1.xpose.msra.mxu0 0.0
    %187 = vmatprep.subr.mxu0 0.0
    %188 = vmatpush1.xpose.msra.mxu0 0.0
    %189 = vmatprep.subr.mxu0 0.0
    %190 = vmatpush1.xpose.msra.mxu0 0.0
    %191 = vmatprep.subr.mxu0 0.0
    %192 = vmatpush1.xpose.msra.mxu0 0.0
    %193 = vmatprep.subr.mxu0 0.0
    %194 = vmatpush1.xpose.msra.mxu0 0.0
    %195 = vmatprep.subr.mxu0 0.0
    %196 = vmatpush1.xpose.msra.mxu0 0.0
    %197 = vmatprep.subr.mxu0 0.0
    %198 = vmatpush1.xpose.msra.mxu0 0.0
    %199 = vmatprep.subr.mxu0 0.0
    %200 = vmatpush1.xpose.msra.mxu0 0.0
    %201 = vmatprep.subr.mxu0 0.0
    %202 = vmatpush1.xpose.msra.mxu0 0.0
    %203 = vmatprep.subr.mxu0 0.0
    %204 = vmatpush1.xpose.msra.mxu0 0.0
    %205 = vmatprep.subr.mxu0 0.0
    %206 = vmatpush1.xpose.msra.mxu0 0.0
    %207 = vmatprep.subr.mxu0 0.0
    %208 = vmatpush1.xpose.msra.mxu0 0.0
    %209 = vmatprep.subr.mxu0 0.0
    %210 = vmatpush1.xpose.msra.mxu0 0.0
    %211 = vmatprep.subr.mxu0 0.0
    %212 = vmatpush1.xpose.msra.mxu0 0.0
    %213 = vmatprep.subr.mxu0 0.0
    %214 = vmatpush1.xpose.msra.mxu0 0.0
    %215 = vmatprep.subr.mxu0 0.0
    %216 = vmatpush1.xpose.msra.mxu0 0.0
    %217 = vmatprep.subr.mxu0 0.0
    %218 = vmatpush1.xpose.msra.mxu0 0.0
    %219 = vmatprep.subr.mxu0 0.0
    %220 = vmatpush1.xpose.msra.mxu0 0.0
    %221 = vmatprep.subr.mxu0 0.0
    %222 = vmatpush1.xpose.msra.mxu0 0.0
    %223 = vmatprep.subr.mxu0 0.0
    %224 = vmatpush1.xpose.msra.mxu0 0.0
    %225 = vmatprep.subr.mxu0 0.0
    %226 = vmatpush1.xpose.msra.mxu0 0.0
    %227 = vmatprep.subr.mxu0 0.0
    %228 = vmatpush1.xpose.msra.mxu0 0.0
    %229 = vmatprep.subr.mxu0 0.0
    %230 = vmatpush1.xpose.msra.mxu0 0.0
    %231 = vmatprep.subr.mxu0 0.0
    %232 = vmatpush1.xpose.msra.mxu0 0.0
    %233 = vmatprep.subr.mxu0 0.0
    %234 = vmatpush1.xpose.msra.mxu0 0.0
    %235 = vmatprep.subr.mxu0 0.0
    %236 = vmatpush1.xpose.msra.mxu0 0.0
    %237 = vmatprep.subr.mxu0 0.0
    %238 = vmatpush1.xpose.msra.mxu0 0.0
    %239 = vmatprep.subr.mxu0 0.0
    %240 = vmatpush1.xpose.msra.mxu0 0.0
    %241 = vmatprep.subr.mxu0 0.0
    %242 = vmatpush1.xpose.msra.mxu0 0.0
    %243 = vmatprep.mubr.f32.mxu0 0.0
    %244 = vmatmul.mubr.f32.gmra.mrb[0].mxu0 %v175
    %v245 = vpop.f32.mrb[0].mxu0
    %v246 = vadd.f32 0.0, %v245
    %v247 = vpop.f32.mrb[0].mxu0
    %248 = vdwg.mxu0
    %249 = vrot.lane.b32.xlu0 %v146, 96
    %v250 = vpop.permute.xlu0 %249
    %v252 = vsel %vm173, %v164, 0
    %v254 = vsel %vm173, %v250, 0
    %256 = vmatprep.subr.mxu0 0.0
    %257 = vmatpush1.xpose.msra.mxu0 %v254
    %258 = vmatprep.subr.mxu0 0.0
    %259 = vmatpush1.xpose.msra.mxu0 0.0
    %260 = vmatprep.subr.mxu0 0.0
    %261 = vmatpush1.xpose.msra.mxu0 0.0
    %262 = vmatprep.subr.mxu0 0.0
    %263 = vmatpush1.xpose.msra.mxu0 0.0
    %264 = vmatprep.subr.mxu0 0.0
    %265 = vmatpush1.xpose.msra.mxu0 0.0
    %266 = vmatprep.subr.mxu0 0.0
    %267 = vmatpush1.xpose.msra.mxu0 0.0
    %268 = vmatprep.subr.mxu0 0.0
    %269 = vmatpush1.xpose.msra.mxu0 0.0
    %270 = vmatprep.subr.mxu0 0.0
    %271 = vmatpush1.xpose.msra.mxu0 0.0
    %272 = vmatprep.subr.mxu0 0.0
    %273 = vmatpush1.xpose.msra.mxu0 0.0
    %274 = vmatprep.subr.mxu0 0.0
    %275 = vmatpush1.xpose.msra.mxu0 0.0
    %276 = vmatprep.subr.mxu0 0.0
    %277 = vmatpush1.xpose.msra.mxu0 0.0
    %278 = vmatprep.subr.mxu0 0.0
    %279 = vmatpush1.xpose.msra.mxu0 0.0
    %280 = vmatprep.subr.mxu0 0.0
    %281 = vmatpush1.xpose.msra.mxu0 0.0
    %282 = vmatprep.subr.mxu0 0.0
    %283 = vmatpush1.xpose.msra.mxu0 0.0
    %284 = vmatprep.subr.mxu0 0.0
    %285 = vmatpush1.xpose.msra.mxu0 0.0
    %286 = vmatprep.subr.mxu0 0.0
    %287 = vmatpush1.xpose.msra.mxu0 0.0
    %288 = vmatprep.subr.mxu0 0.0
    %289 = vmatpush1.xpose.msra.mxu0 0.0
    %290 = vmatprep.subr.mxu0 0.0
    %291 = vmatpush1.xpose.msra.mxu0 0.0
    %292 = vmatprep.subr.mxu0 0.0
    %293 = vmatpush1.xpose.msra.mxu0 0.0
    %294 = vmatprep.subr.mxu0 0.0
    %295 = vmatpush1.xpose.msra.mxu0 0.0
    %296 = vmatprep.subr.mxu0 0.0
    %297 = vmatpush1.xpose.msra.mxu0 0.0
    %298 = vmatprep.subr.mxu0 0.0
    %299 = vmatpush1.xpose.msra.mxu0 0.0
    %300 = vmatprep.subr.mxu0 0.0
    %301 = vmatpush1.xpose.msra.mxu0 0.0
    %302 = vmatprep.subr.mxu0 0.0
    %303 = vmatpush1.xpose.msra.mxu0 0.0
    %304 = vmatprep.subr.mxu0 0.0
    %305 = vmatpush1.xpose.msra.mxu0 0.0
    %306 = vmatprep.subr.mxu0 0.0
    %307 = vmatpush1.xpose.msra.mxu0 0.0
    %308 = vmatprep.subr.mxu0 0.0
    %309 = vmatpush1.xpose.msra.mxu0 0.0
    %310 = vmatprep.subr.mxu0 0.0
    %311 = vmatpush1.xpose.msra.mxu0 0.0
    %312 = vmatprep.subr.mxu0 0.0
    %313 = vmatpush1.xpose.msra.mxu0 0.0
    %314 = vmatprep.subr.mxu0 0.0
    %315 = vmatpush1.xpose.msra.mxu0 0.0
    %316 = vmatprep.subr.mxu0 0.0
    %317 = vmatpush1.xpose.msra.mxu0 0.0
    %318 = vmatprep.subr.mxu0 0.0
    %319 = vmatpush1.xpose.msra.mxu0 0.0
    %320 = vmatprep.mubr.f32.mxu0 0.0
    %321 = vmatmul.mubr.f32.gmra.mrb[0].mxu0 %v252
    %v322 = vpop.f32.mrb[0].mxu0
    %v323 = vadd.f32 0.0, %v322
    %v324 = vpop.f32.mrb[0].mxu0
    %325 = vdwg.mxu0
    %326 = vrot.lane.b32.xlu0 %v152, 96
    %v327 = vpop.permute.xlu0 %326
    %v329 = vsel %vm173, %v165, 0
    %v331 = vsel %vm173, %v327, 0
    %333 = vmatprep.subr.mxu0 0.0
    %334 = vmatpush1.xpose.msra.mxu0 %v331
    %335 = vmatprep.subr.mxu0 0.0
    %336 = vmatpush1.xpose.msra.mxu0 0.0
    %337 = vmatprep.subr.mxu0 0.0
    %338 = vmatpush1.xpose.msra.mxu0 0.0
    %339 = vmatprep.subr.mxu0 0.0
    %340 = vmatpush1.xpose.msra.mxu0 0.0
    %341 = vmatprep.subr.mxu0 0.0
    %342 = vmatpush1.xpose.msra.mxu0 0.0
    %343 = vmatprep.subr.mxu0 0.0
    %344 = vmatpush1.xpose.msra.mxu0 0.0
    %345 = vmatprep.subr.mxu0 0.0
    %346 = vmatpush1.xpose.msra.mxu0 0.0
    %347 = vmatprep.subr.mxu0 0.0
    %348 = vmatpush1.xpose.msra.mxu0 0.0
    %349 = vmatprep.subr.mxu0 0.0
    %350 = vmatpush1.xpose.msra.mxu0 0.0
    %351 = vmatprep.subr.mxu0 0.0
    %352 = vmatpush1.xpose.msra.mxu0 0.0
    %353 = vmatprep.subr.mxu0 0.0
    %354 = vmatpush1.xpose.msra.mxu0 0.0
    %355 = vmatprep.subr.mxu0 0.0
    %356 = vmatpush1.xpose.msra.mxu0 0.0
    %357 = vmatprep.subr.mxu0 0.0
    %358 = vmatpush1.xpose.msra.mxu0 0.0
    %359 = vmatprep.subr.mxu0 0.0
    %360 = vmatpush1.xpose.msra.mxu0 0.0
    %361 = vmatprep.subr.mxu0 0.0
    %362 = vmatpush1.xpose.msra.mxu0 0.0
    %363 = vmatprep.subr.mxu0 0.0
    %364 = vmatpush1.xpose.msra.mxu0 0.0
    %365 = vmatprep.subr.mxu0 0.0
    %366 = vmatpush1.xpose.msra.mxu0 0.0
    %367 = vmatprep.subr.mxu0 0.0
    %368 = vmatpush1.xpose.msra.mxu0 0.0
    %369 = vmatprep.subr.mxu0 0.0
    %370 = vmatpush1.xpose.msra.mxu0 0.0
    %371 = vmatprep.subr.mxu0 0.0
    %372 = vmatpush1.xpose.msra.mxu0 0.0
    %373 = vmatprep.subr.mxu0 0.0
    %374 = vmatpush1.xpose.msra.mxu0 0.0
    %375 = vmatprep.subr.mxu0 0.0
    %376 = vmatpush1.xpose.msra.mxu0 0.0
    %377 = vmatprep.subr.mxu0 0.0
    %378 = vmatpush1.xpose.msra.mxu0 0.0
    %379 = vmatprep.subr.mxu0 0.0
    %380 = vmatpush1.xpose.msra.mxu0 0.0
    %381 = vmatprep.subr.mxu0 0.0
    %382 = vmatpush1.xpose.msra.mxu0 0.0
    %383 = vmatprep.subr.mxu0 0.0
    %384 = vmatpush1.xpose.msra.mxu0 0.0
    %385 = vmatprep.subr.mxu0 0.0
    %386 = vmatpush1.xpose.msra.mxu0 0.0
    %387 = vmatprep.subr.mxu0 0.0
    %388 = vmatpush1.xpose.msra.mxu0 0.0
    %389 = vmatprep.subr.mxu0 0.0
    %390 = vmatpush1.xpose.msra.mxu0 0.0
    %391 = vmatprep.subr.mxu0 0.0
    %392 = vmatpush1.xpose.msra.mxu0 0.0
    %393 = vmatprep.subr.mxu0 0.0
    %394 = vmatpush1.xpose.msra.mxu0 0.0
    %395 = vmatprep.subr.mxu0 0.0
    %396 = vmatpush1.xpose.msra.mxu0 0.0
    %397 = vmatprep.mubr.f32.mxu0 0.0
    %398 = vmatmul.mubr.f32.gmra.mrb[0].mxu0 %v329
    %v399 = vpop.f32.mrb[0].mxu0
    %v400 = vadd.f32 0.0, %v399
    %v401 = vpop.f32.mrb[0].mxu0
    %402 = vdwg.mxu0
    %403 = vrot.lane.b32.xlu0 %v158, 96
    %v404 = vpop.permute.xlu0 %403
    %v406 = vsel %vm173, %v166, 0
    %v408 = vsel %vm173, %v404, 0
    %410 = vmatprep.subr.mxu0 0.0
    %411 = vmatpush1.xpose.msra.mxu0 %v408
    %412 = vmatprep.subr.mxu0 0.0
    %413 = vmatpush1.xpose.msra.mxu0 0.0
    %414 = vmatprep.subr.mxu0 0.0
    %415 = vmatpush1.xpose.msra.mxu0 0.0
    %416 = vmatprep.subr.mxu0 0.0
    %417 = vmatpush1.xpose.msra.mxu0 0.0
    %418 = vmatprep.subr.mxu0 0.0
    %419 = vmatpush1.xpose.msra.mxu0 0.0
    %420 = vmatprep.subr.mxu0 0.0
    %421 = vmatpush1.xpose.msra.mxu0 0.0
    %422 = vmatprep.subr.mxu0 0.0
    %423 = vmatpush1.xpose.msra.mxu0 0.0
    %424 = vmatprep.subr.mxu0 0.0
    %425 = vmatpush1.xpose.msra.mxu0 0.0
    %426 = vmatprep.subr.mxu0 0.0
    %427 = vmatpush1.xpose.msra.mxu0 0.0
    %428 = vmatprep.subr.mxu0 0.0
    %429 = vmatpush1.xpose.msra.mxu0 0.0
    %430 = vmatprep.subr.mxu0 0.0
    %431 = vmatpush1.xpose.msra.mxu0 0.0
    %432 = vmatprep.subr.mxu0 0.0
    %433 = vmatpush1.xpose.msra.mxu0 0.0
    %434 = vmatprep.subr.mxu0 0.0
    %435 = vmatpush1.xpose.msra.mxu0 0.0
    %436 = vmatprep.subr.mxu0 0.0
    %437 = vmatpush1.xpose.msra.mxu0 0.0
    %438 = vmatprep.subr.mxu0 0.0
    %439 = vmatpush1.xpose.msra.mxu0 0.0
    %440 = vmatprep.subr.mxu0 0.0
    %441 = vmatpush1.xpose.msra.mxu0 0.0
    %442 = vmatprep.subr.mxu0 0.0
    %443 = vmatpush1.xpose.msra.mxu0 0.0
    %444 = vmatprep.subr.mxu0 0.0
    %445 = vmatpush1.xpose.msra.mxu0 0.0
    %446 = vmatprep.subr.mxu0 0.0
    %447 = vmatpush1.xpose.msra.mxu0 0.0
    %448 = vmatprep.subr.mxu0 0.0
    %449 = vmatpush1.xpose.msra.mxu0 0.0
    %450 = vmatprep.subr.mxu0 0.0
    %451 = vmatpush1.xpose.msra.mxu0 0.0
    %452 = vmatprep.subr.mxu0 0.0
    %453 = vmatpush1.xpose.msra.mxu0 0.0
    %454 = vmatprep.subr.mxu0 0.0
    %455 = vmatpush1.xpose.msra.mxu0 0.0
    %456 = vmatprep.subr.mxu0 0.0
    %457 = vmatpush1.xpose.msra.mxu0 0.0
    %458 = vmatprep.subr.mxu0 0.0
    %459 = vmatpush1.xpose.msra.mxu0 0.0
    %460 = vmatprep.subr.mxu0 0.0
    %461 = vmatpush1.xpose.msra.mxu0 0.0
    %462 = vmatprep.subr.mxu0 0.0
    %463 = vmatpush1.xpose.msra.mxu0 0.0
    %464 = vmatprep.subr.mxu0 0.0
    %465 = vmatpush1.xpose.msra.mxu0 0.0
    %466 = vmatprep.subr.mxu0 0.0
    %467 = vmatpush1.xpose.msra.mxu0 0.0
    %468 = vmatprep.subr.mxu0 0.0
    %469 = vmatpush1.xpose.msra.mxu0 0.0
    %470 = vmatprep.subr.mxu0 0.0
    %471 = vmatpush1.xpose.msra.mxu0 0.0
    %472 = vmatprep.subr.mxu0 0.0
    %473 = vmatpush1.xpose.msra.mxu0 0.0
    %474 = vmatprep.mubr.f32.mxu0 0.0
    %475 = vmatmul.mubr.f32.gmra.mrb[0].mxu0 %v406
    %v476 = vpop.f32.mrb[0].mxu0
    %v477 = vadd.f32 0.0, %v476
    %v478 = vpop.f32.mrb[0].mxu0
    %479 = vdwg.mxu0
    %480 = vrot.lane.b32.xlu0 %v140, 96
    %v481 = vpop.permute.xlu0 %480
    %v483 = vsel %vm173, %v167, 0
    %v485 = vsel %vm173, %v481, 0
    %487 = vmatprep.subr.mxu0 0.0
    %488 = vmatpush1.xpose.msra.mxu0 %v485
    %489 = vmatprep.subr.mxu0 0.0
    %490 = vmatpush1.xpose.msra.mxu0 0.0
    %491 = vmatprep.subr.mxu0 0.0
    %492 = vmatpush1.xpose.msra.mxu0 0.0
    %493 = vmatprep.subr.mxu0 0.0
    %494 = vmatpush1.xpose.msra.mxu0 0.0
    %495 = vmatprep.subr.mxu0 0.0
    %496 = vmatpush1.xpose.msra.mxu0 0.0
    %497 = vmatprep.subr.mxu0 0.0
    %498 = vmatpush1.xpose.msra.mxu0 0.0
    %499 = vmatprep.subr.mxu0 0.0
    %500 = vmatpush1.xpose.msra.mxu0 0.0
    %501 = vmatprep.subr.mxu0 0.0
    %502 = vmatpush1.xpose.msra.mxu0 0.0
    %503 = vmatprep.subr.mxu0 0.0
    %504 = vmatpush1.xpose.msra.mxu0 0.0
    %505 = vmatprep.subr.mxu0 0.0
    %506 = vmatpush1.xpose.msra.mxu0 0.0
    %507 = vmatprep.subr.mxu0 0.0
    %508 = vmatpush1.xpose.msra.mxu0 0.0
    %509 = vmatprep.subr.mxu0 0.0
    %510 = vmatpush1.xpose.msra.mxu0 0.0
    %511 = vmatprep.subr.mxu0 0.0
    %512 = vmatpush1.xpose.msra.mxu0 0.0
    %513 = vmatprep.subr.mxu0 0.0
    %514 = vmatpush1.xpose.msra.mxu0 0.0
    %515 = vmatprep.subr.mxu0 0.0
    %516 = vmatpush1.xpose.msra.mxu0 0.0
    %517 = vmatprep.subr.mxu0 0.0
    %518 = vmatpush1.xpose.msra.mxu0 0.0
    %519 = vmatprep.subr.mxu0 0.0
    %520 = vmatpush1.xpose.msra.mxu0 0.0
    %521 = vmatprep.subr.mxu0 0.0
    %522 = vmatpush1.xpose.msra.mxu0 0.0
    %523 = vmatprep.subr.mxu0 0.0
    %524 = vmatpush1.xpose.msra.mxu0 0.0
    %525 = vmatprep.subr.mxu0 0.0
    %526 = vmatpush1.xpose.msra.mxu0 0.0
    %527 = vmatprep.subr.mxu0 0.0
    %528 = vmatpush1.xpose.msra.mxu0 0.0
    %529 = vmatprep.subr.mxu0 0.0
    %530 = vmatpush1.xpose.msra.mxu0 0.0
    %531 = vmatprep.subr.mxu0 0.0
    %532 = vmatpush1.xpose.msra.mxu0 0.0
    %533 = vmatprep.subr.mxu0 0.0
    %534 = vmatpush1.xpose.msra.mxu0 0.0
    %535 = vmatprep.subr.mxu0 0.0
    %536 = vmatpush1.xpose.msra.mxu0 0.0
    %537 = vmatprep.subr.mxu0 0.0
    %538 = vmatpush1.xpose.msra.mxu0 0.0
    %539 = vmatprep.subr.mxu0 0.0
    %540 = vmatpush1.xpose.msra.mxu0 0.0
    %541 = vmatprep.subr.mxu0 0.0
    %542 = vmatpush1.xpose.msra.mxu0 0.0
    %543 = vmatprep.subr.mxu0 0.0
    %544 = vmatpush1.xpose.msra.mxu0 0.0
    %545 = vmatprep.subr.mxu0 0.0
    %546 = vmatpush1.xpose.msra.mxu0 0.0
    %547 = vmatprep.subr.mxu0 0.0
    %548 = vmatpush1.xpose.msra.mxu0 0.0
    %549 = vmatprep.subr.mxu0 0.0
    %550 = vmatpush1.xpose.msra.mxu0 0.0
    %551 = vmatprep.mubr.f32.mxu0 0.0
    %552 = vmatmul.mubr.f32.gmra.mrb[0].mxu0 %v483
    %v553 = vpop.f32.mrb[0].mxu0
    %v554 = vadd.f32 0.0, %v553
    %v555 = vpop.f32.mrb[0].mxu0
    %556 = vdwg.mxu0
    %557 = vrot.lane.b32.xlu0 %v148, 96
    %v558 = vpop.permute.xlu0 %557
    %v560 = vsel %vm173, %v168, 0
    %v562 = vsel %vm173, %v558, 0
    %564 = vmatprep.subr.mxu0 0.0
    %565 = vmatpush1.xpose.msra.mxu0 %v562
    %566 = vmatprep.subr.mxu0 0.0
    %567 = vmatpush1.xpose.msra.mxu0 0.0
    %568 = vmatprep.subr.mxu0 0.0
    %569 = vmatpush1.xpose.msra.mxu0 0.0
    %570 = vmatprep.subr.mxu0 0.0
    %571 = vmatpush1.xpose.msra.mxu0 0.0
    %572 = vmatprep.subr.mxu0 0.0
    %573 = vmatpush1.xpose.msra.mxu0 0.0
    %574 = vmatprep.subr.mxu0 0.0
    %575 = vmatpush1.xpose.msra.mxu0 0.0
    %576 = vmatprep.subr.mxu0 0.0
    %577 = vmatpush1.xpose.msra.mxu0 0.0
    %578 = vmatprep.subr.mxu0 0.0
    %579 = vmatpush1.xpose.msra.mxu0 0.0
    %580 = vmatprep.subr.mxu0 0.0
    %581 = vmatpush1.xpose.msra.mxu0 0.0
    %582 = vmatprep.subr.mxu0 0.0
    %583 = vmatpush1.xpose.msra.mxu0 0.0
    %584 = vmatprep.subr.mxu0 0.0
    %585 = vmatpush1.xpose.msra.mxu0 0.0
    %586 = vmatprep.subr.mxu0 0.0
    %587 = vmatpush1.xpose.msra.mxu0 0.0
    %588 = vmatprep.subr.mxu0 0.0
    %589 = vmatpush1.xpose.msra.mxu0 0.0
    %590 = vmatprep.subr.mxu0 0.0
    %591 = vmatpush1.xpose.msra.mxu0 0.0
    %592 = vmatprep.subr.mxu0 0.0
    %593 = vmatpush1.xpose.msra.mxu0 0.0
    %594 = vmatprep.subr.mxu0 0.0
    %595 = vmatpush1.xpose.msra.mxu0 0.0
    %596 = vmatprep.subr.mxu0 0.0
    %597 = vmatpush1.xpose.msra.mxu0 0.0
    %598 = vmatprep.subr.mxu0 0.0
    %599 = vmatpush1.xpose.msra.mxu0 0.0
    %600 = vmatprep.subr.mxu0 0.0
    %601 = vmatpush1.xpose.msra.mxu0 0.0
    %602 = vmatprep.subr.mxu0 0.0
    %603 = vmatpush1.xpose.msra.mxu0 0.0
    %604 = vmatprep.subr.mxu0 0.0
    %605 = vmatpush1.xpose.msra.mxu0 0.0
    %606 = vmatprep.subr.mxu0 0.0
    %607 = vmatpush1.xpose.msra.mxu0 0.0
    %608 = vmatprep.subr.mxu0 0.0
    %609 = vmatpush1.xpose.msra.mxu0 0.0
    %610 = vmatprep.subr.mxu0 0.0
    %611 = vmatpush1.xpose.msra.mxu0 0.0
    %612 = vmatprep.subr.mxu0 0.0
    %613 = vmatpush1.xpose.msra.mxu0 0.0
    %614 = vmatprep.subr.mxu0 0.0
    %615 = vmatpush1.xpose.msra.mxu0 0.0
    %616 = vmatprep.subr.mxu0 0.0
    %617 = vmatpush1.xpose.msra.mxu0 0.0
    %618 = vmatprep.subr.mxu0 0.0
    %619 = vmatpush1.xpose.msra.mxu0 0.0
    %620 = vmatprep.subr.mxu0 0.0
    %621 = vmatpush1.xpose.msra.mxu0 0.0
    %622 = vmatprep.subr.mxu0 0.0
    %623 = vmatpush1.xpose.msra.mxu0 0.0
    %624 = vmatprep.subr.mxu0 0.0
    %625 = vmatpush1.xpose.msra.mxu0 0.0
    %626 = vmatprep.subr.mxu0 0.0
    %627 = vmatpush1.xpose.msra.mxu0 0.0
    %628 = vmatprep.mubr.f32.mxu0 0.0
    %629 = vmatmul.mubr.f32.gmra.mrb[0].mxu0 %v560
    %v630 = vpop.f32.mrb[0].mxu0
    %v631 = vadd.f32 0.0, %v630
    %v632 = vpop.f32.mrb[0].mxu0
    %633 = vdwg.mxu0
    %634 = vrot.lane.b32.xlu0 %v154, 96
    %v635 = vpop.permute.xlu0 %634
    %v637 = vsel %vm173, %v169, 0
    %v639 = vsel %vm173, %v635, 0
    %641 = vmatprep.subr.mxu0 0.0
    %642 = vmatpush1.xpose.msra.mxu0 %v639
    %643 = vmatprep.subr.mxu0 0.0
    %644 = vmatpush1.xpose.msra.mxu0 0.0
    %645 = vmatprep.subr.mxu0 0.0
    %646 = vmatpush1.xpose.msra.mxu0 0.0
    %647 = vmatprep.subr.mxu0 0.0
    %648 = vmatpush1.xpose.msra.mxu0 0.0
    %649 = vmatprep.subr.mxu0 0.0
    %650 = vmatpush1.xpose.msra.mxu0 0.0
    %651 = vmatprep.subr.mxu0 0.0
    %652 = vmatpush1.xpose.msra.mxu0 0.0
    %653 = vmatprep.subr.mxu0 0.0
    %654 = vmatpush1.xpose.msra.mxu0 0.0
    %655 = vmatprep.subr.mxu0 0.0
    %656 = vmatpush1.xpose.msra.mxu0 0.0
    %657 = vmatprep.subr.mxu0 0.0
    %658 = vmatpush1.xpose.msra.mxu0 0.0
    %659 = vmatprep.subr.mxu0 0.0
    %660 = vmatpush1.xpose.msra.mxu0 0.0
    %661 = vmatprep.subr.mxu0 0.0
    %662 = vmatpush1.xpose.msra.mxu0 0.0
    %663 = vmatprep.subr.mxu0 0.0
    %664 = vmatpush1.xpose.msra.mxu0 0.0
    %665 = vmatprep.subr.mxu0 0.0
    %666 = vmatpush1.xpose.msra.mxu0 0.0
    %667 = vmatprep.subr.mxu0 0.0
    %668 = vmatpush1.xpose.msra.mxu0 0.0
    %669 = vmatprep.subr.mxu0 0.0
    %670 = vmatpush1.xpose.msra.mxu0 0.0
    %671 = vmatprep.subr.mxu0 0.0
    %672 = vmatpush1.xpose.msra.mxu0 0.0
    %673 = vmatprep.subr.mxu0 0.0
    %674 = vmatpush1.xpose.msra.mxu0 0.0
    %675 = vmatprep.subr.mxu0 0.0
    %676 = vmatpush1.xpose.msra.mxu0 0.0
    %677 = vmatprep.subr.mxu0 0.0
    %678 = vmatpush1.xpose.msra.mxu0 0.0
    %679 = vmatprep.subr.mxu0 0.0
    %680 = vmatpush1.xpose.msra.mxu0 0.0
    %681 = vmatprep.subr.mxu0 0.0
    %682 = vmatpush1.xpose.msra.mxu0 0.0
    %683 = vmatprep.subr.mxu0 0.0
    %684 = vmatpush1.xpose.msra.mxu0 0.0
    %685 = vmatprep.subr.mxu0 0.0
    %686 = vmatpush1.xpose.msra.mxu0 0.0
    %687 = vmatprep.subr.mxu0 0.0
    %688 = vmatpush1.xpose.msra.mxu0 0.0
    %689 = vmatprep.subr.mxu0 0.0
    %690 = vmatpush1.xpose.msra.mxu0 0.0
    %691 = vmatprep.subr.mxu0 0.0
    %692 = vmatpush1.xpose.msra.mxu0 0.0
    %693 = vmatprep.subr.mxu0 0.0
    %694 = vmatpush1.xpose.msra.mxu0 0.0
    %695 = vmatprep.subr.mxu0 0.0
    %696 = vmatpush1.xpose.msra.mxu0 0.0
    %697 = vmatprep.subr.mxu0 0.0
    %698 = vmatpush1.xpose.msra.mxu0 0.0
    %699 = vmatprep.subr.mxu0 0.0
    %700 = vmatpush1.xpose.msra.mxu0 0.0
    %701 = vmatprep.subr.mxu0 0.0
    %702 = vmatpush1.xpose.msra.mxu0 0.0
    %703 = vmatprep.subr.mxu0 0.0
    %704 = vmatpush1.xpose.msra.mxu0 0.0
    %705 = vmatprep.mubr.f32.mxu0 0.0
    %706 = vmatmul.mubr.f32.gmra.mrb[0].mxu0 %v637
    %v707 = vpop.f32.mrb[0].mxu0
    %v708 = vadd.f32 0.0, %v707
    %v709 = vpop.f32.mrb[0].mxu0
    %710 = vdwg.mxu0
    %711 = vrot.lane.b32.xlu0 %v160, 96
    %v712 = vpop.permute.xlu0 %711
    %v714 = vsel %vm173, %v170, 0
    %v716 = vsel %vm173, %v712, 0
    %718 = vmatprep.subr.mxu0 0.0
    %719 = vmatpush1.xpose.msra.mxu0 %v716
    %720 = vmatprep.subr.mxu0 0.0
    %721 = vmatpush1.xpose.msra.mxu0 0.0
    %722 = vmatprep.subr.mxu0 0.0
    %723 = vmatpush1.xpose.msra.mxu0 0.0
    %724 = vmatprep.subr.mxu0 0.0
    %725 = vmatpush1.xpose.msra.mxu0 0.0
    %726 = vmatprep.subr.mxu0 0.0
    %727 = vmatpush1.xpose.msra.mxu0 0.0
    %728 = vmatprep.subr.mxu0 0.0
    %729 = vmatpush1.xpose.msra.mxu0 0.0
    %730 = vmatprep.subr.mxu0 0.0
    %731 = vmatpush1.xpose.msra.mxu0 0.0
    %732 = vmatprep.subr.mxu0 0.0
    %733 = vmatpush1.xpose.msra.mxu0 0.0
    %734 = vmatprep.subr.mxu0 0.0
    %735 = vmatpush1.xpose.msra.mxu0 0.0
    %736 = vmatprep.subr.mxu0 0.0
    %737 = vmatpush1.xpose.msra.mxu0 0.0
    %738 = vmatprep.subr.mxu0 0.0
    %739 = vmatpush1.xpose.msra.mxu0 0.0
    %740 = vmatprep.subr.mxu0 0.0
    %741 = vmatpush1.xpose.msra.mxu0 0.0
    %742 = vmatprep.subr.mxu0 0.0
    %743 = vmatpush1.xpose.msra.mxu0 0.0
    %744 = vmatprep.subr.mxu0 0.0
    %745 = vmatpush1.xpose.msra.mxu0 0.0
    %746 = vmatprep.subr.mxu0 0.0
    %747 = vmatpush1.xpose.msra.mxu0 0.0
    %748 = vmatprep.subr.mxu0 0.0
    %749 = vmatpush1.xpose.msra.mxu0 0.0
    %750 = vmatprep.subr.mxu0 0.0
    %751 = vmatpush1.xpose.msra.mxu0 0.0
    %752 = vmatprep.subr.mxu0 0.0
    %753 = vmatpush1.xpose.msra.mxu0 0.0
    %754 = vmatprep.subr.mxu0 0.0
    %755 = vmatpush1.xpose.msra.mxu0 0.0
    %756 = vmatprep.subr.mxu0 0.0
    %757 = vmatpush1.xpose.msra.mxu0 0.0
    %758 = vmatprep.subr.mxu0 0.0
    %759 = vmatpush1.xpose.msra.mxu0 0.0
    %760 = vmatprep.subr.mxu0 0.0
    %761 = vmatpush1.xpose.msra.mxu0 0.0
    %762 = vmatprep.subr.mxu0 0.0
    %763 = vmatpush1.xpose.msra.mxu0 0.0
    %764 = vmatprep.subr.mxu0 0.0
    %765 = vmatpush1.xpose.msra.mxu0 0.0
    %766 = vmatprep.subr.mxu0 0.0
    %767 = vmatpush1.xpose.msra.mxu0 0.0
    %768 = vmatprep.subr.mxu0 0.0
    %769 = vmatpush1.xpose.msra.mxu0 0.0
    %770 = vmatprep.subr.mxu0 0.0
    %771 = vmatpush1.xpose.msra.mxu0 0.0
    %772 = vmatprep.subr.mxu0 0.0
    %773 = vmatpush1.xpose.msra.mxu0 0.0
    %774 = vmatprep.subr.mxu0 0.0
    %775 = vmatpush1.xpose.msra.mxu0 0.0
    %776 = vmatprep.subr.mxu0 0.0
    %777 = vmatpush1.xpose.msra.mxu0 0.0
    %778 = vmatprep.subr.mxu0 0.0
    %779 = vmatpush1.xpose.msra.mxu0 0.0
    %780 = vmatprep.subr.mxu0 0.0
    %781 = vmatpush1.xpose.msra.mxu0 0.0
    %782 = vmatprep.mubr.f32.mxu0 0.0
    %783 = vmatmul.mubr.f32.gmra.mrb[0].mxu0 %v714
    %v784 = vpop.f32.mrb[0].mxu0
    %v785 = vadd.f32 0.0, %v784
    %v786 = vpop.f32.mrb[0].mxu0
    %787 = vdwg.mxu0
    %v788 = vsel %vm173, %v246, -inf
    %789 = vmax.xlane.f32.xlu0 %v788
    %v790 = vpop.xlane.xlu0 %789
    %v791 = vsel %vm173, %v323, -inf
    %792 = vmax.xlane.f32.xlu0 %v791
    %v793 = vpop.xlane.xlu0 %792
    %v794 = vsel %vm173, %v400, -inf
    %795 = vmax.xlane.f32.xlu0 %v794
    %v796 = vpop.xlane.xlu0 %795
    %v797 = vsel %vm173, %v477, -inf
    %798 = vmax.xlane.f32.xlu0 %v797
    %v799 = vpop.xlane.xlu0 %798
    %v800 = vsel %vm173, %v554, -inf
    %801 = vmax.xlane.f32.xlu0 %v800
    %v802 = vpop.xlane.xlu0 %801
    %v803 = vsel %vm173, %v631, -inf
    %804 = vmax.xlane.f32.xlu0 %v803
    %v805 = vpop.xlane.xlu0 %804
    %v806 = vsel %vm173, %v708, -inf
    %807 = vmax.xlane.f32.xlu0 %v806
    %v808 = vpop.xlane.xlu0 %807
    %v809 = vsel %vm173, %v785, -inf
    %810 = vmax.xlane.f32.xlu0 %v809
    %v811 = vpop.xlane.xlu0 %810
    %v812 = vsub.f32 %v246, %v790
    %v813 = vsub.f32 %v323, %v793
    %v814 = vsub.f32 %v400, %v796
    %v815 = vsub.f32 %v477, %v799
    %v816 = vsub.f32 %v554, %v802
    %v817 = vsub.f32 %v631, %v805
    %v818 = vsub.f32 %v708, %v808
    %v819 = vsub.f32 %v785, %v811
    %v820 = vmul.f32 %v812, 1.442695
    %v821 = vpow.pop %v820
    %v822 = vmul.f32 %v813, 1.442695
    %v823 = vpow.pop %v822
    %v824 = vmul.f32 %v814, 1.442695
    %v825 = vpow.pop %v824
    %v826 = vmul.f32 %v815, 1.442695
    %v827 = vpow.pop %v826
    %v828 = vmul.f32 %v816, 1.442695
    %v829 = vpow.pop %v828
    %v830 = vmul.f32 %v817, 1.442695
    %v831 = vpow.pop %v830
    %v832 = vmul.f32 %v818, 1.442695
    %v833 = vpow.pop %v832
    %v834 = vmul.f32 %v819, 1.442695
    %v835 = vpow.pop %v834
    %v836 = vsel %vm173, %v821, 0.0
    %837 = vadd.xlane.f32.xlu0 %v836
    %v838 = vpop.xlane.xlu0 %837
    %v839 = vsel %vm173, %v823, 0.0
    %840 = vadd.xlane.f32.xlu0 %v839
    %v841 = vpop.xlane.xlu0 %840
    %v842 = vsel %vm173, %v825, 0.0
    %843 = vadd.xlane.f32.xlu0 %v842
    %v844 = vpop.xlane.xlu0 %843
    %v845 = vsel %vm173, %v827, 0.0
    %846 = vadd.xlane.f32.xlu0 %v845
    %v847 = vpop.xlane.xlu0 %846
    %v848 = vsel %vm173, %v829, 0.0
    %849 = vadd.xlane.f32.xlu0 %v848
    %v850 = vpop.xlane.xlu0 %849
    %v851 = vsel %vm173, %v831, 0.0
    %852 = vadd.xlane.f32.xlu0 %v851
    %v853 = vpop.xlane.xlu0 %852
    %v854 = vsel %vm173, %v833, 0.0
    %855 = vadd.xlane.f32.xlu0 %v854
    %v856 = vpop.xlane.xlu0 %855
    %v857 = vsel %vm173, %v835, 0.0
    %858 = vadd.xlane.f32.xlu0 %v857
    %v859 = vpop.xlane.xlu0 %858
    %v860 = vrcp.pop %v838
    %v861 = vmul.f32 %v821, %v860
    %v862 = vrcp.pop %v841
    %v863 = vmul.f32 %v823, %v862
    %v864 = vrcp.pop %v844
    %v865 = vmul.f32 %v825, %v864
    %v866 = vrcp.pop %v847
    %v867 = vmul.f32 %v827, %v866
    %v868 = vrcp.pop %v850
    %v869 = vmul.f32 %v829, %v868
    %v870 = vrcp.pop %v853
    %v871 = vmul.f32 %v831, %v870
    %v872 = vrcp.pop %v856
    %v873 = vmul.f32 %v833, %v872
    %v874 = vrcp.pop %v859
    %v875 = vmul.f32 %v835, %v874
    %876 = vrot.lane.b32.xlu0 %v135, 64
    %v877 = vpop.permute.xlu0 %876
    %v880 = vsel %vm173, %v861, 0
    %882 = vmatprep.subr.mxu0 0.0
    %883 = vmatpush1.msra.mxu0 %v877
    %884 = vmatprep.subr.mxu0 0.0
    %885 = vmatpush1.msra.mxu0 0.0
    %886 = vmatprep.subr.mxu0 0.0
    %887 = vmatpush1.msra.mxu0 0.0
    %888 = vmatprep.subr.mxu0 0.0
    %889 = vmatpush1.msra.mxu0 0.0
    %890 = vmatprep.subr.mxu0 0.0
    %891 = vmatpush1.msra.mxu0 0.0
    %892 = vmatprep.subr.mxu0 0.0
    %893 = vmatpush1.msra.mxu0 0.0
    %894 = vmatprep.subr.mxu0 0.0
    %895 = vmatpush1.msra.mxu0 0.0
    %896 = vmatprep.subr.mxu0 0.0
    %897 = vmatpush1.msra.mxu0 0.0
    %898 = vmatprep.subr.mxu0 0.0
    %899 = vmatpush1.msra.mxu0 0.0
    %900 = vmatprep.subr.mxu0 0.0
    %901 = vmatpush1.msra.mxu0 0.0
    %902 = vmatprep.subr.mxu0 0.0
    %903 = vmatpush1.msra.mxu0 0.0
    %904 = vmatprep.subr.mxu0 0.0
    %905 = vmatpush1.msra.mxu0 0.0
    %906 = vmatprep.subr.mxu0 0.0
    %907 = vmatpush1.msra.mxu0 0.0
    %908 = vmatprep.subr.mxu0 0.0
    %909 = vmatpush1.msra.mxu0 0.0
    %910 = vmatprep.subr.mxu0 0.0
    %911 = vmatpush1.msra.mxu0 0.0
    %912 = vmatprep.subr.mxu0 0.0
    %913 = vmatpush1.msra.mxu0 0.0
    %914 = vmatprep.subr.mxu0 0.0
    %915 = vmatpush1.msra.mxu0 0.0
    %916 = vmatprep.subr.mxu0 0.0
    %917 = vmatpush1.msra.mxu0 0.0
    %918 = vmatprep.subr.mxu0 0.0
    %919 = vmatpush1.msra.mxu0 0.0
    %920 = vmatprep.subr.mxu0 0.0
    %921 = vmatpush1.msra.mxu0 0.0
    %922 = vmatprep.subr.mxu0 0.0
    %923 = vmatpush1.msra.mxu0 0.0
    %924 = vmatprep.subr.mxu0 0.0
    %925 = vmatpush1.msra.mxu0 0.0
    %926 = vmatprep.subr.mxu0 0.0
    %927 = vmatpush1.msra.mxu0 0.0
    %928 = vmatprep.subr.mxu0 0.0
    %929 = vmatpush1.msra.mxu0 0.0
    %930 = vmatprep.subr.mxu0 0.0
    %931 = vmatpush1.msra.mxu0 0.0
    %932 = vmatprep.subr.mxu0 0.0
    %933 = vmatpush1.msra.mxu0 0.0
    %934 = vmatprep.subr.mxu0 0.0
    %935 = vmatpush1.msra.mxu0 0.0
    %936 = vmatprep.subr.mxu0 0.0
    %937 = vmatpush1.msra.mxu0 0.0
    %938 = vmatprep.subr.mxu0 0.0
    %939 = vmatpush1.msra.mxu0 0.0
    %940 = vmatprep.subr.mxu0 0.0
    %941 = vmatpush1.msra.mxu0 0.0
    %942 = vmatprep.subr.mxu0 0.0
    %943 = vmatpush1.msra.mxu0 0.0
    %944 = vmatprep.subr.mxu0 0.0
    %945 = vmatpush1.msra.mxu0 0.0
    %946 = vmatprep.mubr.f32.mxu0 0.0
    %947 = vmatmul.mubr.f32.gmra.mrb[0].mxu0 %v880
    %v948 = vpop.f32.mrb[0].mxu0
    %v949 = vadd.f32 0.0, %v948
    %v950 = vpop.f32.mrb[0].mxu0
    %951 = vdwg.mxu0
    %952 = vrot.lane.b32.xlu0 %v146, 64
    %v953 = vpop.permute.xlu0 %952
    %v956 = vsel %vm173, %v863, 0
    %958 = vmatprep.subr.mxu0 0.0
    %959 = vmatpush1.msra.mxu0 %v953
    %960 = vmatprep.subr.mxu0 0.0
    %961 = vmatpush1.msra.mxu0 0.0
    %962 = vmatprep.subr.mxu0 0.0
    %963 = vmatpush1.msra.mxu0 0.0
    %964 = vmatprep.subr.mxu0 0.0
    %965 = vmatpush1.msra.mxu0 0.0
    %966 = vmatprep.subr.mxu0 0.0
    %967 = vmatpush1.msra.mxu0 0.0
    %968 = vmatprep.subr.mxu0 0.0
    %969 = vmatpush1.msra.mxu0 0.0
    %970 = vmatprep.subr.mxu0 0.0
    %971 = vmatpush1.msra.mxu0 0.0
    %972 = vmatprep.subr.mxu0 0.0
    %973 = vmatpush1.msra.mxu0 0.0
    %974 = vmatprep.subr.mxu0 0.0
    %975 = vmatpush1.msra.mxu0 0.0
    %976 = vmatprep.subr.mxu0 0.0
    %977 = vmatpush1.msra.mxu0 0.0
    %978 = vmatprep.subr.mxu0 0.0
    %979 = vmatpush1.msra.mxu0 0.0
    %980 = vmatprep.subr.mxu0 0.0
    %981 = vmatpush1.msra.mxu0 0.0
    %982 = vmatprep.subr.mxu0 0.0
    %983 = vmatpush1.msra.mxu0 0.0
    %984 = vmatprep.subr.mxu0 0.0
    %985 = vmatpush1.msra.mxu0 0.0
    %986 = vmatprep.subr.mxu0 0.0
    %987 = vmatpush1.msra.mxu0 0.0
    %988 = vmatprep.subr.mxu0 0.0
    %989 = vmatpush1.msra.mxu0 0.0
    %990 = vmatprep.subr.mxu0 0.0
    %991 = vmatpush1.msra.mxu0 0.0
    %992 = vmatprep.subr.mxu0 0.0
    %993 = vmatpush1.msra.mxu0 0.0
    %994 = vmatprep.subr.mxu0 0.0
    %995 = vmatpush1.msra.mxu0 0.0
    %996 = vmatprep.subr.mxu0 0.0
    %997 = vmatpush1.msra.mxu0 0.0
    %998 = vmatprep.subr.mxu0 0.0
    %999 = vmatpush1.msra.mxu0 0.0
    %1000 = vmatprep.subr.mxu0 0.0
    %1001 = vmatpush1.msra.mxu0 0.0
    %1002 = vmatprep.subr.mxu0 0.0
    %1003 = vmatpush1.msra.mxu0 0.0
    %1004 = vmatprep.subr.mxu0 0.0
    %1005 = vmatpush1.msra.mxu0 0.0
    %1006 = vmatprep.subr.mxu0 0.0
    %1007 = vmatpush1.msra.mxu0 0.0
    %1008 = vmatprep.subr.mxu0 0.0
    %1009 = vmatpush1.msra.mxu0 0.0
    %1010 = vmatprep.subr.mxu0 0.0
    %1011 = vmatpush1.msra.mxu0 0.0
    %1012 = vmatprep.subr.mxu0 0.0
    %1013 = vmatpush1.msra.mxu0 0.0
    %1014 = vmatprep.subr.mxu0 0.0
    %1015 = vmatpush1.msra.mxu0 0.0
    %1016 = vmatprep.subr.mxu0 0.0
    %1017 = vmatpush1.msra.mxu0 0.0
    %1018 = vmatprep.subr.mxu0 0.0
    %1019 = vmatpush1.msra.mxu0 0.0
    %1020 = vmatprep.subr.mxu0 0.0
    %1021 = vmatpush1.msra.mxu0 0.0
    %1022 = vmatprep.mubr.f32.mxu0 0.0
    %1023 = vmatmul.mubr.f32.gmra.mrb[0].mxu0 %v956
    %v1024 = vpop.f32.mrb[0].mxu0
    %v1025 = vadd.f32 0.0, %v1024
    %v1026 = vpop.f32.mrb[0].mxu0
    %1027 = vdwg.mxu0
    %1028 = vrot.lane.b32.xlu0 %v152, 64
    %v1029 = vpop.permute.xlu0 %1028
    %v1032 = vsel %vm173, %v865, 0
    %1034 = vmatprep.subr.mxu0 0.0
    %1035 = vmatpush1.msra.mxu0 %v1029
    %1036 = vmatprep.subr.mxu0 0.0
    %1037 = vmatpush1.msra.mxu0 0.0
    %1038 = vmatprep.subr.mxu0 0.0
    %1039 = vmatpush1.msra.mxu0 0.0
    %1040 = vmatprep.subr.mxu0 0.0
    %1041 = vmatpush1.msra.mxu0 0.0
    %1042 = vmatprep.subr.mxu0 0.0
    %1043 = vmatpush1.msra.mxu0 0.0
    %1044 = vmatprep.subr.mxu0 0.0
    %1045 = vmatpush1.msra.mxu0 0.0
    %1046 = vmatprep.subr.mxu0 0.0
    %1047 = vmatpush1.msra.mxu0 0.0
    %1048 = vmatprep.subr.mxu0 0.0
    %1049 = vmatpush1.msra.mxu0 0.0
    %1050 = vmatprep.subr.mxu0 0.0
    %1051 = vmatpush1.msra.mxu0 0.0
    %1052 = vmatprep.subr.mxu0 0.0
    %1053 = vmatpush1.msra.mxu0 0.0
    %1054 = vmatprep.subr.mxu0 0.0
    %1055 = vmatpush1.msra.mxu0 0.0
    %1056 = vmatprep.subr.mxu0 0.0
    %1057 = vmatpush1.msra.mxu0 0.0
    %1058 = vmatprep.subr.mxu0 0.0
    %1059 = vmatpush1.msra.mxu0 0.0
    %1060 = vmatprep.subr.mxu0 0.0
    %1061 = vmatpush1.msra.mxu0 0.0
    %1062 = vmatprep.subr.mxu0 0.0
    %1063 = vmatpush1.msra.mxu0 0.0
    %1064 = vmatprep.subr.mxu0 0.0
    %1065 = vmatpush1.msra.mxu0 0.0
    %1066 = vmatprep.subr.mxu0 0.0
    %1067 = vmatpush1.msra.mxu0 0.0
    %1068 = vmatprep.subr.mxu0 0.0
    %1069 = vmatpush1.msra.mxu0 0.0
    %1070 = vmatprep.subr.mxu0 0.0
    %1071 = vmatpush1.msra.mxu0 0.0
    %1072 = vmatprep.subr.mxu0 0.0
    %1073 = vmatpush1.msra.mxu0 0.0
    %1074 = vmatprep.subr.mxu0 0.0
    %1075 = vmatpush1.msra.mxu0 0.0
    %1076 = vmatprep.subr.mxu0 0.0
    %1077 = vmatpush1.msra.mxu0 0.0
    %1078 = vmatprep.subr.mxu0 0.0
    %1079 = vmatpush1.msra.mxu0 0.0
    %1080 = vmatprep.subr.mxu0 0.0
    %1081 = vmatpush1.msra.mxu0 0.0
    %1082 = vmatprep.subr.mxu0 0.0
    %1083 = vmatpush1.msra.mxu0 0.0
    %1084 = vmatprep.subr.mxu0 0.0
    %1085 = vmatpush1.msra.mxu0 0.0
    %1086 = vmatprep.subr.mxu0 0.0
    %1087 = vmatpush1.msra.mxu0 0.0
    %1088 = vmatprep.subr.mxu0 0.0
    %1089 = vmatpush1.msra.mxu0 0.0
    %1090 = vmatprep.subr.mxu0 0.0
    %1091 = vmatpush1.msra.mxu0 0.0
    %1092 = vmatprep.subr.mxu0 0.0
    %1093 = vmatpush1.msra.mxu0 0.0
    %1094 = vmatprep.subr.mxu0 0.0
    %1095 = vmatpush1.msra.mxu0 0.0
    %1096 = vmatprep.subr.mxu0 0.0
    %1097 = vmatpush1.msra.mxu0 0.0
    %1098 = vmatprep.mubr.f32.mxu0 0.0
    %1099 = vmatmul.mubr.f32.gmra.mrb[0].mxu0 %v1032
    %v1100 = vpop.f32.mrb[0].mxu0
    %v1101 = vadd.f32 0.0, %v1100
    %v1102 = vpop.f32.mrb[0].mxu0
    %1103 = vdwg.mxu0
    %1104 = vrot.lane.b32.xlu0 %v158, 64
    %v1105 = vpop.permute.xlu0 %1104
    %v1108 = vsel %vm173, %v867, 0
    %1110 = vmatprep.subr.mxu0 0.0
    %1111 = vmatpush1.msra.mxu0 %v1105
    %1112 = vmatprep.subr.mxu0 0.0
    %1113 = vmatpush1.msra.mxu0 0.0
    %1114 = vmatprep.subr.mxu0 0.0
    %1115 = vmatpush1.msra.mxu0 0.0
    %1116 = vmatprep.subr.mxu0 0.0
    %1117 = vmatpush1.msra.mxu0 0.0
    %1118 = vmatprep.subr.mxu0 0.0
    %1119 = vmatpush1.msra.mxu0 0.0
    %1120 = vmatprep.subr.mxu0 0.0
    %1121 = vmatpush1.msra.mxu0 0.0
    %1122 = vmatprep.subr.mxu0 0.0
    %1123 = vmatpush1.msra.mxu0 0.0
    %1124 = vmatprep.subr.mxu0 0.0
    %1125 = vmatpush1.msra.mxu0 0.0
    %1126 = vmatprep.subr.mxu0 0.0
    %1127 = vmatpush1.msra.mxu0 0.0
    %1128 = vmatprep.subr.mxu0 0.0
    %1129 = vmatpush1.msra.mxu0 0.0
    %1130 = vmatprep.subr.mxu0 0.0
    %1131 = vmatpush1.msra.mxu0 0.0
    %1132 = vmatprep.subr.mxu0 0.0
    %1133 = vmatpush1.msra.mxu0 0.0
    %1134 = vmatprep.subr.mxu0 0.0
    %1135 = vmatpush1.msra.mxu0 0.0
    %1136 = vmatprep.subr.mxu0 0.0
    %1137 = vmatpush1.msra.mxu0 0.0
    %1138 = vmatprep.subr.mxu0 0.0
    %1139 = vmatpush1.msra.mxu0 0.0
    %1140 = vmatprep.subr.mxu0 0.0
    %1141 = vmatpush1.msra.mxu0 0.0
    %1142 = vmatprep.subr.mxu0 0.0
    %1143 = vmatpush1.msra.mxu0 0.0
    %1144 = vmatprep.subr.mxu0 0.0
    %1145 = vmatpush1.msra.mxu0 0.0
    %1146 = vmatprep.subr.mxu0 0.0
    %1147 = vmatpush1.msra.mxu0 0.0
    %1148 = vmatprep.subr.mxu0 0.0
    %1149 = vmatpush1.msra.mxu0 0.0
    %1150 = vmatprep.subr.mxu0 0.0
    %1151 = vmatpush1.msra.mxu0 0.0
    %1152 = vmatprep.subr.mxu0 0.0
    %1153 = vmatpush1.msra.mxu0 0.0
    %1154 = vmatprep.subr.mxu0 0.0
    %1155 = vmatpush1.msra.mxu0 0.0
    %1156 = vmatprep.subr.mxu0 0.0
    %1157 = vmatpush1.msra.mxu0 0.0
    %1158 = vmatprep.subr.mxu0 0.0
    %1159 = vmatpush1.msra.mxu0 0.0
    %1160 = vmatprep.subr.mxu0 0.0
    %1161 = vmatpush1.msra.mxu0 0.0
    %1162 = vmatprep.subr.mxu0 0.0
    %1163 = vmatpush1.msra.mxu0 0.0
    %1164 = vmatprep.subr.mxu0 0.0
    %1165 = vmatpush1.msra.mxu0 0.0
    %1166 = vmatprep.subr.mxu0 0.0
    %1167 = vmatpush1.msra.mxu0 0.0
    %1168 = vmatprep.subr.mxu0 0.0
    %1169 = vmatpush1.msra.mxu0 0.0
    %1170 = vmatprep.subr.mxu0 0.0
    %1171 = vmatpush1.msra.mxu0 0.0
    %1172 = vmatprep.subr.mxu0 0.0
    %1173 = vmatpush1.msra.mxu0 0.0
    %1174 = vmatprep.mubr.f32.mxu0 0.0
    %1175 = vmatmul.mubr.f32.gmra.mrb[0].mxu0 %v1108
    %v1176 = vpop.f32.mrb[0].mxu0
    %v1177 = vadd.f32 0.0, %v1176
    %v1178 = vpop.f32.mrb[0].mxu0
    %1179 = vdwg.mxu0
    %1180 = vrot.lane.b32.xlu0 %v140, 64
    %v1181 = vpop.permute.xlu0 %1180
    %v1184 = vsel %vm173, %v869, 0
    %1186 = vmatprep.subr.mxu0 0.0
    %1187 = vmatpush1.msra.mxu0 %v1181
    %1188 = vmatprep.subr.mxu0 0.0
    %1189 = vmatpush1.msra.mxu0 0.0
    %1190 = vmatprep.subr.mxu0 0.0
    %1191 = vmatpush1.msra.mxu0 0.0
    %1192 = vmatprep.subr.mxu0 0.0
    %1193 = vmatpush1.msra.mxu0 0.0
    %1194 = vmatprep.subr.mxu0 0.0
    %1195 = vmatpush1.msra.mxu0 0.0
    %1196 = vmatprep.subr.mxu0 0.0
    %1197 = vmatpush1.msra.mxu0 0.0
    %1198 = vmatprep.subr.mxu0 0.0
    %1199 = vmatpush1.msra.mxu0 0.0
    %1200 = vmatprep.subr.mxu0 0.0
    %1201 = vmatpush1.msra.mxu0 0.0
    %1202 = vmatprep.subr.mxu0 0.0
    %1203 = vmatpush1.msra.mxu0 0.0
    %1204 = vmatprep.subr.mxu0 0.0
    %1205 = vmatpush1.msra.mxu0 0.0
    %1206 = vmatprep.subr.mxu0 0.0
    %1207 = vmatpush1.msra.mxu0 0.0
    %1208 = vmatprep.subr.mxu0 0.0
    %1209 = vmatpush1.msra.mxu0 0.0
    %1210 = vmatprep.subr.mxu0 0.0
    %1211 = vmatpush1.msra.mxu0 0.0
    %1212 = vmatprep.subr.mxu0 0.0
    %1213 = vmatpush1.msra.mxu0 0.0
    %1214 = vmatprep.subr.mxu0 0.0
    %1215 = vmatpush1.msra.mxu0 0.0
    %1216 = vmatprep.subr.mxu0 0.0
    %1217 = vmatpush1.msra.mxu0 0.0
    %1218 = vmatprep.subr.mxu0 0.0
    %1219 = vmatpush1.msra.mxu0 0.0
    %1220 = vmatprep.subr.mxu0 0.0
    %1221 = vmatpush1.msra.mxu0 0.0
    %1222 = vmatprep.subr.mxu0 0.0
    %1223 = vmatpush1.msra.mxu0 0.0
    %1224 = vmatprep.subr.mxu0 0.0
    %1225 = vmatpush1.msra.mxu0 0.0
    %1226 = vmatprep.subr.mxu0 0.0
    %1227 = vmatpush1.msra.mxu0 0.0
    %1228 = vmatprep.subr.mxu0 0.0
    %1229 = vmatpush1.msra.mxu0 0.0
    %1230 = vmatprep.subr.mxu0 0.0
    %1231 = vmatpush1.msra.mxu0 0.0
    %1232 = vmatprep.subr.mxu0 0.0
    %1233 = vmatpush1.msra.mxu0 0.0
    %1234 = vmatprep.subr.mxu0 0.0
    %1235 = vmatpush1.msra.mxu0 0.0
    %1236 = vmatprep.subr.mxu0 0.0
    %1237 = vmatpush1.msra.mxu0 0.0
    %1238 = vmatprep.subr.mxu0 0.0
    %1239 = vmatpush1.msra.mxu0 0.0
    %1240 = vmatprep.subr.mxu0 0.0
    %1241 = vmatpush1.msra.mxu0 0.0
    %1242 = vmatprep.subr.mxu0 0.0
    %1243 = vmatpush1.msra.mxu0 0.0
    %1244 = vmatprep.subr.mxu0 0.0
    %1245 = vmatpush1.msra.mxu0 0.0
    %1246 = vmatprep.subr.mxu0 0.0
    %1247 = vmatpush1.msra.mxu0 0.0
    %1248 = vmatprep.subr.mxu0 0.0
    %1249 = vmatpush1.msra.mxu0 0.0
    %1250 = vmatprep.mubr.f32.mxu0 0.0
    %1251 = vmatmul.mubr.f32.gmra.mrb[0].mxu0 %v1184
    %v1252 = vpop.f32.mrb[0].mxu0
    %v1253 = vadd.f32 0.0, %v1252
    %v1254 = vpop.f32.mrb[0].mxu0
    %1255 = vdwg.mxu0
    %1256 = vrot.lane.b32.xlu0 %v148, 64
    %v1257 = vpop.permute.xlu0 %1256
    %v1260 = vsel %vm173, %v871, 0
    %1262 = vmatprep.subr.mxu0 0.0
    %1263 = vmatpush1.msra.mxu0 %v1257
    %1264 = vmatprep.subr.mxu0 0.0
    %1265 = vmatpush1.msra.mxu0 0.0
    %1266 = vmatprep.subr.mxu0 0.0
    %1267 = vmatpush1.msra.mxu0 0.0
    %1268 = vmatprep.subr.mxu0 0.0
    %1269 = vmatpush1.msra.mxu0 0.0
    %1270 = vmatprep.subr.mxu0 0.0
    %1271 = vmatpush1.msra.mxu0 0.0
    %1272 = vmatprep.subr.mxu0 0.0
    %1273 = vmatpush1.msra.mxu0 0.0
    %1274 = vmatprep.subr.mxu0 0.0
    %1275 = vmatpush1.msra.mxu0 0.0
    %1276 = vmatprep.subr.mxu0 0.0
    %1277 = vmatpush1.msra.mxu0 0.0
    %1278 = vmatprep.subr.mxu0 0.0
    %1279 = vmatpush1.msra.mxu0 0.0
    %1280 = vmatprep.subr.mxu0 0.0
    %1281 = vmatpush1.msra.mxu0 0.0
    %1282 = vmatprep.subr.mxu0 0.0
    %1283 = vmatpush1.msra.mxu0 0.0
    %1284 = vmatprep.subr.mxu0 0.0
    %1285 = vmatpush1.msra.mxu0 0.0
    %1286 = vmatprep.subr.mxu0 0.0
    %1287 = vmatpush1.msra.mxu0 0.0
    %1288 = vmatprep.subr.mxu0 0.0
    %1289 = vmatpush1.msra.mxu0 0.0
    %1290 = vmatprep.subr.mxu0 0.0
    %1291 = vmatpush1.msra.mxu0 0.0
    %1292 = vmatprep.subr.mxu0 0.0
    %1293 = vmatpush1.msra.mxu0 0.0
    %1294 = vmatprep.subr.mxu0 0.0
    %1295 = vmatpush1.msra.mxu0 0.0
    %1296 = vmatprep.subr.mxu0 0.0
    %1297 = vmatpush1.msra.mxu0 0.0
    %1298 = vmatprep.subr.mxu0 0.0
    %1299 = vmatpush1.msra.mxu0 0.0
    %1300 = vmatprep.subr.mxu0 0.0
    %1301 = vmatpush1.msra.mxu0 0.0
    %1302 = vmatprep.subr.mxu0 0.0
    %1303 = vmatpush1.msra.mxu0 0.0
    %1304 = vmatprep.subr.mxu0 0.0
    %1305 = vmatpush1.msra.mxu0 0.0
    %1306 = vmatprep.subr.mxu0 0.0
    %1307 = vmatpush1.msra.mxu0 0.0
    %1308 = vmatprep.subr.mxu0 0.0
    %1309 = vmatpush1.msra.mxu0 0.0
    %1310 = vmatprep.subr.mxu0 0.0
    %1311 = vmatpush1.msra.mxu0 0.0
    %1312 = vmatprep.subr.mxu0 0.0
    %1313 = vmatpush1.msra.mxu0 0.0
    %1314 = vmatprep.subr.mxu0 0.0
    %1315 = vmatpush1.msra.mxu0 0.0
    %1316 = vmatprep.subr.mxu0 0.0
    %1317 = vmatpush1.msra.mxu0 0.0
    %1318 = vmatprep.subr.mxu0 0.0
    %1319 = vmatpush1.msra.mxu0 0.0
    %1320 = vmatprep.subr.mxu0 0.0
    %1321 = vmatpush1.msra.mxu0 0.0
    %1322 = vmatprep.subr.mxu0 0.0
    %1323 = vmatpush1.msra.mxu0 0.0
    %1324 = vmatprep.subr.mxu0 0.0
    %1325 = vmatpush1.msra.mxu0 0.0
    %1326 = vmatprep.mubr.f32.mxu0 0.0
    %1327 = vmatmul.mubr.f32.gmra.mrb[0].mxu0 %v1260
    %v1328 = vpop.f32.mrb[0].mxu0
    %v1329 = vadd.f32 0.0, %v1328
    %v1330 = vpop.f32.mrb[0].mxu0
    %1331 = vdwg.mxu0
    %1332 = vrot.lane.b32.xlu0 %v154, 64
    %v1333 = vpop.permute.xlu0 %1332
    %v1336 = vsel %vm173, %v873, 0
    %1338 = vmatprep.subr.mxu0 0.0
    %1339 = vmatpush1.msra.mxu0 %v1333
    %1340 = vmatprep.subr.mxu0 0.0
    %1341 = vmatpush1.msra.mxu0 0.0
    %1342 = vmatprep.subr.mxu0 0.0
    %1343 = vmatpush1.msra.mxu0 0.0
    %1344 = vmatprep.subr.mxu0 0.0
    %1345 = vmatpush1.msra.mxu0 0.0
    %1346 = vmatprep.subr.mxu0 0.0
    %1347 = vmatpush1.msra.mxu0 0.0
    %1348 = vmatprep.subr.mxu0 0.0
    %1349 = vmatpush1.msra.mxu0 0.0
    %1350 = vmatprep.subr.mxu0 0.0
    %1351 = vmatpush1.msra.mxu0 0.0
    %1352 = vmatprep.subr.mxu0 0.0
    %1353 = vmatpush1.msra.mxu0 0.0
    %1354 = vmatprep.subr.mxu0 0.0
    %1355 = vmatpush1.msra.mxu0 0.0
    %1356 = vmatprep.subr.mxu0 0.0
    %1357 = vmatpush1.msra.mxu0 0.0
    %1358 = vmatprep.subr.mxu0 0.0
    %1359 = vmatpush1.msra.mxu0 0.0
    %1360 = vmatprep.subr.mxu0 0.0
    %1361 = vmatpush1.msra.mxu0 0.0
    %1362 = vmatprep.subr.mxu0 0.0
    %1363 = vmatpush1.msra.mxu0 0.0
    %1364 = vmatprep.subr.mxu0 0.0
    %1365 = vmatpush1.msra.mxu0 0.0
    %1366 = vmatprep.subr.mxu0 0.0
    %1367 = vmatpush1.msra.mxu0 0.0
    %1368 = vmatprep.subr.mxu0 0.0
    %1369 = vmatpush1.msra.mxu0 0.0
    %1370 = vmatprep.subr.mxu0 0.0
    %1371 = vmatpush1.msra.mxu0 0.0
    %1372 = vmatprep.subr.mxu0 0.0
    %1373 = vmatpush1.msra.mxu0 0.0
    %1374 = vmatprep.subr.mxu0 0.0
    %1375 = vmatpush1.msra.mxu0 0.0
    %1376 = vmatprep.subr.mxu0 0.0
    %1377 = vmatpush1.msra.mxu0 0.0
    %1378 = vmatprep.subr.mxu0 0.0
    %1379 = vmatpush1.msra.mxu0 0.0
    %1380 = vmatprep.subr.mxu0 0.0
    %1381 = vmatpush1.msra.mxu0 0.0
    %1382 = vmatprep.subr.mxu0 0.0
    %1383 = vmatpush1.msra.mxu0 0.0
    %1384 = vmatprep.subr.mxu0 0.0
    %1385 = vmatpush1.msra.mxu0 0.0
    %1386 = vmatprep.subr.mxu0 0.0
    %1387 = vmatpush1.msra.mxu0 0.0
    %1388 = vmatprep.subr.mxu0 0.0
    %1389 = vmatpush1.msra.mxu0 0.0
    %1390 = vmatprep.subr.mxu0 0.0
    %1391 = vmatpush1.msra.mxu0 0.0
    %1392 = vmatprep.subr.mxu0 0.0
    %1393 = vmatpush1.msra.mxu0 0.0
    %1394 = vmatprep.subr.mxu0 0.0
    %1395 = vmatpush1.msra.mxu0 0.0
    %1396 = vmatprep.subr.mxu0 0.0
    %1397 = vmatpush1.msra.mxu0 0.0
    %1398 = vmatprep.subr.mxu0 0.0
    %1399 = vmatpush1.msra.mxu0 0.0
    %1400 = vmatprep.subr.mxu0 0.0
    %1401 = vmatpush1.msra.mxu0 0.0
    %1402 = vmatprep.mubr.f32.mxu0 0.0
    %1403 = vmatmul.mubr.f32.gmra.mrb[0].mxu0 %v1336
    %v1404 = vpop.f32.mrb[0].mxu0
    %v1405 = vadd.f32 0.0, %v1404
    %v1406 = vpop.f32.mrb[0].mxu0
    %1407 = vdwg.mxu0
    %1408 = vrot.lane.b32.xlu0 %v160, 64
    %v1409 = vpop.permute.xlu0 %1408
    %v1412 = vsel %vm173, %v875, 0
    %1414 = vmatprep.subr.mxu0 0.0
    %1415 = vmatpush1.msra.mxu0 %v1409
    %1416 = vmatprep.subr.mxu0 0.0
    %1417 = vmatpush1.msra.mxu0 0.0
    %1418 = vmatprep.subr.mxu0 0.0
    %1419 = vmatpush1.msra.mxu0 0.0
    %1420 = vmatprep.subr.mxu0 0.0
    %1421 = vmatpush1.msra.mxu0 0.0
    %1422 = vmatprep.subr.mxu0 0.0
    %1423 = vmatpush1.msra.mxu0 0.0
    %1424 = vmatprep.subr.mxu0 0.0
    %1425 = vmatpush1.msra.mxu0 0.0
    %1426 = vmatprep.subr.mxu0 0.0
    %1427 = vmatpush1.msra.mxu0 0.0
    %1428 = vmatprep.subr.mxu0 0.0
    %1429 = vmatpush1.msra.mxu0 0.0
    %1430 = vmatprep.subr.mxu0 0.0
    %1431 = vmatpush1.msra.mxu0 0.0
    %1432 = vmatprep.subr.mxu0 0.0
    %1433 = vmatpush1.msra.mxu0 0.0
    %1434 = vmatprep.subr.mxu0 0.0
    %1435 = vmatpush1.msra.mxu0 0.0
    %1436 = vmatprep.subr.mxu0 0.0
    %1437 = vmatpush1.msra.mxu0 0.0
    %1438 = vmatprep.subr.mxu0 0.0
    %1439 = vmatpush1.msra.mxu0 0.0
    %1440 = vmatprep.subr.mxu0 0.0
    %1441 = vmatpush1.msra.mxu0 0.0
    %1442 = vmatprep.subr.mxu0 0.0
    %1443 = vmatpush1.msra.mxu0 0.0
    %1444 = vmatprep.subr.mxu0 0.0
    %1445 = vmatpush1.msra.mxu0 0.0
    %1446 = vmatprep.subr.mxu0 0.0
    %1447 = vmatpush1.msra.mxu0 0.0
    %1448 = vmatprep.subr.mxu0 0.0
    %1449 = vmatpush1.msra.mxu0 0.0
    %1450 = vmatprep.subr.mxu0 0.0
    %1451 = vmatpush1.msra.mxu0 0.0
    %1452 = vmatprep.subr.mxu0 0.0
    %1453 = vmatpush1.msra.mxu0 0.0
    %1454 = vmatprep.subr.mxu0 0.0
    %1455 = vmatpush1.msra.mxu0 0.0
    %1456 = vmatprep.subr.mxu0 0.0
    %1457 = vmatpush1.msra.mxu0 0.0
    %1458 = vmatprep.subr.mxu0 0.0
    %1459 = vmatpush1.msra.mxu0 0.0
    %1460 = vmatprep.subr.mxu0 0.0
    %1461 = vmatpush1.msra.mxu0 0.0
    %1462 = vmatprep.subr.mxu0 0.0
    %1463 = vmatpush1.msra.mxu0 0.0
    %1464 = vmatprep.subr.mxu0 0.0
    %1465 = vmatpush1.msra.mxu0 0.0
    %1466 = vmatprep.subr.mxu0 0.0
    %1467 = vmatpush1.msra.mxu0 0.0
    %1468 = vmatprep.subr.mxu0 0.0
    %1469 = vmatpush1.msra.mxu0 0.0
    %1470 = vmatprep.subr.mxu0 0.0
    %1471 = vmatpush1.msra.mxu0 0.0
    %1472 = vmatprep.subr.mxu0 0.0
    %1473 = vmatpush1.msra.mxu0 0.0
    %1474 = vmatprep.subr.mxu0 0.0
    %1475 = vmatpush1.msra.mxu0 0.0
    %1476 = vmatprep.subr.mxu0 0.0
    %1477 = vmatpush1.msra.mxu0 0.0
    %1478 = vmatprep.mubr.f32.mxu0 0.0
    %1479 = vmatmul.mubr.f32.gmra.mrb[0].mxu0 %v1412
    %v1480 = vpop.f32.mrb[0].mxu0
    %v1481 = vadd.f32 0.0, %v1480
    %v1482 = vpop.f32.mrb[0].mxu0
    %1483 = vdwg.mxu0
    %1486 = vrot.lane.b32.xlu0 %v1025, 8
    %v1487 = vpop.permute.xlu0 %1486
    %1488 = vrot.lane.b32.xlu0 %v1329, 8
    %v1489 = vpop.permute.xlu0 %1488
    %1494 = vrot.lane.b32.xlu0 %v1101, 16
    %v1495 = vpop.permute.xlu0 %1494
    %1496 = vrot.lane.b32.xlu0 %v1405, 16
    %v1497 = vpop.permute.xlu0 %1496
    %1502 = vrot.lane.b32.xlu0 %v1177, 24
    %v1503 = vpop.permute.xlu0 %1502
    %1504 = vrot.lane.b32.xlu0 %v1481, 24
    %v1505 = vpop.permute.xlu0 %1504
    %v1508 = vsel %vm173, %v949, %v1487
    %v1509 = vsel %vm173, %v1253, %v1489
    %vm1510 = vcmask 130048
    %v1511 = vsel %vm1510, %v1508, %v1495
    %v1512 = vsel %vm1510, %v1509, %v1497
    %vm1513 = vcmask 195584
    %v1514 = vsel %vm1513, %v1511, %v1503
    %v1515 = vsel %vm1513, %v1512, %v1505
    %v1516 = vld [vmem:[%s3] sm:$0xff]
    %v1517 = vld [vmem:[%s3 + $0x8] sm:$0xff]
    %v1518 = vld [vmem:[%s3 + $0x10] sm:$0xff]
    %v1519 = vld [vmem:[%s3 + $0x18] sm:$0xff]
    %v1520 = vld [vmem:[%s4] sm:$0x1]
    %v1522 = vlaneseq
    %v1523 = vshrl.u32 %v1522, 7
    %v1524 = vsub.s32 0, %v1523
    %v1525 = vrot.slane %v1520, %v1524
    %v1528 = vsel %vm61, %v1514, 0
    %v1531 = vsel %vm61, %v1515, 0
    %1533 = vmatprep.subr.mxu0 0.0
    %1534 = vmatpush1.msra.mxu0 %v1516
    %1535 = vmatprep.subr.mxu0 0.0
    %1536 = vmatpush1.msra.mxu0 %v1517
    %1537 = vmatprep.subr.mxu0 0.0
    %1538 = vmatpush1.msra.mxu0 %v1518
    %1539 = vmatprep.subr.mxu0 0.0
    %1540 = vmatpush1.msra.mxu0 %v1519
    %1541 = vmatprep.subr.mxu0 0.0
    %1542 = vmatpush1.msra.mxu0 0.0
    %1543 = vmatprep.subr.mxu0 0.0
    %1544 = vmatpush1.msra.mxu0 0.0
    %1545 = vmatprep.subr.mxu0 0.0
    %1546 = vmatpush1.msra.mxu0 0.0
    %1547 = vmatprep.subr.mxu0 0.0
    %1548 = vmatpush1.msra.mxu0 0.0
    %1549 = vmatprep.subr.mxu0 0.0
    %1550 = vmatpush1.msra.mxu0 0.0
    %1551 = vmatprep.subr.mxu0 0.0
    %1552 = vmatpush1.msra.mxu0 0.0
    %1553 = vmatprep.subr.mxu0 0.0
    %1554 = vmatpush1.msra.mxu0 0.0
    %1555 = vmatprep.subr.mxu0 0.0
    %1556 = vmatpush1.msra.mxu0 0.0
    %1557 = vmatprep.subr.mxu0 0.0
    %1558 = vmatpush1.msra.mxu0 0.0
    %1559 = vmatprep.subr.mxu0 0.0
    %1560 = vmatpush1.msra.mxu0 0.0
    %1561 = vmatprep.subr.mxu0 0.0
    %1562 = vmatpush1.msra.mxu0 0.0
    %1563 = vmatprep.subr.mxu0 0.0
    %1564 = vmatpush1.msra.mxu0 0.0
    %1565 = vmatprep.subr.mxu0 0.0
    %1566 = vmatpush1.msra.mxu0 0.0
    %1567 = vmatprep.subr.mxu0 0.0
    %1568 = vmatpush1.msra.mxu0 0.0
    %1569 = vmatprep.subr.mxu0 0.0
    %1570 = vmatpush1.msra.mxu0 0.0
    %1571 = vmatprep.subr.mxu0 0.0
    %1572 = vmatpush1.msra.mxu0 0.0
    %1573 = vmatprep.subr.mxu0 0.0
    %1574 = vmatpush1.msra.mxu0 0.0
    %1575 = vmatprep.subr.mxu0 0.0
    %1576 = vmatpush1.msra.mxu0 0.0
    %1577 = vmatprep.subr.mxu0 0.0
    %1578 = vmatpush1.msra.mxu0 0.0
    %1579 = vmatprep.subr.mxu0 0.0
    %1580 = vmatpush1.msra.mxu0 0.0
    %1581 = vmatprep.subr.mxu0 0.0
    %1582 = vmatpush1.msra.mxu0 0.0
    %1583 = vmatprep.subr.mxu0 0.0
    %1584 = vmatpush1.msra.mxu0 0.0
    %1585 = vmatprep.subr.mxu0 0.0
    %1586 = vmatpush1.msra.mxu0 0.0
    %1587 = vmatprep.subr.mxu0 0.0
    %1588 = vmatpush1.msra.mxu0 0.0
    %1589 = vmatprep.subr.mxu0 0.0
    %1590 = vmatpush1.msra.mxu0 0.0
    %1591 = vmatprep.subr.mxu0 0.0
    %1592 = vmatpush1.msra.mxu0 0.0
    %1593 = vmatprep.subr.mxu0 0.0
    %1594 = vmatpush1.msra.mxu0 0.0
    %1595 = vmatprep.subr.mxu0 0.0
    %1596 = vmatpush1.msra.mxu0 0.0
    %1597 = vmatprep.mubr.f32.mxu0 0.0
    %1598 = vmatmul.mubr.f32.gmra.mrb[0].mxu0 %v1528
    %v1599 = vpop.f32.mrb[0].mxu0
    %v1600 = vadd.f32 %v1525, %v1599
    %v1601 = vpop.f32.mrb[0].mxu0
    %1602 = vmatprep.mubr.f32.mxu0 0.0
    %1603 = vmatmul.mubr.f32.gmra.mrb[0].mxu0 %v1531
    %v1604 = vpop.f32.mrb[0].mxu0
    %v1605 = vadd.f32 %v1525, %v1604
    %v1606 = vpop.f32.mrb[0].mxu0
    %1607 = vdwg.mxu0
    %v1608 = vadd.f32 %v48, %v1600
    %v1609 = vadd.f32 %v49, %v1605
    %v1610 = vsel %vm61, %v1608, 0.0
    %1611 = vadd.xlane.f32.xlu0 %v1610
    %v1612 = vpop.xlane.xlu0 %1611
    %v1613 = vsel %vm61, %v1609, 0.0
    %1614 = vadd.xlane.f32.xlu0 %v1613
    %v1615 = vpop.xlane.xlu0 %1614
    %v1616 = vrcp.pop 32.0
    %v1617 = vmul.f32 %v1612, %v1616
    %v1618 = vmul.f32 %v1615, %v1616
    %v1619 = vsub.f32 %v1608, %v1617
    %v1620 = vsub.f32 %v1609, %v1618
    %v1621 = vmul.f32 %v1619, %v1619
    %v1622 = vmul.f32 %v1620, %v1620
    %v1623 = vsel %vm61, %v1621, 0.0
    %1624 = vadd.xlane.f32.xlu0 %v1623
    %v1625 = vpop.xlane.xlu0 %1624
    %v1626 = vsel %vm61, %v1622, 0.0
    %1627 = vadd.xlane.f32.xlu0 %v1626
    %v1628 = vpop.xlane.xlu0 %1627
    %v1629 = vmul.f32 %v1625, %v1616
    %v1630 = vmul.f32 %v1628, %v1616
    %v1631 = vadd.f32 %v1629, 1e-05
    %v1632 = vadd.f32 %v1630, 1e-05
    %v1633 = vrsqrt.pop %v1631
    %v1634 = vrsqrt.pop %v1632
    %v1635 = vmul.f32 %v1619, %v1633
    %v1636 = vmul.f32 %v1620, %v1634
    %v1637 = vld [vmem:[%s5] sm:$0x1]
    %v1639 = vlaneseq
    %v1640 = vshrl.u32 %v1639, 7
    %v1641 = vsub.s32 0, %v1640
    %v1642 = vrot.slane %v1637, %v1641
    %v1644 = vmul.f32 %v1635, %v1642
    %v1645 = vmul.f32 %v1636, %v1642
    %v1646 = vld [vmem:[%s6] sm:$0x1]
    %v1648 = vlaneseq
    %v1649 = vshrl.u32 %v1648, 7
    %v1650 = vsub.s32 0, %v1649
    %v1651 = vrot.slane %v1646, %v1650
    %v1653 = vadd.f32 %v1644, %v1651
    %v1654 = vadd.f32 %v1645, %v1651
    %v1655 = vld [vmem:[%s7] sm:$0xff]
    %v1656 = vld [vmem:[%s7 + $0x8] sm:$0xff]
    %v1657 = vld [vmem:[%s7 + $0x10] sm:$0xff]
    %v1658 = vld [vmem:[%s7 + $0x18] sm:$0xff]
    %v1659 = vld [vmem:[%s8] sm:$0x1]
    %v1661 = vlaneseq
    %v1662 = vshrl.u32 %v1661, 7
    %v1663 = vsub.s32 0, %v1662
    %v1664 = vrot.slane %v1659, %v1663
    %v1667 = vsel %vm61, %v1653, 0
    %v1670 = vsel %vm61, %v1654, 0
    %1672 = vmatprep.subr.mxu0 0.0
    %1673 = vmatpush1.msra.mxu0 %v1655
    %1674 = vmatprep.subr.mxu0 0.0
    %1675 = vmatpush1.msra.mxu0 %v1656
    %1676 = vmatprep.subr.mxu0 0.0
    %1677 = vmatpush1.msra.mxu0 %v1657
    %1678 = vmatprep.subr.mxu0 0.0
    %1679 = vmatpush1.msra.mxu0 %v1658
    %1680 = vmatprep.subr.mxu0 0.0
    %1681 = vmatpush1.msra.mxu0 0.0
    %1682 = vmatprep.subr.mxu0 0.0
    %1683 = vmatpush1.msra.mxu0 0.0
    %1684 = vmatprep.subr.mxu0 0.0
    %1685 = vmatpush1.msra.mxu0 0.0
    %1686 = vmatprep.subr.mxu0 0.0
    %1687 = vmatpush1.msra.mxu0 0.0
    %1688 = vmatprep.subr.mxu0 0.0
    %1689 = vmatpush1.msra.mxu0 0.0
    %1690 = vmatprep.subr.mxu0 0.0
    %1691 = vmatpush1.msra.mxu0 0.0
    %1692 = vmatprep.subr.mxu0 0.0
    %1693 = vmatpush1.msra.mxu0 0.0
    %1694 = vmatprep.subr.mxu0 0.0
    %1695 = vmatpush1.msra.mxu0 0.0
    %1696 = vmatprep.subr.mxu0 0.0
    %1697 = vmatpush1.msra.mxu0 0.0
    %1698 = vmatprep.subr.mxu0 0.0
    %1699 = vmatpush1.msra.mxu0 0.0
    %1700 = vmatprep.subr.mxu0 0.0
    %1701 = vmatpush1.msra.mxu0 0.0
    %1702 = vmatprep.subr.mxu0 0.0
    %1703 = vmatpush1.msra.mxu0 0.0
    %1704 = vmatprep.subr.mxu0 0.0
    %1705 = vmatpush1.msra.mxu0 0.0
    %1706 = vmatprep.subr.mxu0 0.0
    %1707 = vmatpush1.msra.mxu0 0.0
    %1708 = vmatprep.subr.mxu0 0.0
    %1709 = vmatpush1.msra.mxu0 0.0
    %1710 = vmatprep.subr.mxu0 0.0
    %1711 = vmatpush1.msra.mxu0 0.0
    %1712 = vmatprep.subr.mxu0 0.0
    %1713 = vmatpush1.msra.mxu0 0.0
    %1714 = vmatprep.subr.mxu0 0.0
    %1715 = vmatpush1.msra.mxu0 0.0
    %1716 = vmatprep.subr.mxu0 0.0
    %1717 = vmatpush1.msra.mxu0 0.0
    %1718 = vmatprep.subr.mxu0 0.0
    %1719 = vmatpush1.msra.mxu0 0.0
    %1720 = vmatprep.subr.mxu0 0.0
    %1721 = vmatpush1.msra.mxu0 0.0
    %1722 = vmatprep.subr.mxu0 0.0
    %1723 = vmatpush1.msra.mxu0 0.0
    %1724 = vmatprep.subr.mxu0 0.0
    %1725 = vmatpush1.msra.mxu0 0.0
    %1726 = vmatprep.subr.mxu0 0.0
    %1727 = vmatpush1.msra.mxu0 0.0
    %1728 = vmatprep.subr.mxu0 0.0
    %1729 = vmatpush1.msra.mxu0 0.0
    %1730 = vmatprep.subr.mxu0 0.0
    %1731 = vmatpush1.msra.mxu0 0.0
    %1732 = vmatprep.subr.mxu0 0.0
    %1733 = vmatpush1.msra.mxu0 0.0
    %1734 = vmatprep.subr.mxu0 0.0
    %1735 = vmatpush1.msra.mxu0 0.0
    %1736 = vmatprep.mubr.f32.mxu0 0.0
    %1737 = vmatmul.mubr.f32.gmra.mrb[0].mxu0 %v1667
    %v1738 = vpop.f32.mrb[0].mxu0
    %v1739 = vadd.f32 %v1664, %v1738
    %v1740 = vpop.f32.mrb[0].mxu0
    %1741 = vmatprep.mubr.f32.mxu0 0.0
    %1742 = vmatmul.mubr.f32.gmra.mrb[0].mxu0 %v1670
    %v1743 = vpop.f32.mrb[0].mxu0
    %v1744 = vadd.f32 %v1664, %v1743
    %v1745 = vpop.f32.mrb[0].mxu0
    %1746 = vdwg.mxu0
    %v1747 = vmax.f32 %v1739, 0.0
    %v1748 = vmax.f32 %v1744, 0.0
    %v1749 = vld [vmem:[%s9] sm:$0xff]
    %v1750 = vld [vmem:[%s9 + $0x8] sm:$0xff]
    %v1751 = vld [vmem:[%s9 + $0x10] sm:$0xff]
    %v1752 = vld [vmem:[%s9 + $0x18] sm:$0xff]
    %v1753 = vld [vmem:[%s9 + $0x20] sm:$0xff]
    %v1754 = vld [vmem:[%s9 + $0x28] sm:$0xff]
    %v1755 = vld [vmem:[%s9 + $0x30] sm:$0xff]
    %v1756 = vld [vmem:[%s9 + $0x38] sm:$0xff]
    %vm1757 = vcmask 523264
    %v1759 = vsel %vm1757, %v1747, 0
    %v1762 = vsel %vm1757, %v1748, 0
    %1764 = vmatprep.subr.mxu0 0.0
    %1765 = vmatpush1.msra.mxu0 %v1749
    %1766 = vmatprep.subr.mxu0 0.0
    %1767 = vmatpush1.msra.mxu0 %v1750
    %1768 = vmatprep.subr.mxu0 0.0
    %1769 = vmatpush1.msra.mxu0 %v1751
    %1770 = vmatprep.subr.mxu0 0.0
    %1771 = vmatpush1.msra.mxu0 %v1752
    %1772 = vmatprep.subr.mxu0 0.0
    %1773 = vmatpush1.msra.mxu0 %v1753
    %1774 = vmatprep.subr.mxu0 0.0
    %1775 = vmatpush1.msra.mxu0 %v1754
    %1776 = vmatprep.subr.mxu0 0.0
    %1777 = vmatpush1.msra.mxu0 %v1755
    %1778 = vmatprep.subr.mxu0 0.0
    %1779 = vmatpush1.msra.mxu0 %v1756
    %1780 = vmatprep.subr.mxu0 0.0
    %1781 = vmatpush1.msra.mxu0 0.0
    %1782 = vmatprep.subr.mxu0 0.0
    %1783 = vmatpush1.msra.mxu0 0.0
    %1784 = vmatprep.subr.mxu0 0.0
    %1785 = vmatpush1.msra.mxu0 0.0
    %1786 = vmatprep.subr.mxu0 0.0
    %1787 = vmatpush1.msra.mxu0 0.0
    %1788 = vmatprep.subr.mxu0 0.0
    %1789 = vmatpush1.msra.mxu0 0.0
    %1790 = vmatprep.subr.mxu0 0.0
    %1791 = vmatpush1.msra.mxu0 0.0
    %1792 = vmatprep.subr.mxu0 0.0
    %1793 = vmatpush1.msra.mxu0 0.0
    %1794 = vmatprep.subr.mxu0 0.0
    %1795 = vmatpush1.msra.mxu0 0.0
    %1796 = vmatprep.subr.mxu0 0.0
    %1797 = vmatpush1.msra.mxu0 0.0
    %1798 = vmatprep.subr.mxu0 0.0
    %1799 = vmatpush1.msra.mxu0 0.0
    %1800 = vmatprep.subr.mxu0 0.0
    %1801 = vmatpush1.msra.mxu0 0.0
    %1802 = vmatprep.subr.mxu0 0.0
    %1803 = vmatpush1.msra.mxu0 0.0
    %1804 = vmatprep.subr.mxu0 0.0
    %1805 = vmatpush1.msra.mxu0 0.0
    %1806 = vmatprep.subr.mxu0 0.0
    %1807 = vmatpush1.msra.mxu0 0.0
    %1808 = vmatprep.subr.mxu0 0.0
    %1809 = vmatpush1.msra.mxu0 0.0
    %1810 = vmatprep.subr.mxu0 0.0
    %1811 = vmatpush1.msra.mxu0 0.0
    %1812 = vmatprep.subr.mxu0 0.0
    %1813 = vmatpush1.msra.mxu0 0.0
    %1814 = vmatprep.subr.mxu0 0.0
    %1815 = vmatpush1.msra.mxu0 0.0
    %1816 = vmatprep.subr.mxu0 0.0
    %1817 = vmatpush1.msra.mxu0 0.0
    %1818 = vmatprep.subr.mxu0 0.0
    %1819 = vmatpush1.msra.mxu0 0.0
    %1820 = vmatprep.subr.mxu0 0.0
    %1821 = vmatpush1.msra.mxu0 0.0
    %1822 = vmatprep.subr.mxu0 0.0
    %1823 = vmatpush1.msra.mxu0 0.0
    %1824 = vmatprep.subr.mxu0 0.0
    %1825 = vmatpush1.msra.mxu0 0.0
    %1826 = vmatprep.subr.mxu0 0.0
    %1827 = vmatpush1.msra.mxu0 0.0
    %1828 = vmatprep.mubr.f32.mxu0 0.0
    %1829 = vmatmul.mubr.f32.gmra.mrb[0].mxu0 %v1759
    %v1830 = vpop.f32.mrb[0].mxu0
    %v1831 = vadd.f32 0.0, %v1830
    %v1832 = vpop.f32.mrb[0].mxu0
    %1833 = vmatprep.mubr.f32.mxu0 0.0
    %1834 = vmatmul.mubr.f32.gmra.mrb[0].mxu0 %v1762
    %v1835 = vpop.f32.mrb[0].mxu0
    %v1836 = vadd.f32 0.0, %v1835
    %v1837 = vpop.f32.mrb[0].mxu0
    %1838 = vdwg.mxu0
    %1839 = vxpose.xlu0.b32.start [1/16] %v1831, 128
    %1840 = vxpose.xlu0.b32.cont [2/16] 0.0, 128
    %1841 = vxpose.xlu0.b32.cont [3/16] 0.0, 128
    %1842 = vxpose.xlu0.b32.cont [4/16] 0.0, 128
    %1843 = vxpose.xlu0.b32.cont [5/16] 0.0, 128
    %1844 = vxpose.xlu0.b32.cont [6/16] 0.0, 128
    %1845 = vxpose.xlu0.b32.cont [7/16] 0.0, 128
    %1846 = vxpose.xlu0.b32.cont [8/16] 0.0, 128
    %1847 = vxpose.xlu0.b32.cont [9/16] 0.0, 128
    %1848 = vxpose.xlu0.b32.cont [10/16] 0.0, 128
    %1849 = vxpose.xlu0.b32.cont [11/16] 0.0, 128
    %1850 = vxpose.xlu0.b32.cont [12/16] 0.0, 128
    %1851 = vxpose.xlu0.b32.cont [13/16] 0.0, 128
    %1852 = vxpose.xlu0.b32.cont [14/16] 0.0, 128
    %1853 = vxpose.xlu0.b32.cont [15/16] 0.0, 128
    %1854 = vxpose.xlu0.b32.end [16/16] 0.0, 128
    %v1855 = vpop.trf.xlu0
    %v1856 = vpop.trf.xlu0
    %v1857 = vpop.trf.xlu0
    %v1858 = vpop.trf.xlu0
    %v1859 = vpop.trf.xlu0
    %v1860 = vpop.trf.xlu0
    %v1861 = vpop.trf.xlu0
    %v1862 = vpop.trf.xlu0
    %v1863 = vpop.trf.xlu0
    %v1864 = vpop.trf.xlu0
    %v1865 = vpop.trf.xlu0
    %v1866 = vpop.trf.xlu0
    %v1867 = vpop.trf.xlu0
    %v1868 = vpop.trf.xlu0
    %v1869 = vpop.trf.xlu0
    %v1870 = vpop.trf.xlu0
    %1871 = vxpose.xlu0.b32.start [1/16] %v1836, 128
    %1872 = vxpose.xlu0.b32.cont [2/16] 0.0, 128
    %1873 = vxpose.xlu0.b32.cont [3/16] 0.0, 128
    %1874 = vxpose.xlu0.b32.cont [4/16] 0.0, 128
    %1875 = vxpose.xlu0.b32.cont [5/16] 0.0, 128
    %1876 = vxpose.xlu0.b32.cont [6/16] 0.0, 128
    %1877 = vxpose.xlu0.b32.cont [7/16] 0.0, 128
    %1878 = vxpose.xlu0.b32.cont [8/16] 0.0, 128
    %1879 = vxpose.xlu0.b32.cont [9/16] 0.0, 128
    %1880 = vxpose.xlu0.b32.cont [10/16] 0.0, 128
    %1881 = vxpose.xlu0.b32.cont [11/16] 0.0, 128
    %1882 = vxpose.xlu0.b32.cont [12/16] 0.0, 128
    %1883 = vxpose.xlu0.b32.cont [13/16] 0.0, 128
    %1884 = vxpose.xlu0.b32.cont [14/16] 0.0, 128
    %1885 = vxpose.xlu0.b32.cont [15/16] 0.0, 128
    %1886 = vxpose.xlu0.b32.end [16/16] 0.0, 128
    %v1887 = vpop.trf.xlu0
    %v1888 = vpop.trf.xlu0
    %v1889 = vpop.trf.xlu0
    %v1890 = vpop.trf.xlu0
    %v1891 = vpop.trf.xlu0
    %v1892 = vpop.trf.xlu0
    %v1893 = vpop.trf.xlu0
    %v1894 = vpop.trf.xlu0
    %v1895 = vpop.trf.xlu0
    %v1896 = vpop.trf.xlu0
    %v1897 = vpop.trf.xlu0
    %v1898 = vpop.trf.xlu0
    %v1899 = vpop.trf.xlu0
    %v1900 = vpop.trf.xlu0
    %v1901 = vpop.trf.xlu0
    %v1902 = vpop.trf.xlu0
    %vm1903 = vcmask 60416
    %v1904 = vsel %vm1903, %v1855, -inf
    %1905 = vmax.xlane.f32.xlu0 %v1904
    %v1906 = vpop.xlane.xlu0 %1905
    %v1907 = vsel %vm1903, %v1887, -inf
    %1908 = vmax.xlane.f32.xlu0 %v1907
    %v1909 = vpop.xlane.xlu0 %1908
    %v1910 = vsub.f32 %v1855, %v1906
    %v1911 = vsub.f32 %v1887, %v1909
    %v1912 = vmul.f32 %v1910, 1.442695
    %v1913 = vpow.pop %v1912
    %v1914 = vmul.f32 %v1911, 1.442695
    %v1915 = vpow.pop %v1914
    %v1916 = vsel %vm1903, %v1913, 0.0
    %1917 = vadd.xlane.f32.xlu0 %v1916
    %v1918 = vpop.xlane.xlu0 %1917
    %v1919 = vsel %vm1903, %v1915, 0.0
    %1920 = vadd.xlane.f32.xlu0 %v1919
    %v1921 = vpop.xlane.xlu0 %1920
    %v1922 = vrcp.pop %v1918
    %v1923 = vmul.f32 %v1913, %v1922
    %v1924 = vrcp.pop %v1921
    %v1925 = vmul.f32 %v1915, %v1924
    %vm1926 = vcmask 31744
    %v1927 = vsel %vm1926, %v1831, -inf
    %1928 = vmax.xlane.f32.xlu0 %v1927
    %v1929 = vpop.xlane.xlu0 %1928
    %v1930 = vsel %vm1926, %v1836, -inf
    %1931 = vmax.xlane.f32.xlu0 %v1930
    %v1932 = vpop.xlane.xlu0 %1931
    %v1933 = vsub.f32 %v1831, %v1929
    %v1934 = vsub.f32 %v1836, %v1932
    %v1935 = vmul.f32 %v1933, 1.442695
    %v1936 = vpow.pop %v1935
    %v1937 = vmul.f32 %v1934, 1.442695
    %v1938 = vpow.pop %v1937
    %v1939 = vsel %vm1926, %v1936, 0.0
    %1940 = vadd.xlane.f32.xlu0 %v1939
    %v1941 = vpop.xlane.xlu0 %1940
    %v1942 = vsel %vm1926, %v1938, 0.0
    %1943 = vadd.xlane.f32.xlu0 %v1942
    %v1944 = vpop.xlane.xlu0 %1943
    %v1945 = vrcp.pop %v1941
    %v1946 = vmul.f32 %v1936, %v1945
    %v1947 = vrcp.pop %v1944
    %v1948 = vmul.f32 %v1938, %v1947
    %v1950 = vsel %vm173, %v1923, 0
    %1952 = vmatprep.subr.mxu0 0.0
    %1953 = vmatpush1.msra.mxu0 %v1747
    %1954 = vmatprep.subr.mxu0 0.0
    %1955 = vmatpush1.msra.mxu0 0.0
    %1956 = vmatprep.subr.mxu0 0.0
    %1957 = vmatpush1.msra.mxu0 0.0
    %1958 = vmatprep.subr.mxu0 0.0
    %1959 = vmatpush1.msra.mxu0 0.0
    %1960 = vmatprep.subr.mxu0 0.0
    %1961 = vmatpush1.msra.mxu0 0.0
    %1962 = vmatprep.subr.mxu0 0.0
    %1963 = vmatpush1.msra.mxu0 0.0
    %1964 = vmatprep.subr.mxu0 0.0
    %1965 = vmatpush1.msra.mxu0 0.0
    %1966 = vmatprep.subr.mxu0 0.0
    %1967 = vmatpush1.msra.mxu0 0.0
    %1968 = vmatprep.subr.mxu0 0.0
    %1969 = vmatpush1.msra.mxu0 0.0
    %1970 = vmatprep.subr.mxu0 0.0
    %1971 = vmatpush1.msra.mxu0 0.0
    %1972 = vmatprep.subr.mxu0 0.0
    %1973 = vmatpush1.msra.mxu0 0.0
    %1974 = vmatprep.subr.mxu0 0.0
    %1975 = vmatpush1.msra.mxu0 0.0
    %1976 = vmatprep.subr.mxu0 0.0
    %1977 = vmatpush1.msra.mxu0 0.0
    %1978 = vmatprep.subr.mxu0 0.0
    %1979 = vmatpush1.msra.mxu0 0.0
    %1980 = vmatprep.subr.mxu0 0.0
    %1981 = vmatpush1.msra.mxu0 0.0
    %1982 = vmatprep.subr.mxu0 0.0
    %1983 = vmatpush1.msra.mxu0 0.0
    %1984 = vmatprep.subr.mxu0 0.0
    %1985 = vmatpush1.msra.mxu0 0.0
    %1986 = vmatprep.subr.mxu0 0.0
    %1987 = vmatpush1.msra.mxu0 0.0
    %1988 = vmatprep.subr.mxu0 0.0
    %1989 = vmatpush1.msra.mxu0 0.0
    %1990 = vmatprep.subr.mxu0 0.0
    %1991 = vmatpush1.msra.mxu0 0.0
    %1992 = vmatprep.subr.mxu0 0.0
    %1993 = vmatpush1.msra.mxu0 0.0
    %1994 = vmatprep.subr.mxu0 0.0
    %1995 = vmatpush1.msra.mxu0 0.0
    %1996 = vmatprep.subr.mxu0 0.0
    %1997 = vmatpush1.msra.mxu0 0.0
    %1998 = vmatprep.subr.mxu0 0.0
    %1999 = vmatpush1.msra.mxu0 0.0
    %2000 = vmatprep.subr.mxu0 0.0
    %2001 = vmatpush1.msra.mxu0 0.0
    %2002 = vmatprep.subr.mxu0 0.0
    %2003 = vmatpush1.msra.mxu0 0.0
    %2004 = vmatprep.subr.mxu0 0.0
    %2005 = vmatpush1.msra.mxu0 0.0
    %2006 = vmatprep.subr.mxu0 0.0
    %2007 = vmatpush1.msra.mxu0 0.0
    %2008 = vmatprep.subr.mxu0 0.0
    %2009 = vmatpush1.msra.mxu0 0.0
    %2010 = vmatprep.subr.mxu0 0.0
    %2011 = vmatpush1.msra.mxu0 0.0
    %2012 = vmatprep.subr.mxu0 0.0
    %2013 = vmatpush1.msra.mxu0 0.0
    %2014 = vmatprep.subr.mxu0 0.0
    %2015 = vmatpush1.msra.mxu0 0.0
    %2016 = vmatprep.mubr.f32.mxu0 0.0
    %2017 = vmatmul.mubr.f32.gmra.mrb[0].mxu0 %v1950
    %v2018 = vpop.f32.mrb[0].mxu0
    %v2019 = vadd.f32 0.0, %v2018
    %v2020 = vpop.f32.mrb[0].mxu0
    %2021 = vdwg.mxu0
    %v2023 = vsel %vm173, %v1925, 0
    %2025 = vmatprep.subr.mxu0 0.0
    %2026 = vmatpush1.msra.mxu0 %v1748
    %2027 = vmatprep.subr.mxu0 0.0
    %2028 = vmatpush1.msra.mxu0 0.0
    %2029 = vmatprep.subr.mxu0 0.0
    %2030 = vmatpush1.msra.mxu0 0.0
    %2031 = vmatprep.subr.mxu0 0.0
    %2032 = vmatpush1.msra.mxu0 0.0
    %2033 = vmatprep.subr.mxu0 0.0
    %2034 = vmatpush1.msra.mxu0 0.0
    %2035 = vmatprep.subr.mxu0 0.0
    %2036 = vmatpush1.msra.mxu0 0.0
    %2037 = vmatprep.subr.mxu0 0.0
    %2038 = vmatpush1.msra.mxu0 0.0
    %2039 = vmatprep.subr.mxu0 0.0
    %2040 = vmatpush1.msra.mxu0 0.0
    %2041 = vmatprep.subr.mxu0 0.0
    %2042 = vmatpush1.msra.mxu0 0.0
    %2043 = vmatprep.subr.mxu0 0.0
    %2044 = vmatpush1.msra.mxu0 0.0
    %2045 = vmatprep.subr.mxu0 0.0
    %2046 = vmatpush1.msra.mxu0 0.0
    %2047 = vmatprep.subr.mxu0 0.0
    %2048 = vmatpush1.msra.mxu0 0.0
    %2049 = vmatprep.subr.mxu0 0.0
    %2050 = vmatpush1.msra.mxu0 0.0
    %2051 = vmatprep.subr.mxu0 0.0
    %2052 = vmatpush1.msra.mxu0 0.0
    %2053 = vmatprep.subr.mxu0 0.0
    %2054 = vmatpush1.msra.mxu0 0.0
    %2055 = vmatprep.subr.mxu0 0.0
    %2056 = vmatpush1.msra.mxu0 0.0
    %2057 = vmatprep.subr.mxu0 0.0
    %2058 = vmatpush1.msra.mxu0 0.0
    %2059 = vmatprep.subr.mxu0 0.0
    %2060 = vmatpush1.msra.mxu0 0.0
    %2061 = vmatprep.subr.mxu0 0.0
    %2062 = vmatpush1.msra.mxu0 0.0
    %2063 = vmatprep.subr.mxu0 0.0
    %2064 = vmatpush1.msra.mxu0 0.0
    %2065 = vmatprep.subr.mxu0 0.0
    %2066 = vmatpush1.msra.mxu0 0.0
    %2067 = vmatprep.subr.mxu0 0.0
    %2068 = vmatpush1.msra.mxu0 0.0
    %2069 = vmatprep.subr.mxu0 0.0
    %2070 = vmatpush1.msra.mxu0 0.0
    %2071 = vmatprep.subr.mxu0 0.0
    %2072 = vmatpush1.msra.mxu0 0.0
    %2073 = vmatprep.subr.mxu0 0.0
    %2074 = vmatpush1.msra.mxu0 0.0
    %2075 = vmatprep.subr.mxu0 0.0
    %2076 = vmatpush1.msra.mxu0 0.0
    %2077 = vmatprep.subr.mxu0 0.0
    %2078 = vmatpush1.msra.mxu0 0.0
    %2079 = vmatprep.subr.mxu0 0.0
    %2080 = vmatpush1.msra.mxu0 0.0
    %2081 = vmatprep.subr.mxu0 0.0
    %2082 = vmatpush1.msra.mxu0 0.0
    %2083 = vmatprep.subr.mxu0 0.0
    %2084 = vmatpush1.msra.mxu0 0.0
    %2085 = vmatprep.subr.mxu0 0.0
    %2086 = vmatpush1.msra.mxu0 0.0
    %2087 = vmatprep.subr.mxu0 0.0
    %2088 = vmatpush1.msra.mxu0 0.0
    %2089 = vmatprep.mubr.f32.mxu0 0.0
    %2090 = vmatmul.mubr.f32.gmra.mrb[0].mxu0 %v2023
    %v2091 = vpop.f32.mrb[0].mxu0
    %v2092 = vadd.f32 0.0, %v2091
    %v2093 = vpop.f32.mrb[0].mxu0
    %2094 = vdwg.mxu0
    %v2096 = vunpack.c.l.s4 1983009808
    %v2097 = vunpack.c.0.s8 %v2096
    %v2098 = vlaneseq
    %v2099 = vshrl.u32 %v2098, 7
    %v2100 = vsub.s32 %v2097, %v2099
    %v2101 = vrot.slane %v2019, %v2100
    %v2103 = vunpack.c.l.s4 1983009808
    %v2104 = vunpack.c.0.s8 %v2103
    %v2105 = vlaneseq
    %v2106 = vshrl.u32 %v2105, 7
    %v2107 = vsub.s32 %v2104, %v2106
    %v2108 = vrot.slane %v2092, %v2107
    %v2109 = vcombine.low %v2101, %v2108
    %v2110 = vcombine.high %v2101, %v2108
    %v2112 = vunpack.c.l.s4 1934713408
    %v2113 = vunpack.c.0.s8 %v2112
    %v2114 = vlaneseq
    %v2115 = vshrl.u32 %v2114, 7
    %v2116 = vsub.s32 %v2113, %v2115
    %v2117 = vrot.slane %v2109, %v2116
    %v2119 = vunpack.c.l.s4 1934713408
    %v2120 = vunpack.c.0.s8 %v2119
    %v2121 = vlaneseq
    %v2122 = vshrl.u32 %v2121, 7
    %v2123 = vsub.s32 %v2120, %v2122
    %v2124 = vrot.slane %v2110, %v2123
    %v2125 = vcombine.high %v2117, 0.0
    %v2126 = vcombine.high %v2124, 0.0
    %v2127 = vld [vmem:[%s10] sm:$0xff]
    %v2128 = vld [vmem:[%s10 + $0x8] sm:$0xff]
    %v2129 = vld [vmem:[%s10 + $0x10] sm:$0xff]
    %v2130 = vld [vmem:[%s10 + $0x18] sm:$0xff]
    %v2131 = vld [vmem:[%s10 + $0x20] sm:$0xff]
    %v2132 = vld [vmem:[%s10 + $0x28] sm:$0xff]
    %v2133 = vld [vmem:[%s10 + $0x30] sm:$0xff]
    %v2134 = vld [vmem:[%s10 + $0x38] sm:$0xff]
    %v2135 = vld [vmem:[%s10 + $0x40] sm:$0xff]
    %v2136 = vld [vmem:[%s10 + $0x48] sm:$0xff]
    %v2137 = vld [vmem:[%s10 + $0x50] sm:$0xff]
    %v2138 = vld [vmem:[%s10 + $0x58] sm:$0xff]
    %v2139 = vld [vmem:[%s10 + $0x60] sm:$0xff]
    %v2140 = vld [vmem:[%s10 + $0x68] sm:$0xff]
    %v2141 = vld [vmem:[%s10 + $0x70] sm:$0xff]
    %v2142 = vld [vmem:[%s10 + $0x78] sm:$0xff]
    %v2143 = vld [vmem:[%s10 + $0x80] sm:$0xff]
    %v2144 = vld [vmem:[%s10 + $0x88] sm:$0xff]
    %v2145 = vld [vmem:[%s10 + $0x90] sm:$0xff]
    %v2146 = vld [vmem:[%s10 + $0x98] sm:$0xff]
    %v2147 = vld [vmem:[%s10 + $0xa0] sm:$0xff]
    %v2148 = vld [vmem:[%s10 + $0xa8] sm:$0xff]
    %v2149 = vld [vmem:[%s10 + $0xb0] sm:$0xff]
    %v2150 = vld [vmem:[%s10 + $0xb8] sm:$0xff]
    %v2151 = vld [vmem:[%s10 + $0xc0] sm:$0xff]
    %v2152 = vld [vmem:[%s10 + $0xc8] sm:$0xff]
    %v2153 = vld [vmem:[%s10 + $0xd0] sm:$0xff]
    %v2154 = vld [vmem:[%s10 + $0xd8] sm:$0xff]
    %v2155 = vld [vmem:[%s10 + $0xe0] sm:$0xff]
    %v2156 = vld [vmem:[%s10 + $0xe8] sm:$0xff]
    %v2157 = vld [vmem:[%s10 + $0xf0] sm:$0xff]
    %v2158 = vld [vmem:[%s10 + $0xf8] sm:$0xff]
    %v2159 = vld [vmem:[%s11] sm:$0x1]
    %v2160 = vld [vmem:[%s11 + $0x1] sm:$0x1]
    %v2161 = vld [vmem:[%s11 + $0x2] sm:$0x1]
    %v2162 = vld [vmem:[%s11 + $0x3] sm:$0x1]
    %v2167 = vlaneseq
    %v2168 = vshrl.u32 %v2167, 7
    %v2169 = vsub.s32 0, %v2168
    %v2170 = vrot.slane %v2159, %v2169
    %v2171 = vlaneseq
    %v2172 = vshrl.u32 %v2171, 7
    %v2173 = vsub.s32 0, %v2172
    %v2174 = vrot.slane %v2160, %v2173
    %v2175 = vlaneseq
    %v2176 = vshrl.u32 %v2175, 7
    %v2177 = vsub.s32 0, %v2176
    %v2178 = vrot.slane %v2161, %v2177
    %v2179 = vlaneseq
    %v2180 = vshrl.u32 %v2179, 7
    %v2181 = vsub.s32 0, %v2180
    %v2182 = vrot.slane %v2162, %v2181
    %v2188 = vsel %vm1757, %v2117, 0
    %2190 = vmatprep.subr.mxu0 0.0
    %2191 = vmatpush1.msra.mxu0 %v2127
    %2192 = vmatprep.subr.mxu0 0.0
    %2193 = vmatpush1.msra.mxu0 %v2128
    %2194 = vmatprep.subr.mxu0 0.0
    %2195 = vmatpush1.msra.mxu0 %v2129
    %2196 = vmatprep.subr.mxu0 0.0
    %2197 = vmatpush1.msra.mxu0 %v2130
    %2198 = vmatprep.subr.mxu0 0.0
    %2199 = vmatpush1.msra.mxu0 %v2131
    %2200 = vmatprep.subr.mxu0 0.0
    %2201 = vmatpush1.msra.mxu0 %v2132
    %2202 = vmatprep.subr.mxu0 0.0
    %2203 = vmatpush1.msra.mxu0 %v2133
    %2204 = vmatprep.subr.mxu0 0.0
    %2205 = vmatpush1.msra.mxu0 %v2134
    %2206 = vmatprep.subr.mxu0 0.0
    %2207 = vmatpush1.msra.mxu0 0.0
    %2208 = vmatprep.subr.mxu0 0.0
    %2209 = vmatpush1.msra.mxu0 0.0
    %2210 = vmatprep.subr.mxu0 0.0
    %2211 = vmatpush1.msra.mxu0 0.0
    %2212 = vmatprep.subr.mxu0 0.0
    %2213 = vmatpush1.msra.mxu0 0.0
    %2214 = vmatprep.subr.mxu0 0.0
    %2215 = vmatpush1.msra.mxu0 0.0
    %2216 = vmatprep.subr.mxu0 0.0
    %2217 = vmatpush1.msra.mxu0 0.0
    %2218 = vmatprep.subr.mxu0 0.0
    %2219 = vmatpush1.msra.mxu0 0.0
    %2220 = vmatprep.subr.mxu0 0.0
    %2221 = vmatpush1.msra.mxu0 0.0
    %2222 = vmatprep.subr.mxu0 0.0
    %2223 = vmatpush1.msra.mxu0 0.0
    %2224 = vmatprep.subr.mxu0 0.0
    %2225 = vmatpush1.msra.mxu0 0.0
    %2226 = vmatprep.subr.mxu0 0.0
    %2227 = vmatpush1.msra.mxu0 0.0
    %2228 = vmatprep.subr.mxu0 0.0
    %2229 = vmatpush1.msra.mxu0 0.0
    %2230 = vmatprep.subr.mxu0 0.0
    %2231 = vmatpush1.msra.mxu0 0.0
    %2232 = vmatprep.subr.mxu0 0.0
    %2233 = vmatpush1.msra.mxu0 0.0
    %2234 = vmatprep.subr.mxu0 0.0
    %2235 = vmatpush1.msra.mxu0 0.0
    %2236 = vmatprep.subr.mxu0 0.0
    %2237 = vmatpush1.msra.mxu0 0.0
    %2238 = vmatprep.subr.mxu0 0.0
    %2239 = vmatpush1.msra.mxu0 0.0
    %2240 = vmatprep.subr.mxu0 0.0
    %2241 = vmatpush1.msra.mxu0 0.0
    %2242 = vmatprep.subr.mxu0 0.0
    %2243 = vmatpush1.msra.mxu0 0.0
    %2244 = vmatprep.subr.mxu0 0.0
    %2245 = vmatpush1.msra.mxu0 0.0
    %2246 = vmatprep.subr.mxu0 0.0
    %2247 = vmatpush1.msra.mxu0 0.0
    %2248 = vmatprep.subr.mxu0 0.0
    %2249 = vmatpush1.msra.mxu0 0.0
    %2250 = vmatprep.subr.mxu0 0.0
    %2251 = vmatpush1.msra.mxu0 0.0
    %2252 = vmatprep.subr.mxu0 0.0
    %2253 = vmatpush1.msra.mxu0 0.0
    %2254 = vmatprep.mubr.f32.mxu0 0.0
    %2255 = vmatmul.mubr.f32.gmra.mrb[0].mxu0 %v2188
    %v2256 = vpop.f32.mrb[0].mxu0
    %v2257 = vadd.f32 %v2170, %v2256
    %v2258 = vpop.f32.mrb[0].mxu0
    %2259 = vdwg.mxu0
    %v2261 = vsel %vm1757, %v2125, 0
    %2263 = vmatprep.subr.mxu0 0.0
    %2264 = vmatpush1.msra.mxu0 %v2135
    %2265 = vmatprep.subr.mxu0 0.0
    %2266 = vmatpush1.msra.mxu0 %v2136
    %2267 = vmatprep.subr.mxu0 0.0
    %2268 = vmatpush1.msra.mxu0 %v2137
    %2269 = vmatprep.subr.mxu0 0.0
    %2270 = vmatpush1.msra.mxu0 %v2138
    %2271 = vmatprep.subr.mxu0 0.0
    %2272 = vmatpush1.msra.mxu0 %v2139
    %2273 = vmatprep.subr.mxu0 0.0
    %2274 = vmatpush1.msra.mxu0 %v2140
    %2275 = vmatprep.subr.mxu0 0.0
    %2276 = vmatpush1.msra.mxu0 %v2141
    %2277 = vmatprep.subr.mxu0 0.0
    %2278 = vmatpush1.msra.mxu0 %v2142
    %2279 = vmatprep.subr.mxu0 0.0
    %2280 = vmatpush1.msra.mxu0 0.0
    %2281 = vmatprep.subr.mxu0 0.0
    %2282 = vmatpush1.msra.mxu0 0.0
    %2283 = vmatprep.subr.mxu0 0.0
    %2284 = vmatpush1.msra.mxu0 0.0
    %2285 = vmatprep.subr.mxu0 0.0
    %2286 = vmatpush1.msra.mxu0 0.0
    %2287 = vmatprep.subr.mxu0 0.0
    %2288 = vmatpush1.msra.mxu0 0.0
    %2289 = vmatprep.subr.mxu0 0.0
    %2290 = vmatpush1.msra.mxu0 0.0
    %2291 = vmatprep.subr.mxu0 0.0
    %2292 = vmatpush1.msra.mxu0 0.0
    %2293 = vmatprep.subr.mxu0 0.0
    %2294 = vmatpush1.msra.mxu0 0.0
    %2295 = vmatprep.subr.mxu0 0.0
    %2296 = vmatpush1.msra.mxu0 0.0
    %2297 = vmatprep.subr.mxu0 0.0
    %2298 = vmatpush1.msra.mxu0 0.0
    %2299 = vmatprep.subr.mxu0 0.0
    %2300 = vmatpush1.msra.mxu0 0.0
    %2301 = vmatprep.subr.mxu0 0.0
    %2302 = vmatpush1.msra.mxu0 0.0
    %2303 = vmatprep.subr.mxu0 0.0
    %2304 = vmatpush1.msra.mxu0 0.0
    %2305 = vmatprep.subr.mxu0 0.0
    %2306 = vmatpush1.msra.mxu0 0.0
    %2307 = vmatprep.subr.mxu0 0.0
    %2308 = vmatpush1.msra.mxu0 0.0
    %2309 = vmatprep.subr.mxu0 0.0
    %2310 = vmatpush1.msra.mxu0 0.0
    %2311 = vmatprep.subr.mxu0 0.0
    %2312 = vmatpush1.msra.mxu0 0.0
    %2313 = vmatprep.subr.mxu0 0.0
    %2314 = vmatpush1.msra.mxu0 0.0
    %2315 = vmatprep.subr.mxu0 0.0
    %2316 = vmatpush1.msra.mxu0 0.0
    %2317 = vmatprep.subr.mxu0 0.0
    %2318 = vmatpush1.msra.mxu0 0.0
    %2319 = vmatprep.subr.mxu0 0.0
    %2320 = vmatpush1.msra.mxu0 0.0
    %2321 = vmatprep.subr.mxu0 0.0
    %2322 = vmatpush1.msra.mxu0 0.0
    %2323 = vmatprep.subr.mxu0 0.0
    %2324 = vmatpush1.msra.mxu0 0.0
    %2325 = vmatprep.subr.mxu0 0.0
    %2326 = vmatpush1.msra.mxu0 0.0
    %2327 = vmatprep.mubr.f32.mxu0 0.0
    %2328 = vmatmul.mubr.f32.gmra.mrb[0].mxu0 %v2261
    %v2329 = vpop.f32.mrb[0].mxu0
    %v2330 = vadd.f32 %v2174, %v2329
    %v2331 = vpop.f32.mrb[0].mxu0
    %2332 = vdwg.mxu0
    %v2334 = vsel %vm1757, %v2124, 0
    %2336 = vmatprep.subr.mxu0 0.0
    %2337 = vmatpush1.msra.mxu0 %v2143
    %2338 = vmatprep.subr.mxu0 0.0
    %2339 = vmatpush1.msra.mxu0 %v2144
    %2340 = vmatprep.subr.mxu0 0.0
    %2341 = vmatpush1.msra.mxu0 %v2145
    %2342 = vmatprep.subr.mxu0 0.0
    %2343 = vmatpush1.msra.mxu0 %v2146
    %2344 = vmatprep.subr.mxu0 0.0
    %2345 = vmatpush1.msra.mxu0 %v2147
    %2346 = vmatprep.subr.mxu0 0.0
    %2347 = vmatpush1.msra.mxu0 %v2148
    %2348 = vmatprep.subr.mxu0 0.0
    %2349 = vmatpush1.msra.mxu0 %v2149
    %2350 = vmatprep.subr.mxu0 0.0
    %2351 = vmatpush1.msra.mxu0 %v2150
    %2352 = vmatprep.subr.mxu0 0.0
    %2353 = vmatpush1.msra.mxu0 0.0
    %2354 = vmatprep.subr.mxu0 0.0
    %2355 = vmatpush1.msra.mxu0 0.0
    %2356 = vmatprep.subr.mxu0 0.0
    %2357 = vmatpush1.msra.mxu0 0.0
    %2358 = vmatprep.subr.mxu0 0.0
    %2359 = vmatpush1.msra.mxu0 0.0
    %2360 = vmatprep.subr.mxu0 0.0
    %2361 = vmatpush1.msra.mxu0 0.0
    %2362 = vmatprep.subr.mxu0 0.0
    %2363 = vmatpush1.msra.mxu0 0.0
    %2364 = vmatprep.subr.mxu0 0.0
    %2365 = vmatpush1.msra.mxu0 0.0
    %2366 = vmatprep.subr.mxu0 0.0
    %2367 = vmatpush1.msra.mxu0 0.0
    %2368 = vmatprep.subr.mxu0 0.0
    %2369 = vmatpush1.msra.mxu0 0.0
    %2370 = vmatprep.subr.mxu0 0.0
    %2371 = vmatpush1.msra.mxu0 0.0
    %2372 = vmatprep.subr.mxu0 0.0
    %2373 = vmatpush1.msra.mxu0 0.0
    %2374 = vmatprep.subr.mxu0 0.0
    %2375 = vmatpush1.msra.mxu0 0.0
    %2376 = vmatprep.subr.mxu0 0.0
    %2377 = vmatpush1.msra.mxu0 0.0
    %2378 = vmatprep.subr.mxu0 0.0
    %2379 = vmatpush1.msra.mxu0 0.0
    %2380 = vmatprep.subr.mxu0 0.0
    %2381 = vmatpush1.msra.mxu0 0.0
    %2382 = vmatprep.subr.mxu0 0.0
    %2383 = vmatpush1.msra.mxu0 0.0
    %2384 = vmatprep.subr.mxu0 0.0
    %2385 = vmatpush1.msra.mxu0 0.0
    %2386 = vmatprep.subr.mxu0 0.0
    %2387 = vmatpush1.msra.mxu0 0.0
    %2388 = vmatprep.subr.mxu0 0.0
    %2389 = vmatpush1.msra.mxu0 0.0
    %2390 = vmatprep.subr.mxu0 0.0
    %2391 = vmatpush1.msra.mxu0 0.0
    %2392 = vmatprep.subr.mxu0 0.0
    %2393 = vmatpush1.msra.mxu0 0.0
    %2394 = vmatprep.subr.mxu0 0.0
    %2395 = vmatpush1.msra.mxu0 0.0
    %2396 = vmatprep.subr.mxu0 0.0
    %2397 = vmatpush1.msra.mxu0 0.0
    %2398 = vmatprep.subr.mxu0 0.0
    %2399 = vmatpush1.msra.mxu0 0.0
    %2400 = vmatprep.mubr.f32.mxu0 0.0
    %2401 = vmatmul.mubr.f32.gmra.mrb[0].mxu0 %v2334
    %v2402 = vpop.f32.mrb[0].mxu0
    %v2403 = vadd.f32 %v2178, %v2402
    %v2404 = vpop.f32.mrb[0].mxu0
    %2405 = vdwg.mxu0
    %v2407 = vsel %vm1757, %v2126, 0
    %2409 = vmatprep.subr.mxu0 0.0
    %2410 = vmatpush1.msra.mxu0 %v2151
    %2411 = vmatprep.subr.mxu0 0.0
    %2412 = vmatpush1.msra.mxu0 %v2152
    %2413 = vmatprep.subr.mxu0 0.0
    %2414 = vmatpush1.msra.mxu0 %v2153
    %2415 = vmatprep.subr.mxu0 0.0
    %2416 = vmatpush1.msra.mxu0 %v2154
    %2417 = vmatprep.subr.mxu0 0.0
    %2418 = vmatpush1.msra.mxu0 %v2155
    %2419 = vmatprep.subr.mxu0 0.0
    %2420 = vmatpush1.msra.mxu0 %v2156
    %2421 = vmatprep.subr.mxu0 0.0
    %2422 = vmatpush1.msra.mxu0 %v2157
    %2423 = vmatprep.subr.mxu0 0.0
    %2424 = vmatpush1.msra.mxu0 %v2158
    %2425 = vmatprep.subr.mxu0 0.0
    %2426 = vmatpush1.msra.mxu0 0.0
    %2427 = vmatprep.subr.mxu0 0.0
    %2428 = vmatpush1.msra.mxu0 0.0
    %2429 = vmatprep.subr.mxu0 0.0
    %2430 = vmatpush1.msra.mxu0 0.0
    %2431 = vmatprep.subr.mxu0 0.0
    %2432 = vmatpush1.msra.mxu0 0.0
    %2433 = vmatprep.subr.mxu0 0.0
    %2434 = vmatpush1.msra.mxu0 0.0
    %2435 = vmatprep.subr.mxu0 0.0
    %2436 = vmatpush1.msra.mxu0 0.0
    %2437 = vmatprep.subr.mxu0 0.0
    %2438 = vmatpush1.msra.mxu0 0.0
    %2439 = vmatprep.subr.mxu0 0.0
    %2440 = vmatpush1.msra.mxu0 0.0
    %2441 = vmatprep.subr.mxu0 0.0
    %2442 = vmatpush1.msra.mxu0 0.0
    %2443 = vmatprep.subr.mxu0 0.0
    %2444 = vmatpush1.msra.mxu0 0.0
    %2445 = vmatprep.subr.mxu0 0.0
    %2446 = vmatpush1.msra.mxu0 0.0
    %2447 = vmatprep.subr.mxu0 0.0
    %2448 = vmatpush1.msra.mxu0 0.0
    %2449 = vmatprep.subr.mxu0 0.0
    %2450 = vmatpush1.msra.mxu0 0.0
    %2451 = vmatprep.subr.mxu0 0.0
    %2452 = vmatpush1.msra.mxu0 0.0
    %2453 = vmatprep.subr.mxu0 0.0
    %2454 = vmatpush1.msra.mxu0 0.0
    %2455 = vmatprep.subr.mxu0 0.0
    %2456 = vmatpush1.msra.mxu0 0.0
    %2457 = vmatprep.subr.mxu0 0.0
    %2458 = vmatpush1.msra.mxu0 0.0
    %2459 = vmatprep.subr.mxu0 0.0
    %2460 = vmatpush1.msra.mxu0 0.0
    %2461 = vmatprep.subr.mxu0 0.0
    %2462 = vmatpush1.msra.mxu0 0.0
    %2463 = vmatprep.subr.mxu0 0.0
    %2464 = vmatpush1.msra.mxu0 0.0
    %2465 = vmatprep.subr.mxu0 0.0
    %2466 = vmatpush1.msra.mxu0 0.0
    %2467 = vmatprep.subr.mxu0 0.0
    %2468 = vmatpush1.msra.mxu0 0.0
    %2469 = vmatprep.subr.mxu0 0.0
    %2470 = vmatpush1.msra.mxu0 0.0
    %2471 = vmatprep.subr.mxu0 0.0
    %2472 = vmatpush1.msra.mxu0 0.0
    %2473 = vmatprep.mubr.f32.mxu0 0.0
    %2474 = vmatmul.mubr.f32.gmra.mrb[0].mxu0 %v2407
    %v2475 = vpop.f32.mrb[0].mxu0
    %v2476 = vadd.f32 %v2182, %v2475
    %v2477 = vpop.f32.mrb[0].mxu0
    %2478 = vdwg.mxu0
    %v2479 = vcombine.low %v2257, %v2403
    %v2481 = vunpack.c.l.s4 1983009808
    %v2482 = vunpack.c.0.s8 %v2481
    %v2483 = vlaneseq
    %v2484 = vshrl.u32 %v2483, 7
    %v2485 = vsub.s32 %v2482, %v2484
    %v2486 = vrot.slane %v2479, %v2485
    %v2487 = vcombine.low %v2330, %v2476
    %v2489 = vunpack.c.l.s4 1983009808
    %v2490 = vunpack.c.0.s8 %v2489
    %v2491 = vlaneseq
    %v2492 = vshrl.u32 %v2491, 7
    %v2493 = vsub.s32 %v2490, %v2492
    %v2494 = vrot.slane %v2487, %v2493
    %v2495 = vcombine.low %v2486, %v2494
    %v2497 = vunpack.c.l.s4 1934713408
    %v2498 = vunpack.c.0.s8 %v2497
    %v2499 = vlaneseq
    %v2500 = vshrl.u32 %v2499, 7
    %v2501 = vsub.s32 %v2498, %v2500
    %v2502 = vrot.slane %v2495, %v2501
    %v2503 = vcombine.high %v2502, 0.0
    %v2505 = vsel %vm1926, %v1946, 0
    %vm2507 = vcmask 1043456
    %v2509 = vsel %vm2507, %v2502, 0
    %2511 = vmatprep.subr.mxu0 0.0
    %2512 = vmatpush1.msra.mxu0 %v2509
    %2513 = vmatprep.subr.mxu0 0.0
    %2514 = vmatpush1.msra.mxu0 0.0
    %2515 = vmatprep.subr.mxu0 0.0
    %2516 = vmatpush1.msra.mxu0 0.0
    %2517 = vmatprep.subr.mxu0 0.0
    %2518 = vmatpush1.msra.mxu0 0.0
    %2519 = vmatprep.subr.mxu0 0.0
    %2520 = vmatpush1.msra.mxu0 0.0
    %2521 = vmatprep.subr.mxu0 0.0
    %2522 = vmatpush1.msra.mxu0 0.0
    %2523 = vmatprep.subr.mxu0 0.0
    %2524 = vmatpush1.msra.mxu0 0.0
    %2525 = vmatprep.subr.mxu0 0.0
    %2526 = vmatpush1.msra.mxu0 0.0
    %2527 = vmatprep.subr.mxu0 0.0
    %2528 = vmatpush1.msra.mxu0 0.0
    %2529 = vmatprep.subr.mxu0 0.0
    %2530 = vmatpush1.msra.mxu0 0.0
    %2531 = vmatprep.subr.mxu0 0.0
    %2532 = vmatpush1.msra.mxu0 0.0
    %2533 = vmatprep.subr.mxu0 0.0
    %2534 = vmatpush1.msra.mxu0 0.0
    %2535 = vmatprep.subr.mxu0 0.0
    %2536 = vmatpush1.msra.mxu0 0.0
    %2537 = vmatprep.subr.mxu0 0.0
    %2538 = vmatpush1.msra.mxu0 0.0
    %2539 = vmatprep.subr.mxu0 0.0
    %2540 = vmatpush1.msra.mxu0 0.0
    %2541 = vmatprep.subr.mxu0 0.0
    %2542 = vmatpush1.msra.mxu0 0.0
    %2543 = vmatprep.subr.mxu0 0.0
    %2544 = vmatpush1.msra.mxu0 0.0
    %2545 = vmatprep.subr.mxu0 0.0
    %2546 = vmatpush1.msra.mxu0 0.0
    %2547 = vmatprep.subr.mxu0 0.0
    %2548 = vmatpush1.msra.mxu0 0.0
    %2549 = vmatprep.subr.mxu0 0.0
    %2550 = vmatpush1.msra.mxu0 0.0
    %2551 = vmatprep.subr.mxu0 0.0
    %2552 = vmatpush1.msra.mxu0 0.0
    %2553 = vmatprep.subr.mxu0 0.0
    %2554 = vmatpush1.msra.mxu0 0.0
    %2555 = vmatprep.subr.mxu0 0.0
    %2556 = vmatpush1.msra.mxu0 0.0
    %2557 = vmatprep.subr.mxu0 0.0
    %2558 = vmatpush1.msra.mxu0 0.0
    %2559 = vmatprep.subr.mxu0 0.0
    %2560 = vmatpush1.msra.mxu0 0.0
    %2561 = vmatprep.subr.mxu0 0.0
    %2562 = vmatpush1.msra.mxu0 0.0
    %2563 = vmatprep.subr.mxu0 0.0
    %2564 = vmatpush1.msra.mxu0 0.0
    %2565 = vmatprep.subr.mxu0 0.0
    %2566 = vmatpush1.msra.mxu0 0.0
    %2567 = vmatprep.subr.mxu0 0.0
    %2568 = vmatpush1.msra.mxu0 0.0
    %2569 = vmatprep.subr.mxu0 0.0
    %2570 = vmatpush1.msra.mxu0 0.0
    %2571 = vmatprep.subr.mxu0 0.0
    %2572 = vmatpush1.msra.mxu0 0.0
    %2573 = vmatprep.subr.mxu0 0.0
    %2574 = vmatpush1.msra.mxu0 0.0
    %2575 = vmatprep.mubr.f32.mxu0 0.0
    %2576 = vmatmul.mubr.f32.gmra.mrb[0].mxu0 %v2505
    %v2577 = vpop.f32.mrb[0].mxu0
    %v2578 = vadd.f32 0.0, %v2577
    %v2579 = vpop.f32.mrb[0].mxu0
    %2580 = vdwg.mxu0
    %v2582 = vsel %vm1926, %v1948, 0
    %v2585 = vsel %vm2507, %v2503, 0
    %2587 = vmatprep.subr.mxu0 0.0
    %2588 = vmatpush1.msra.mxu0 %v2585
    %2589 = vmatprep.subr.mxu0 0.0
    %2590 = vmatpush1.msra.mxu0 0.0
    %2591 = vmatprep.subr.mxu0 0.0
    %2592 = vmatpush1.msra.mxu0 0.0
    %2593 = vmatprep.subr.mxu0 0.0
    %2594 = vmatpush1.msra.mxu0 0.0
    %2595 = vmatprep.subr.mxu0 0.0
    %2596 = vmatpush1.msra.mxu0 0.0
    %2597 = vmatprep.subr.mxu0 0.0
    %2598 = vmatpush1.msra.mxu0 0.0
    %2599 = vmatprep.subr.mxu0 0.0
    %2600 = vmatpush1.msra.mxu0 0.0
    %2601 = vmatprep.subr.mxu0 0.0
    %2602 = vmatpush1.msra.mxu0 0.0
    %2603 = vmatprep.subr.mxu0 0.0
    %2604 = vmatpush1.msra.mxu0 0.0
    %2605 = vmatprep.subr.mxu0 0.0
    %2606 = vmatpush1.msra.mxu0 0.0
    %2607 = vmatprep.subr.mxu0 0.0
    %2608 = vmatpush1.msra.mxu0 0.0
    %2609 = vmatprep.subr.mxu0 0.0
    %2610 = vmatpush1.msra.mxu0 0.0
    %2611 = vmatprep.subr.mxu0 0.0
    %2612 = vmatpush1.msra.mxu0 0.0
    %2613 = vmatprep.subr.mxu0 0.0
    %2614 = vmatpush1.msra.mxu0 0.0
    %2615 = vmatprep.subr.mxu0 0.0
    %2616 = vmatpush1.msra.mxu0 0.0
    %2617 = vmatprep.subr.mxu0 0.0
    %2618 = vmatpush1.msra.mxu0 0.0
    %2619 = vmatprep.subr.mxu0 0.0
    %2620 = vmatpush1.msra.mxu0 0.0
    %2621 = vmatprep.subr.mxu0 0.0
    %2622 = vmatpush1.msra.mxu0 0.0
    %2623 = vmatprep.subr.mxu0 0.0
    %2624 = vmatpush1.msra.mxu0 0.0
    %2625 = vmatprep.subr.mxu0 0.0
    %2626 = vmatpush1.msra.mxu0 0.0
    %2627 = vmatprep.subr.mxu0 0.0
    %2628 = vmatpush1.msra.mxu0 0.0
    %2629 = vmatprep.subr.mxu0 0.0
    %2630 = vmatpush1.msra.mxu0 0.0
    %2631 = vmatprep.subr.mxu0 0.0
    %2632 = vmatpush1.msra.mxu0 0.0
    %2633 = vmatprep.subr.mxu0 0.0
    %2634 = vmatpush1.msra.mxu0 0.0
    %2635 = vmatprep.subr.mxu0 0.0
    %2636 = vmatpush1.msra.mxu0 0.0
    %2637 = vmatprep.subr.mxu0 0.0
    %2638 = vmatpush1.msra.mxu0 0.0
    %2639 = vmatprep.subr.mxu0 0.0
    %2640 = vmatpush1.msra.mxu0 0.0
    %2641 = vmatprep.subr.mxu0 0.0
    %2642 = vmatpush1.msra.mxu0 0.0
    %2643 = vmatprep.subr.mxu0 0.0
    %2644 = vmatpush1.msra.mxu0 0.0
    %2645 = vmatprep.subr.mxu0 0.0
    %2646 = vmatpush1.msra.mxu0 0.0
    %2647 = vmatprep.subr.mxu0 0.0
    %2648 = vmatpush1.msra.mxu0 0.0
    %2649 = vmatprep.subr.mxu0 0.0
    %2650 = vmatpush1.msra.mxu0 0.0
    %2651 = vmatprep.mubr.f32.mxu0 0.0
    %2652 = vmatmul.mubr.f32.gmra.mrb[0].mxu0 %v2582
    %v2653 = vpop.f32.mrb[0].mxu0
    %v2654 = vadd.f32 0.0, %v2653
    %v2655 = vpop.f32.mrb[0].mxu0
    %2656 = vdwg.mxu0
    %v2657 = vadd.f32 %v1653, %v2578
    %v2658 = vadd.f32 %v1654, %v2654
    %v2659 = vsel %vm61, %v2657, 0.0
    %2660 = vadd.xlane.f32.xlu0 %v2659
    %v2661 = vpop.xlane.xlu0 %2660
    %v2662 = vsel %vm61, %v2658, 0.0
    %2663 = vadd.xlane.f32.xlu0 %v2662
    %v2664 = vpop.xlane.xlu0 %2663
    %v2665 = vmul.f32 %v2661, %v1616
    %v2666 = vmul.f32 %v2664, %v1616
    %v2667 = vsub.f32 %v2657, %v2665
    %v2668 = vsub.f32 %v2658, %v2666
    %v2669 = vmul.f32 %v2667, %v2667
    %v2670 = vmul.f32 %v2668, %v2668
    %v2671 = vsel %vm61, %v2669, 0.0
    %2672 = vadd.xlane.f32.xlu0 %v2671
    %v2673 = vpop.xlane.xlu0 %2672
    %v2674 = vsel %vm61, %v2670, 0.0
    %2675 = vadd.xlane.f32.xlu0 %v2674
    %v2676 = vpop.xlane.xlu0 %2675
    %v2677 = vmul.f32 %v2673, %v1616
    %v2678 = vmul.f32 %v2676, %v1616
    %v2679 = vadd.f32 %v2677, 1e-05
    %v2680 = vadd.f32 %v2678, 1e-05
    %v2681 = vrsqrt.pop %v2679
    %v2682 = vrsqrt.pop %v2680
    %v2683 = vmul.f32 %v2667, %v2681
    %v2684 = vmul.f32 %v2668, %v2682
    %v2685 = vld [vmem:[%s12] sm:$0x1]
    %v2687 = vlaneseq
    %v2688 = vshrl.u32 %v2687, 7
    %v2689 = vsub.s32 0, %v2688
    %v2690 = vrot.slane %v2685, %v2689
    %v2692 = vmul.f32 %v2683, %v2690
    %v2693 = vmul.f32 %v2684, %v2690
    %v2694 = vld [vmem:[%s13] sm:$0x1]
    %v2696 = vlaneseq
    %v2697 = vshrl.u32 %v2696, 7
    %v2698 = vsub.s32 0, %v2697
    %v2699 = vrot.slane %v2694, %v2698
    %v2701 = vadd.f32 %v2692, %v2699
    %v2702 = vadd.f32 %v2693, %v2699
    %2703 = vst.msk [vmem:[#allocation2] sm:$0xff] %vm61, %v2701
    %2704 = vst.msk [vmem:[#allocation2 + $0x8] sm:$0xff] %vm61, %v2702
    // Predicated region
    $region58: #{tpu_custom_call.1} parent=1 // pred_check
      _
    $region59: #{tpu_custom_call.1} parent=1 // pred_check_branch
      %2706 = sbr.rel (0) target = $region61
    $region60: #{tpu_custom_call.1} parent=1 // pred_region
      %s2708 = ssub.s32 256, 256
      %2709 = vsyncadd [#allocation3], %s2708
      %s2710 = sshll.u32 [#allocation2], 4
      %s2711 = int_to_ptr.vmem [resolvable:$true] %s2710
      %2716 = dma.vmem_to_hbm [thread:$0]  %s2711, 256, %s14, [#allocation3], 128, 128, 8
    $region61: #{tpu_custom_call.1} parent=1 // pred_fallthru
      _
    // Predicated region
    $region62: #{tpu_custom_call.1} parent=1 // pred_check
      _
    $region63: #{tpu_custom_call.1} parent=1 // pred_check_branch
      %2718 = sbr.rel (0) target = $region65
    $region64: #{tpu_custom_call.1} parent=1 // pred_region
      %2719 = dma.done [#allocation3], 256
    $region65: #{tpu_custom_call.1} parent=1 // pred_fallthru
      _
    %2720 = vsyncpa [#allocation3], 1

</llo_original>
